<compile_context>
chip_gen: v6e
topology: v6e:2x2x1
jax: 0.10.0
libtpu: 0.0.40
codegen_flags: <defaults>
</compile_context>

<pallas_src>
import jax
import jax.numpy as jnp
from jax.experimental import pallas as pl
from jax.experimental.pallas import tpu as pltpu


def tabular_clip_kernel(
    # --- stem / head inputs (resident across the block grid axis) ---
    x_ref, init_w_ref,
    g_w1_ref, g_b1_ref, g_w2_ref, g_b2_ref,
    bn1_g_ref, bn1_b_ref,
    p_w1_ref, p_b1_ref, p_w2_ref, p_b2_ref,
    ln_g_ref, ln_b_ref,
    cls_ref, pe_ref,
    hbn_g_ref, hbn_b_ref,
    # --- per-transformer-block weights (one block per grid step) ---
    wqkv_ref, bqkv_ref, wo_ref, bo_ref,
    ln1_g_ref, ln1_b_ref, ln2_g_ref, ln2_b_ref,
    ffn_w1_ref, ffn_b1_ref, ffn_w2_ref, ffn_b2_ref,
    # --- output ---
    out_ref,
    # --- scratch: stacked [cls; data] token matrix, carried across blocks ---
    t_ref,
):
    eps = 1e-5
    f32 = jnp.float32
    blk = pl.program_id(0)
    nblk = pl.num_programs(0)

    B = x_ref.shape[0]
    D = ln_g_ref.shape[-1]

    def matmul(a, w, b):
        # bf16 operands into the MXU, f32 accumulation, f32 bias add.
        return jnp.dot(a.astype(w.dtype), w, preferred_element_type=f32) + b

    def batch_norm(v, g, b):
        # PyTorch BatchNorm1d, training mode: biased batch variance.
        mu = jnp.mean(v, axis=0, keepdims=True)
        var = jnp.mean((v - mu) ** 2, axis=0, keepdims=True)
        return (v - mu) * jax.lax.rsqrt(var + eps) * g + b

    def layer_norm(v, g, b):
        mu = jnp.mean(v, axis=-1, keepdims=True)
        var = jnp.mean((v - mu) ** 2, axis=-1, keepdims=True)
        return (v - mu) * jax.lax.rsqrt(var + eps) * g + b

    # ---------------- stem: only on the first grid step ----------------
    @pl.when(blk == 0)
    def _stem():
        # 1) x * initial_weight
        x = x_ref[...] * init_w_ref[...]
        # 2) new_columns_generator (Linear-ReLU-Linear)
        h = jnp.maximum(matmul(x, g_w1_ref[...], g_b1_ref[...]), 0.0)
        y = matmul(h, g_w2_ref[...], g_b2_ref[...])
        # 3) new_column_bn
        y = batch_norm(y, bn1_g_ref[...], bn1_b_ref[...])
        # 4) input_projection MLP + LayerNorm
        h2 = jnp.maximum(matmul(y, p_w1_ref[...], p_b1_ref[...]), 0.0)
        z = matmul(h2, p_w2_ref[...], p_b2_ref[...])
        z = layer_norm(z, ln_g_ref[...], ln_b_ref[...])
        # 5) stacked 2-token sequence + positional encoding:
        #    rows [0:B]  -> token 0 (cls), rows [B:2B] -> token 1 (projected row)
        t_ref[0:B, :] = jnp.broadcast_to(cls_ref[...], (B, D)) + pe_ref[0:1, :]
        t_ref[B:2 * B, :] = z + pe_ref[1:2, :]

    # ---------------- one transformer block per grid step ----------------
    t = t_ref[...]                                             # (2B, D) f32

    # fused QKV: one MXU matmul for both tokens and all of Q/K/V
    qkv = matmul(t, wqkv_ref[...], bqkv_ref[...])              # (2B, 3D) f32
    q0 = qkv[0:B, 0:D];       q1 = qkv[B:2 * B, 0:D]
    k0 = qkv[0:B, D:2 * D];   k1 = qkv[B:2 * B, D:2 * D]
    v0 = qkv[0:B, 2 * D:];    v1 = qkv[B:2 * B, 2 * D:]

    scale = 1.0 / float(D) ** 0.5
    # score difference per query token: d_i = (s_i1 - s_i0) = scale * <q_i, k1-k0>
    dk = k1 - k0
    d0 = jnp.sum(q0 * dk, axis=-1, keepdims=True) * scale
    d1 = jnp.sum(q1 * dk, axis=-1, keepdims=True) * scale

    # 2-way softmax via sigmoid identity: weight of v0 = 1 / (1 + exp(s1 - s0))
    w0 = pl.reciprocal(1.0 + jnp.exp(d0), approx=True)         # token 0's weight on v0
    w1 = pl.reciprocal(1.0 + jnp.exp(d1), approx=True)         # token 1's weight on v0
    dv = v0 - v1
    o = jnp.concatenate([v1 + w0 * dv, v1 + w1 * dv], axis=0)  # (2B, D)

    a = matmul(o, wo_ref[...], bo_ref[...])                    # output projection
    t = layer_norm(t + a, ln1_g_ref[...], ln1_b_ref[...])

    f = matmul(jnp.maximum(matmul(t, ffn_w1_ref[...], ffn_b1_ref[...]), 0.0),
               ffn_w2_ref[...], ffn_b2_ref[...])
    t = layer_norm(t + f, ln2_g_ref[...], ln2_b_ref[...])
    t_ref[...] = t

    # ---------------- head: only on the last grid step ----------------
    @pl.when(blk == nblk - 1)
    def _head():
        # cls token (rows 0:B) -> head_bn
        out_ref[...] = batch_norm(t[0:B, :], hbn_g_ref[...], hbn_b_ref[...])


def init_params(key, input_size, alpha, dimension, blocks, hidden=256):
    new_cols = input_size + alpha
    ffn_hidden = 4 * dimension
    keys = iter(jax.random.split(key, 24))

    def w(shape, scale=0.05, dtype=jnp.bfloat16):
        # matmul weights in bf16 (MXU-native); norm params / biases stay f32.
        return (scale * jax.random.normal(next(keys), shape)).astype(dtype)

    zeros = lambda s: jnp.zeros(s, jnp.float32)
    ones = lambda s: jnp.ones(s, jnp.float32)

    # sinusoidal PE for the 2 tokens actually used
    pos = jnp.arange(2, dtype=jnp.float32)[:, None]
    idx = jnp.arange(0, dimension, 2, dtype=jnp.float32)
    div = jnp.exp(-jnp.log(10000.0) * idx / dimension)
    pe = jnp.zeros((2, dimension), jnp.float32)
    pe = pe.at[:, 0::2].set(jnp.sin(pos * div))
    pe = pe.at[:, 1::2].set(jnp.cos(pos * div))

    return dict(
        init_w=jax.random.uniform(next(keys), (1, input_size), jnp.float32),
        g_w1=w((input_size, hidden)),  g_b1=zeros((1, hidden)),
        g_w2=w((hidden, new_cols)),    g_b2=zeros((1, new_cols)),
        bn1_g=ones((1, new_cols)),     bn1_b=zeros((1, new_cols)),
        p_w1=w((new_cols, hidden)),    p_b1=zeros((1, hidden)),
        p_w2=w((hidden, dimension)),   p_b2=zeros((1, dimension)),
        ln_g=ones((1, dimension)),     ln_b=zeros((1, dimension)),
        cls=w((1, dimension), scale=1.0, dtype=jnp.float32),
        pe=pe,
        hbn_g=ones((1, dimension)),    hbn_b=zeros((1, dimension)),
        # Wq/Wk/Wv fused into one (D, 3D) weight per block
        wqkv=w((blocks, dimension, 3 * dimension)),
        bqkv=zeros((blocks, 1, 3 * dimension)),
        wo=w((blocks, dimension, dimension)),       bo=zeros((blocks, 1, dimension)),
        ln1_g=ones((blocks, 1, dimension)),         ln1_b=zeros((blocks, 1, dimension)),
        ln2_g=ones((blocks, 1, dimension)),         ln2_b=zeros((blocks, 1, dimension)),
        ffn_w1=w((blocks, dimension, ffn_hidden)),  ffn_b1=zeros((blocks, 1, ffn_hidden)),
        ffn_w2=w((blocks, ffn_hidden, dimension)),  ffn_b2=zeros((blocks, 1, dimension)),
    )


def tabular_clip_forward(x, params):
    B = x.shape[0]
    D = params["ln_g"].shape[-1]
    blocks = params["wqkv"].shape[0]
    assert B % 8 == 0, "batch must be a multiple of 8 (sublane-aligned token slices)"
    assert D % 128 == 0, "dimension must be a multiple of 128 (lane-dense output)"

    stem_args = [
        x, params["init_w"],
        params["g_w1"], params["g_b1"], params["g_w2"], params["g_b2"],
        params["bn1_g"], params["bn1_b"],
        params["p_w1"], params["p_b1"], params["p_w2"], params["p_b2"],
        params["ln_g"], params["ln_b"],
        params["cls"], params["pe"],
        params["hbn_g"], params["hbn_b"],
    ]
    block_args = [
        params["wqkv"], params["bqkv"], params["wo"], params["bo"],
        params["ln1_g"], params["ln1_b"], params["ln2_g"], params["ln2_b"],
        params["ffn_w1"], params["ffn_b1"], params["ffn_w2"], params["ffn_b2"],
    ]

    def resident_spec(a):
        # full-array block, constant block index across the block axis -> fetched
        # once, stays resident in VMEM (stem/head params are small).
        nd = a.ndim
        return pl.BlockSpec(a.shape, lambda blk, _nd=nd: (0,) * _nd)

    def per_block_spec(a):
        # leading (blocks) dim is squeezed; only the current block's weights are
        # resident (default double-buffering overlaps next-block DMA with compute).
        tail = a.shape[1:]
        nt = len(tail)
        return pl.BlockSpec((None,) + tail,
                            lambda blk, _nt=nt: (blk,) + (0,) * _nt)

    grid_spec = pltpu.PrefetchScalarGridSpec(
        num_scalar_prefetch=0,
        grid=(blocks,),
        in_specs=[resident_spec(a) for a in stem_args]
                 + [per_block_spec(a) for a in block_args],
        out_specs=pl.BlockSpec((B, D), lambda blk: (0, 0)),
        scratch_shapes=[pltpu.VMEM((2 * B, D), jnp.float32)],
    )

    return pl.pallas_call(
        tabular_clip_kernel,
        out_shape=jax.ShapeDtypeStruct((B, D), jnp.float32),
        grid_spec=grid_spec,
        compiler_params=pltpu.CompilerParams(
            # state (t_ref) carried across the block axis -> "arbitrary"
            dimension_semantics=("arbitrary",),
            # explicit VMEM budget: raises v5e's 16 MiB default, within v7x's
            # 64 MiB physical; per-block bf16 weights + activations are tiny.
            vmem_limit_bytes=32 * 1024 * 1024,
        ),
    )(*stem_args, *block_args)


if __name__ == "__main__":
    # D=128 keeps every transformer activation and the output lane-dense;
    # B=16 keeps the token-slice boundaries sublane-aligned.
    BATCH, INPUT_SIZE, ALPHA, DIMENSION, BLOCKS = 16, 16, 8, 128, 3

    key = jax.random.PRNGKey(0)
    kx, kp = jax.random.split(key)
    x = jax.random.normal(kx, (BATCH, INPUT_SIZE), dtype=jnp.float32)
    params = init_params(kp, INPUT_SIZE, ALPHA, DIMENSION, BLOCKS)

    out = tabular_clip_forward(x, params)
    out = jax.block_until_ready(out)
    assert out.shape == (BATCH, DIMENSION)
    assert bool(jnp.all(jnp.isfinite(out)))
    print("KERNEL_OK")
</pallas_src>

<mosaic_0001>
module attributes {stable_mosaic.version = 11 : i64} {
  func.func @tabular_clip_kernel(%arg0: i32, %arg1: memref<16x16xf32, #tpu.memory_space<vmem>>, %arg2: memref<1x16xf32, #tpu.memory_space<vmem>>, %arg3: memref<16x256xbf16, #tpu.memory_space<vmem>>, %arg4: memref<1x256xf32, #tpu.memory_space<vmem>>, %arg5: memref<256x24xbf16, #tpu.memory_space<vmem>>, %arg6: memref<1x24xf32, #tpu.memory_space<vmem>>, %arg7: memref<1x24xf32, #tpu.memory_space<vmem>>, %arg8: memref<1x24xf32, #tpu.memory_space<vmem>>, %arg9: memref<24x256xbf16, #tpu.memory_space<vmem>>, %arg10: memref<1x256xf32, #tpu.memory_space<vmem>>, %arg11: memref<256x128xbf16, #tpu.memory_space<vmem>>, %arg12: memref<1x128xf32, #tpu.memory_space<vmem>>, %arg13: memref<1x128xf32, #tpu.memory_space<vmem>>, %arg14: memref<1x128xf32, #tpu.memory_space<vmem>>, %arg15: memref<1x128xf32, #tpu.memory_space<vmem>>, %arg16: memref<2x128xf32, #tpu.memory_space<vmem>>, %arg17: memref<1x128xf32, #tpu.memory_space<vmem>>, %arg18: memref<1x128xf32, #tpu.memory_space<vmem>>, %arg19: memref<1x128x384xbf16, #tpu.memory_space<vmem>>, %arg20: memref<1x1x384xf32, #tpu.memory_space<vmem>>, %arg21: memref<1x128x128xbf16, #tpu.memory_space<vmem>>, %arg22: memref<1x1x128xf32, #tpu.memory_space<vmem>>, %arg23: memref<1x1x128xf32, #tpu.memory_space<vmem>>, %arg24: memref<1x1x128xf32, #tpu.memory_space<vmem>>, %arg25: memref<1x1x128xf32, #tpu.memory_space<vmem>>, %arg26: memref<1x1x128xf32, #tpu.memory_space<vmem>>, %arg27: memref<1x128x512xbf16, #tpu.memory_space<vmem>>, %arg28: memref<1x1x512xf32, #tpu.memory_space<vmem>>, %arg29: memref<1x512x128xbf16, #tpu.memory_space<vmem>>, %arg30: memref<1x1x128xf32, #tpu.memory_space<vmem>>, %arg31: memref<16x128xf32, #tpu.memory_space<vmem>>, %arg32: memref<32x128xf32, #tpu.memory_space<vmem>>) attributes {dimension_semantics = [#tpu.dimension_semantics<arbitrary>], iteration_bounds = array<i64: 3>, scalar_prefetch = 0 : i64, scratch_operands = 1 : i64, tpu.core_type = #tpu.core_type<tc>, window_params = [{pipeline_mode = #tpu.pipeline_mode<synchronous>, transform_indices = @transform_0, window_bounds = array<i64: 16, 16>}, {pipeline_mode = #tpu.pipeline_mode<synchronous>, transform_indices = @transform_1, window_bounds = array<i64: 1, 16>}, {pipeline_mode = #tpu.pipeline_mode<synchronous>, transform_indices = @transform_2, window_bounds = array<i64: 16, 256>}, {pipeline_mode = #tpu.pipeline_mode<synchronous>, transform_indices = @transform_3, window_bounds = array<i64: 1, 256>}, {pipeline_mode = #tpu.pipeline_mode<synchronous>, transform_indices = @transform_4, window_bounds = array<i64: 256, 24>}, {pipeline_mode = #tpu.pipeline_mode<synchronous>, transform_indices = @transform_5, window_bounds = array<i64: 1, 24>}, {pipeline_mode = #tpu.pipeline_mode<synchronous>, transform_indices = @transform_6, window_bounds = array<i64: 1, 24>}, {pipeline_mode = #tpu.pipeline_mode<synchronous>, transform_indices = @transform_7, window_bounds = array<i64: 1, 24>}, {pipeline_mode = #tpu.pipeline_mode<synchronous>, transform_indices = @transform_8, window_bounds = array<i64: 24, 256>}, {pipeline_mode = #tpu.pipeline_mode<synchronous>, transform_indices = @transform_9, window_bounds = array<i64: 1, 256>}, {pipeline_mode = #tpu.pipeline_mode<synchronous>, transform_indices = @transform_10, window_bounds = array<i64: 256, 128>}, {pipeline_mode = #tpu.pipeline_mode<synchronous>, transform_indices = @transform_11, window_bounds = array<i64: 1, 128>}, {pipeline_mode = #tpu.pipeline_mode<synchronous>, transform_indices = @transform_12, window_bounds = array<i64: 1, 128>}, {pipeline_mode = #tpu.pipeline_mode<synchronous>, transform_indices = @transform_13, window_bounds = array<i64: 1, 128>}, {pipeline_mode = #tpu.pipeline_mode<synchronous>, transform_indices = @transform_14, window_bounds = array<i64: 1, 128>}, {pipeline_mode = #tpu.pipeline_mode<synchronous>, transform_indices = @transform_15, window_bounds = array<i64: 2, 128>}, {pipeline_mode = #tpu.pipeline_mode<synchronous>, transform_indices = @transform_16, window_bounds = array<i64: 1, 128>}, {pipeline_mode = #tpu.pipeline_mode<synchronous>, transform_indices = @transform_17, window_bounds = array<i64: 1, 128>}, {transform_indices = @transform_18, window_bounds = array<i64: 1, 128, 384>}, {transform_indices = @transform_19, window_bounds = array<i64: 1, 1, 384>}, {transform_indices = @transform_20, window_bounds = array<i64: 1, 128, 128>}, {transform_indices = @transform_21, window_bounds = array<i64: 1, 1, 128>}, {transform_indices = @transform_22, window_bounds = array<i64: 1, 1, 128>}, {transform_indices = @transform_23, window_bounds = array<i64: 1, 1, 128>}, {transform_indices = @transform_24, window_bounds = array<i64: 1, 1, 128>}, {transform_indices = @transform_25, window_bounds = array<i64: 1, 1, 128>}, {transform_indices = @transform_26, window_bounds = array<i64: 1, 128, 512>}, {transform_indices = @transform_27, window_bounds = array<i64: 1, 1, 512>}, {transform_indices = @transform_28, window_bounds = array<i64: 1, 512, 128>}, {transform_indices = @transform_29, window_bounds = array<i64: 1, 1, 128>}, {pipeline_mode = #tpu.pipeline_mode<synchronous>, transform_indices = @transform_30, window_bounds = array<i64: 16, 128>}]} {
    %c0_i32 = arith.constant 0 : i32
    %0 = arith.cmpi eq, %arg0, %c0_i32 : i32
    %1 = arith.extui %0 : i1 to i32
    %c0_i32_0 = arith.constant 0 : i32
    %2 = arith.cmpi ne, %1, %c0_i32_0 : i32
    scf.if %2 {
      %c0_61 = arith.constant 0 : index
      %c0_62 = arith.constant 0 : index
      %129 = vector.load %arg1[%c0_61, %c0_62] : memref<16x16xf32, #tpu.memory_space<vmem>>, vector<16x16xf32>
      %c0_63 = arith.constant 0 : index
      %c0_64 = arith.constant 0 : index
      %130 = vector.load %arg2[%c0_63, %c0_64] : memref<1x16xf32, #tpu.memory_space<vmem>>, vector<1x16xf32>
      %131 = vector.broadcast %130 : vector<1x16xf32> to vector<16x16xf32>
      %132 = arith.mulf %129, %131 : vector<16x16xf32>
      %c0_65 = arith.constant 0 : index
      %c0_66 = arith.constant 0 : index
      %133 = vector.load %arg3[%c0_65, %c0_66] : memref<16x256xbf16, #tpu.memory_space<vmem>>, vector<16x256xbf16>
      %c0_67 = arith.constant 0 : index
      %c0_68 = arith.constant 0 : index
      %134 = vector.load %arg4[%c0_67, %c0_68] : memref<1x256xf32, #tpu.memory_space<vmem>>, vector<1x256xf32>
      %135 = arith.truncf %132 : vector<16x16xf32> to vector<16x16xbf16>
      %cst_69 = arith.constant dense<0.000000e+00> : vector<16x256xf32>
      %136 = tpu.matmul %135, %133, %cst_69 {dimension_numbers = #tpu.dot_dimension_numbers<[1], [0], [0], [1], [0, 0, 1, 1], [], []>} : vector<16x16xbf16>, vector<16x256xbf16>, vector<16x256xf32> -> vector<16x256xf32>
      %137 = vector.broadcast %134 : vector<1x256xf32> to vector<16x256xf32>
      %138 = arith.addf %136, %137 : vector<16x256xf32>
      %cst_70 = arith.constant 0.000000e+00 : f32
      %139 = vector.broadcast %cst_70 : f32 to vector<16x256xf32>
      %140 = arith.maximumf %138, %139 : vector<16x256xf32>
      %c0_71 = arith.constant 0 : index
      %c0_72 = arith.constant 0 : index
      %141 = vector.load %arg5[%c0_71, %c0_72] : memref<256x24xbf16, #tpu.memory_space<vmem>>, vector<256x24xbf16>
      %c0_73 = arith.constant 0 : index
      %c0_74 = arith.constant 0 : index
      %142 = vector.load %arg6[%c0_73, %c0_74] : memref<1x24xf32, #tpu.memory_space<vmem>>, vector<1x24xf32>
      %143 = arith.truncf %140 : vector<16x256xf32> to vector<16x256xbf16>
      %cst_75 = arith.constant dense<0.000000e+00> : vector<16x24xf32>
      %144 = tpu.matmul %143, %141, %cst_75 {dimension_numbers = #tpu.dot_dimension_numbers<[1], [0], [0], [1], [0, 0, 1, 1], [], []>} : vector<16x256xbf16>, vector<256x24xbf16>, vector<16x24xf32> -> vector<16x24xf32>
      %145 = vector.broadcast %142 : vector<1x24xf32> to vector<16x24xf32>
      %146 = arith.addf %144, %145 : vector<16x24xf32>
      %c0_76 = arith.constant 0 : index
      %c0_77 = arith.constant 0 : index
      %147 = vector.load %arg7[%c0_76, %c0_77] : memref<1x24xf32, #tpu.memory_space<vmem>>, vector<1x24xf32>
      %c0_78 = arith.constant 0 : index
      %c0_79 = arith.constant 0 : index
      %148 = vector.load %arg8[%c0_78, %c0_79] : memref<1x24xf32, #tpu.memory_space<vmem>>, vector<1x24xf32>
      %cst_80 = arith.constant dense<0.000000e+00> : vector<24xf32>
      %149 = vector.multi_reduction <add>, %146, %cst_80 [0] : vector<16x24xf32> to vector<24xf32>
      %150 = vector.shape_cast %149 : vector<24xf32> to vector<1x24xf32>
      %cst_81 = arith.constant 1.600000e+01 : f32
      %151 = vector.broadcast %cst_81 : f32 to vector<1x24xf32>
      %152 = arith.divf %150, %151 : vector<1x24xf32>
      %153 = vector.broadcast %152 : vector<1x24xf32> to vector<16x24xf32>
      %154 = arith.subf %146, %153 : vector<16x24xf32>
      %155 = arith.mulf %154, %154 : vector<16x24xf32>
      %cst_82 = arith.constant dense<0.000000e+00> : vector<24xf32>
      %156 = vector.multi_reduction <add>, %155, %cst_82 [0] : vector<16x24xf32> to vector<24xf32>
      %157 = vector.shape_cast %156 : vector<24xf32> to vector<1x24xf32>
      %cst_83 = arith.constant 1.600000e+01 : f32
      %158 = vector.broadcast %cst_83 : f32 to vector<1x24xf32>
      %159 = arith.divf %157, %158 : vector<1x24xf32>
      %160 = vector.broadcast %152 : vector<1x24xf32> to vector<16x24xf32>
      %161 = arith.subf %146, %160 : vector<16x24xf32>
      %cst_84 = arith.constant 9.99999974E-6 : f32
      %162 = vector.broadcast %cst_84 : f32 to vector<1x24xf32>
      %163 = arith.addf %159, %162 : vector<1x24xf32>
      %164 = math.rsqrt %163 : vector<1x24xf32>
      %165 = vector.broadcast %164 : vector<1x24xf32> to vector<16x24xf32>
      %166 = arith.mulf %161, %165 : vector<16x24xf32>
      %167 = vector.broadcast %147 : vector<1x24xf32> to vector<16x24xf32>
      %168 = arith.mulf %166, %167 : vector<16x24xf32>
      %169 = vector.broadcast %148 : vector<1x24xf32> to vector<16x24xf32>
      %170 = arith.addf %168, %169 : vector<16x24xf32>
      %c0_85 = arith.constant 0 : index
      %c0_86 = arith.constant 0 : index
      %171 = vector.load %arg9[%c0_85, %c0_86] : memref<24x256xbf16, #tpu.memory_space<vmem>>, vector<24x256xbf16>
      %c0_87 = arith.constant 0 : index
      %c0_88 = arith.constant 0 : index
      %172 = vector.load %arg10[%c0_87, %c0_88] : memref<1x256xf32, #tpu.memory_space<vmem>>, vector<1x256xf32>
      %173 = arith.truncf %170 : vector<16x24xf32> to vector<16x24xbf16>
      %cst_89 = arith.constant dense<0.000000e+00> : vector<16x256xf32>
      %174 = tpu.matmul %173, %171, %cst_89 {dimension_numbers = #tpu.dot_dimension_numbers<[1], [0], [0], [1], [0, 0, 1, 1], [], []>} : vector<16x24xbf16>, vector<24x256xbf16>, vector<16x256xf32> -> vector<16x256xf32>
      %175 = vector.broadcast %172 : vector<1x256xf32> to vector<16x256xf32>
      %176 = arith.addf %174, %175 : vector<16x256xf32>
      %cst_90 = arith.constant 0.000000e+00 : f32
      %177 = vector.broadcast %cst_90 : f32 to vector<16x256xf32>
      %178 = arith.maximumf %176, %177 : vector<16x256xf32>
      %c0_91 = arith.constant 0 : index
      %c0_92 = arith.constant 0 : index
      %179 = vector.load %arg11[%c0_91, %c0_92] : memref<256x128xbf16, #tpu.memory_space<vmem>>, vector<256x128xbf16>
      %c0_93 = arith.constant 0 : index
      %c0_94 = arith.constant 0 : index
      %180 = vector.load %arg12[%c0_93, %c0_94] : memref<1x128xf32, #tpu.memory_space<vmem>>, vector<1x128xf32>
      %181 = arith.truncf %178 : vector<16x256xf32> to vector<16x256xbf16>
      %cst_95 = arith.constant dense<0.000000e+00> : vector<16x128xf32>
      %182 = tpu.matmul %181, %179, %cst_95 {dimension_numbers = #tpu.dot_dimension_numbers<[1], [0], [0], [1], [0, 0, 1, 1], [], []>} : vector<16x256xbf16>, vector<256x128xbf16>, vector<16x128xf32> -> vector<16x128xf32>
      %183 = vector.broadcast %180 : vector<1x128xf32> to vector<16x128xf32>
      %184 = arith.addf %182, %183 : vector<16x128xf32>
      %c0_96 = arith.constant 0 : index
      %c0_97 = arith.constant 0 : index
      %185 = vector.load %arg13[%c0_96, %c0_97] : memref<1x128xf32, #tpu.memory_space<vmem>>, vector<1x128xf32>
      %c0_98 = arith.constant 0 : index
      %c0_99 = arith.constant 0 : index
      %186 = vector.load %arg14[%c0_98, %c0_99] : memref<1x128xf32, #tpu.memory_space<vmem>>, vector<1x128xf32>
      %cst_100 = arith.constant dense<0.000000e+00> : vector<16xf32>
      %187 = vector.multi_reduction <add>, %184, %cst_100 [1] : vector<16x128xf32> to vector<16xf32>
      %188 = vector.shape_cast %187 : vector<16xf32> to vector<16x1xf32>
      %cst_101 = arith.constant 1.280000e+02 : f32
      %189 = vector.broadcast %cst_101 : f32 to vector<16x1xf32>
      %190 = arith.divf %188, %189 : vector<16x1xf32>
      %191 = vector.broadcast %190 : vector<16x1xf32> to vector<16x128xf32>
      %192 = arith.subf %184, %191 : vector<16x128xf32>
      %193 = arith.mulf %192, %192 : vector<16x128xf32>
      %cst_102 = arith.constant dense<0.000000e+00> : vector<16xf32>
      %194 = vector.multi_reduction <add>, %193, %cst_102 [1] : vector<16x128xf32> to vector<16xf32>
      %195 = vector.shape_cast %194 : vector<16xf32> to vector<16x1xf32>
      %cst_103 = arith.constant 1.280000e+02 : f32
      %196 = vector.broadcast %cst_103 : f32 to vector<16x1xf32>
      %197 = arith.divf %195, %196 : vector<16x1xf32>
      %198 = vector.broadcast %190 : vector<16x1xf32> to vector<16x128xf32>
      %199 = arith.subf %184, %198 : vector<16x128xf32>
      %cst_104 = arith.constant 9.99999974E-6 : f32
      %200 = vector.broadcast %cst_104 : f32 to vector<16x1xf32>
      %201 = arith.addf %197, %200 : vector<16x1xf32>
      %202 = math.rsqrt %201 : vector<16x1xf32>
      %203 = vector.broadcast %202 : vector<16x1xf32> to vector<16x128xf32>
      %204 = arith.mulf %199, %203 : vector<16x128xf32>
      %205 = vector.broadcast %185 : vector<1x128xf32> to vector<16x128xf32>
      %206 = arith.mulf %204, %205 : vector<16x128xf32>
      %207 = vector.broadcast %186 : vector<1x128xf32> to vector<16x128xf32>
      %208 = arith.addf %206, %207 : vector<16x128xf32>
      %c0_105 = arith.constant 0 : index
      %c0_106 = arith.constant 0 : index
      %209 = vector.load %arg15[%c0_105, %c0_106] : memref<1x128xf32, #tpu.memory_space<vmem>>, vector<1x128xf32>
      %210 = vector.shape_cast %209 : vector<1x128xf32> to vector<1x128xf32>
      %211 = vector.broadcast %210 : vector<1x128xf32> to vector<16x128xf32>
      %c0_107 = arith.constant 0 : index
      %c0_108 = arith.constant 0 : index
      %212 = vector.load %arg16[%c0_107, %c0_108] : memref<2x128xf32, #tpu.memory_space<vmem>>, vector<1x128xf32>
      %213 = vector.broadcast %212 : vector<1x128xf32> to vector<16x128xf32>
      %214 = arith.addf %211, %213 : vector<16x128xf32>
      %c0_109 = arith.constant 0 : index
      %c0_110 = arith.constant 0 : index
      %215 = vector.load %arg32[%c0_109, %c0_110] : memref<32x128xf32, #tpu.memory_space<vmem>>, vector<16x128xf32>
      tpu.vector_store %arg32[%c0_109, %c0_110], %214 {strides = array<i32>} : memref<32x128xf32, #tpu.memory_space<vmem>>, vector<16x128xf32>,
      %c1 = arith.constant 1 : index
      %c0_111 = arith.constant 0 : index
      %216 = vector.load %arg16[%c1, %c0_111] : memref<2x128xf32, #tpu.memory_space<vmem>>, vector<1x128xf32>
      %217 = vector.broadcast %216 : vector<1x128xf32> to vector<16x128xf32>
      %218 = arith.addf %208, %217 : vector<16x128xf32>
      %c16 = arith.constant 16 : index
      %c0_112 = arith.constant 0 : index
      %219 = vector.load %arg32[%c16, %c0_112] : memref<32x128xf32, #tpu.memory_space<vmem>>, vector<16x128xf32>
      tpu.vector_store %arg32[%c16, %c0_112], %218 {strides = array<i32>} : memref<32x128xf32, #tpu.memory_space<vmem>>, vector<16x128xf32>,
    } else {
    }
    %c0 = arith.constant 0 : index
    %c0_1 = arith.constant 0 : index
    %3 = vector.load %arg32[%c0, %c0_1] : memref<32x128xf32, #tpu.memory_space<vmem>>, vector<32x128xf32>
    %c0_2 = arith.constant 0 : index
    %c0_3 = arith.constant 0 : index
    %c0_4 = arith.constant 0 : index
    %4 = vector.load %arg19[%c0_2, %c0_3, %c0_4] : memref<1x128x384xbf16, #tpu.memory_space<vmem>>, vector<1x128x384xbf16>
    %5 = vector.shape_cast %4 : vector<1x128x384xbf16> to vector<128x384xbf16>
    %c0_5 = arith.constant 0 : index
    %c0_6 = arith.constant 0 : index
    %c0_7 = arith.constant 0 : index
    %6 = vector.load %arg20[%c0_5, %c0_6, %c0_7] : memref<1x1x384xf32, #tpu.memory_space<vmem>>, vector<1x1x384xf32>
    %7 = vector.shape_cast %6 : vector<1x1x384xf32> to vector<1x384xf32>
    %8 = arith.truncf %3 : vector<32x128xf32> to vector<32x128xbf16>
    %cst = arith.constant dense<0.000000e+00> : vector<32x384xf32>
    %9 = tpu.matmul %8, %5, %cst {dimension_numbers = #tpu.dot_dimension_numbers<[1], [0], [0], [1], [0, 0, 1, 1], [], []>} : vector<32x128xbf16>, vector<128x384xbf16>, vector<32x384xf32> -> vector<32x384xf32>
    %10 = vector.broadcast %7 : vector<1x384xf32> to vector<32x384xf32>
    %11 = arith.addf %9, %10 : vector<32x384xf32>
    %12 = vector.extract_strided_slice %11 {offsets = [0, 0], sizes = [16, 128], strides = [1, 1]} : vector<32x384xf32> to vector<16x128xf32>
    %13 = vector.extract_strided_slice %11 {offsets = [16, 0], sizes = [16, 128], strides = [1, 1]} : vector<32x384xf32> to vector<16x128xf32>
    %14 = vector.extract_strided_slice %11 {offsets = [0, 128], sizes = [16, 128], strides = [1, 1]} : vector<32x384xf32> to vector<16x128xf32>
    %15 = vector.extract_strided_slice %11 {offsets = [16, 128], sizes = [16, 128], strides = [1, 1]} : vector<32x384xf32> to vector<16x128xf32>
    %16 = vector.extract_strided_slice %11 {offsets = [0, 256], sizes = [16, 128], strides = [1, 1]} : vector<32x384xf32> to vector<16x128xf32>
    %17 = vector.extract_strided_slice %11 {offsets = [16, 256], sizes = [16, 128], strides = [1, 1]} : vector<32x384xf32> to vector<16x128xf32>
    %18 = arith.subf %15, %14 : vector<16x128xf32>
    %19 = arith.mulf %12, %18 : vector<16x128xf32>
    %cst_8 = arith.constant dense<0.000000e+00> : vector<16xf32>
    %20 = vector.multi_reduction <add>, %19, %cst_8 [1] : vector<16x128xf32> to vector<16xf32>
    %21 = vector.shape_cast %20 : vector<16xf32> to vector<16x1xf32>
    %cst_9 = arith.constant 0.0883883461 : f32
    %22 = vector.broadcast %cst_9 : f32 to vector<16x1xf32>
    %23 = arith.mulf %21, %22 : vector<16x1xf32>
    %24 = arith.mulf %13, %18 : vector<16x128xf32>
    %cst_10 = arith.constant dense<0.000000e+00> : vector<16xf32>
    %25 = vector.multi_reduction <add>, %24, %cst_10 [1] : vector<16x128xf32> to vector<16xf32>
    %26 = vector.shape_cast %25 : vector<16xf32> to vector<16x1xf32>
    %cst_11 = arith.constant 0.0883883461 : f32
    %27 = vector.broadcast %cst_11 : f32 to vector<16x1xf32>
    %28 = arith.mulf %26, %27 : vector<16x1xf32>
    %29 = math.exp %23 : vector<16x1xf32>
    %cst_12 = arith.constant 1.000000e+00 : f32
    %30 = vector.broadcast %cst_12 : f32 to vector<16x1xf32>
    %31 = arith.addf %30, %29 : vector<16x1xf32>
    %32 = tpu.reciprocal %31 {approx = true} : vector<16x1xf32> -> vector<16x1xf32>
    %33 = math.exp %28 : vector<16x1xf32>
    %cst_13 = arith.constant 1.000000e+00 : f32
    %34 = vector.broadcast %cst_13 : f32 to vector<16x1xf32>
    %35 = arith.addf %34, %33 : vector<16x1xf32>
    %36 = tpu.reciprocal %35 {approx = true} : vector<16x1xf32> -> vector<16x1xf32>
    %37 = arith.subf %16, %17 : vector<16x128xf32>
    %38 = vector.broadcast %32 : vector<16x1xf32> to vector<16x128xf32>
    %39 = arith.mulf %38, %37 : vector<16x128xf32>
    %40 = arith.addf %17, %39 : vector<16x128xf32>
    %41 = vector.broadcast %36 : vector<16x1xf32> to vector<16x128xf32>
    %42 = arith.mulf %41, %37 : vector<16x128xf32>
    %43 = arith.addf %17, %42 : vector<16x128xf32>
    %44 = tpu.concatenate %40, %43 in 0 : vector<16x128xf32>, vector<16x128xf32> -> vector<32x128xf32>
    %c0_14 = arith.constant 0 : index
    %c0_15 = arith.constant 0 : index
    %c0_16 = arith.constant 0 : index
    %45 = vector.load %arg21[%c0_14, %c0_15, %c0_16] : memref<1x128x128xbf16, #tpu.memory_space<vmem>>, vector<1x128x128xbf16>
    %46 = vector.shape_cast %45 : vector<1x128x128xbf16> to vector<128x128xbf16>
    %c0_17 = arith.constant 0 : index
    %c0_18 = arith.constant 0 : index
    %c0_19 = arith.constant 0 : index
    %47 = vector.load %arg22[%c0_17, %c0_18, %c0_19] : memref<1x1x128xf32, #tpu.memory_space<vmem>>, vector<1x1x128xf32>
    %48 = vector.shape_cast %47 : vector<1x1x128xf32> to vector<1x128xf32>
    %49 = arith.truncf %44 : vector<32x128xf32> to vector<32x128xbf16>
    %cst_20 = arith.constant dense<0.000000e+00> : vector<32x128xf32>
    %50 = tpu.matmul %49, %46, %cst_20 {dimension_numbers = #tpu.dot_dimension_numbers<[1], [0], [0], [1], [0, 0, 1, 1], [], []>} : vector<32x128xbf16>, vector<128x128xbf16>, vector<32x128xf32> -> vector<32x128xf32>
    %51 = vector.broadcast %48 : vector<1x128xf32> to vector<32x128xf32>
    %52 = arith.addf %50, %51 : vector<32x128xf32>
    %53 = arith.addf %3, %52 : vector<32x128xf32>
    %c0_21 = arith.constant 0 : index
    %c0_22 = arith.constant 0 : index
    %c0_23 = arith.constant 0 : index
    %54 = vector.load %arg23[%c0_21, %c0_22, %c0_23] : memref<1x1x128xf32, #tpu.memory_space<vmem>>, vector<1x1x128xf32>
    %55 = vector.shape_cast %54 : vector<1x1x128xf32> to vector<1x128xf32>
    %c0_24 = arith.constant 0 : index
    %c0_25 = arith.constant 0 : index
    %c0_26 = arith.constant 0 : index
    %56 = vector.load %arg24[%c0_24, %c0_25, %c0_26] : memref<1x1x128xf32, #tpu.memory_space<vmem>>, vector<1x1x128xf32>
    %57 = vector.shape_cast %56 : vector<1x1x128xf32> to vector<1x128xf32>
    %cst_27 = arith.constant dense<0.000000e+00> : vector<32xf32>
    %58 = vector.multi_reduction <add>, %53, %cst_27 [1] : vector<32x128xf32> to vector<32xf32>
    %59 = vector.shape_cast %58 : vector<32xf32> to vector<32x1xf32>
    %cst_28 = arith.constant 1.280000e+02 : f32
    %60 = vector.broadcast %cst_28 : f32 to vector<32x1xf32>
    %61 = arith.divf %59, %60 : vector<32x1xf32>
    %62 = vector.broadcast %61 : vector<32x1xf32> to vector<32x128xf32>
    %63 = arith.subf %53, %62 : vector<32x128xf32>
    %64 = arith.mulf %63, %63 : vector<32x128xf32>
    %cst_29 = arith.constant dense<0.000000e+00> : vector<32xf32>
    %65 = vector.multi_reduction <add>, %64, %cst_29 [1] : vector<32x128xf32> to vector<32xf32>
    %66 = vector.shape_cast %65 : vector<32xf32> to vector<32x1xf32>
    %cst_30 = arith.constant 1.280000e+02 : f32
    %67 = vector.broadcast %cst_30 : f32 to vector<32x1xf32>
    %68 = arith.divf %66, %67 : vector<32x1xf32>
    %69 = vector.broadcast %61 : vector<32x1xf32> to vector<32x128xf32>
    %70 = arith.subf %53, %69 : vector<32x128xf32>
    %cst_31 = arith.constant 9.99999974E-6 : f32
    %71 = vector.broadcast %cst_31 : f32 to vector<32x1xf32>
    %72 = arith.addf %68, %71 : vector<32x1xf32>
    %73 = math.rsqrt %72 : vector<32x1xf32>
    %74 = vector.broadcast %73 : vector<32x1xf32> to vector<32x128xf32>
    %75 = arith.mulf %70, %74 : vector<32x128xf32>
    %76 = vector.broadcast %55 : vector<1x128xf32> to vector<32x128xf32>
    %77 = arith.mulf %75, %76 : vector<32x128xf32>
    %78 = vector.broadcast %57 : vector<1x128xf32> to vector<32x128xf32>
    %79 = arith.addf %77, %78 : vector<32x128xf32>
    %c0_32 = arith.constant 0 : index
    %c0_33 = arith.constant 0 : index
    %c0_34 = arith.constant 0 : index
    %80 = vector.load %arg27[%c0_32, %c0_33, %c0_34] : memref<1x128x512xbf16, #tpu.memory_space<vmem>>, vector<1x128x512xbf16>
    %81 = vector.shape_cast %80 : vector<1x128x512xbf16> to vector<128x512xbf16>
    %c0_35 = arith.constant 0 : index
    %c0_36 = arith.constant 0 : index
    %c0_37 = arith.constant 0 : index
    %82 = vector.load %arg28[%c0_35, %c0_36, %c0_37] : memref<1x1x512xf32, #tpu.memory_space<vmem>>, vector<1x1x512xf32>
    %83 = vector.shape_cast %82 : vector<1x1x512xf32> to vector<1x512xf32>
    %84 = arith.truncf %79 : vector<32x128xf32> to vector<32x128xbf16>
    %cst_38 = arith.constant dense<0.000000e+00> : vector<32x512xf32>
    %85 = tpu.matmul %84, %81, %cst_38 {dimension_numbers = #tpu.dot_dimension_numbers<[1], [0], [0], [1], [0, 0, 1, 1], [], []>} : vector<32x128xbf16>, vector<128x512xbf16>, vector<32x512xf32> -> vector<32x512xf32>
    %86 = vector.broadcast %83 : vector<1x512xf32> to vector<32x512xf32>
    %87 = arith.addf %85, %86 : vector<32x512xf32>
    %cst_39 = arith.constant 0.000000e+00 : f32
    %88 = vector.broadcast %cst_39 : f32 to vector<32x512xf32>
    %89 = arith.maximumf %87, %88 : vector<32x512xf32>
    %c0_40 = arith.constant 0 : index
    %c0_41 = arith.constant 0 : index
    %c0_42 = arith.constant 0 : index
    %90 = vector.load %arg29[%c0_40, %c0_41, %c0_42] : memref<1x512x128xbf16, #tpu.memory_space<vmem>>, vector<1x512x128xbf16>
    %91 = vector.shape_cast %90 : vector<1x512x128xbf16> to vector<512x128xbf16>
    %c0_43 = arith.constant 0 : index
    %c0_44 = arith.constant 0 : index
    %c0_45 = arith.constant 0 : index
    %92 = vector.load %arg30[%c0_43, %c0_44, %c0_45] : memref<1x1x128xf32, #tpu.memory_space<vmem>>, vector<1x1x128xf32>
    %93 = vector.shape_cast %92 : vector<1x1x128xf32> to vector<1x128xf32>
    %94 = arith.truncf %89 : vector<32x512xf32> to vector<32x512xbf16>
    %cst_46 = arith.constant dense<0.000000e+00> : vector<32x128xf32>
    %95 = tpu.matmul %94, %91, %cst_46 {dimension_numbers = #tpu.dot_dimension_numbers<[1], [0], [0], [1], [0, 0, 1, 1], [], []>} : vector<32x512xbf16>, vector<512x128xbf16>, vector<32x128xf32> -> vector<32x128xf32>
    %96 = vector.broadcast %93 : vector<1x128xf32> to vector<32x128xf32>
    %97 = arith.addf %95, %96 : vector<32x128xf32>
    %98 = arith.addf %79, %97 : vector<32x128xf32>
    %c0_47 = arith.constant 0 : index
    %c0_48 = arith.constant 0 : index
    %c0_49 = arith.constant 0 : index
    %99 = vector.load %arg25[%c0_47, %c0_48, %c0_49] : memref<1x1x128xf32, #tpu.memory_space<vmem>>, vector<1x1x128xf32>
    %100 = vector.shape_cast %99 : vector<1x1x128xf32> to vector<1x128xf32>
    %c0_50 = arith.constant 0 : index
    %c0_51 = arith.constant 0 : index
    %c0_52 = arith.constant 0 : index
    %101 = vector.load %arg26[%c0_50, %c0_51, %c0_52] : memref<1x1x128xf32, #tpu.memory_space<vmem>>, vector<1x1x128xf32>
    %102 = vector.shape_cast %101 : vector<1x1x128xf32> to vector<1x128xf32>
    %cst_53 = arith.constant dense<0.000000e+00> : vector<32xf32>
    %103 = vector.multi_reduction <add>, %98, %cst_53 [1] : vector<32x128xf32> to vector<32xf32>
    %104 = vector.shape_cast %103 : vector<32xf32> to vector<32x1xf32>
    %cst_54 = arith.constant 1.280000e+02 : f32
    %105 = vector.broadcast %cst_54 : f32 to vector<32x1xf32>
    %106 = arith.divf %104, %105 : vector<32x1xf32>
    %107 = vector.broadcast %106 : vector<32x1xf32> to vector<32x128xf32>
    %108 = arith.subf %98, %107 : vector<32x128xf32>
    %109 = arith.mulf %108, %108 : vector<32x128xf32>
    %cst_55 = arith.constant dense<0.000000e+00> : vector<32xf32>
    %110 = vector.multi_reduction <add>, %109, %cst_55 [1] : vector<32x128xf32> to vector<32xf32>
    %111 = vector.shape_cast %110 : vector<32xf32> to vector<32x1xf32>
    %cst_56 = arith.constant 1.280000e+02 : f32
    %112 = vector.broadcast %cst_56 : f32 to vector<32x1xf32>
    %113 = arith.divf %111, %112 : vector<32x1xf32>
    %114 = vector.broadcast %106 : vector<32x1xf32> to vector<32x128xf32>
    %115 = arith.subf %98, %114 : vector<32x128xf32>
    %cst_57 = arith.constant 9.99999974E-6 : f32
    %116 = vector.broadcast %cst_57 : f32 to vector<32x1xf32>
    %117 = arith.addf %113, %116 : vector<32x1xf32>
    %118 = math.rsqrt %117 : vector<32x1xf32>
    %119 = vector.broadcast %118 : vector<32x1xf32> to vector<32x128xf32>
    %120 = arith.mulf %115, %119 : vector<32x128xf32>
    %121 = vector.broadcast %100 : vector<1x128xf32> to vector<32x128xf32>
    %122 = arith.mulf %120, %121 : vector<32x128xf32>
    %123 = vector.broadcast %102 : vector<1x128xf32> to vector<32x128xf32>
    %124 = arith.addf %122, %123 : vector<32x128xf32>
    %c0_58 = arith.constant 0 : index
    %c0_59 = arith.constant 0 : index
    %125 = vector.load %arg32[%c0_58, %c0_59] : memref<32x128xf32, #tpu.memory_space<vmem>>, vector<32x128xf32>
    tpu.vector_store %arg32[%c0_58, %c0_59], %124 {strides = array<i32>} : memref<32x128xf32, #tpu.memory_space<vmem>>, vector<32x128xf32>,
    %c2_i32 = arith.constant 2 : i32
    %126 = arith.cmpi eq, %arg0, %c2_i32 : i32
    %127 = arith.extui %126 : i1 to i32
    %c0_i32_60 = arith.constant 0 : i32
    %128 = arith.cmpi ne, %127, %c0_i32_60 : i32
    scf.if %128 {
      %129 = vector.extract_strided_slice %124 {offsets = [0, 0], sizes = [16, 128], strides = [1, 1]} : vector<32x128xf32> to vector<16x128xf32>
      %c0_61 = arith.constant 0 : index
      %c0_62 = arith.constant 0 : index
      %130 = vector.load %arg17[%c0_61, %c0_62] : memref<1x128xf32, #tpu.memory_space<vmem>>, vector<1x128xf32>
      %c0_63 = arith.constant 0 : index
      %c0_64 = arith.constant 0 : index
      %131 = vector.load %arg18[%c0_63, %c0_64] : memref<1x128xf32, #tpu.memory_space<vmem>>, vector<1x128xf32>
      %cst_65 = arith.constant dense<0.000000e+00> : vector<128xf32>
      %132 = vector.multi_reduction <add>, %129, %cst_65 [0] : vector<16x128xf32> to vector<128xf32>
      %133 = vector.shape_cast %132 : vector<128xf32> to vector<1x128xf32>
      %cst_66 = arith.constant 1.600000e+01 : f32
      %134 = vector.broadcast %cst_66 : f32 to vector<1x128xf32>
      %135 = arith.divf %133, %134 : vector<1x128xf32>
      %136 = vector.broadcast %135 : vector<1x128xf32> to vector<16x128xf32>
      %137 = arith.subf %129, %136 : vector<16x128xf32>
      %138 = arith.mulf %137, %137 : vector<16x128xf32>
      %cst_67 = arith.constant dense<0.000000e+00> : vector<128xf32>
      %139 = vector.multi_reduction <add>, %138, %cst_67 [0] : vector<16x128xf32> to vector<128xf32>
      %140 = vector.shape_cast %139 : vector<128xf32> to vector<1x128xf32>
      %cst_68 = arith.constant 1.600000e+01 : f32
      %141 = vector.broadcast %cst_68 : f32 to vector<1x128xf32>
      %142 = arith.divf %140, %141 : vector<1x128xf32>
      %143 = vector.broadcast %135 : vector<1x128xf32> to vector<16x128xf32>
      %144 = arith.subf %129, %143 : vector<16x128xf32>
      %cst_69 = arith.constant 9.99999974E-6 : f32
      %145 = vector.broadcast %cst_69 : f32 to vector<1x128xf32>
      %146 = arith.addf %142, %145 : vector<1x128xf32>
      %147 = math.rsqrt %146 : vector<1x128xf32>
      %148 = vector.broadcast %147 : vector<1x128xf32> to vector<16x128xf32>
      %149 = arith.mulf %144, %148 : vector<16x128xf32>
      %150 = vector.broadcast %130 : vector<1x128xf32> to vector<16x128xf32>
      %151 = arith.mulf %149, %150 : vector<16x128xf32>
      %152 = vector.broadcast %131 : vector<1x128xf32> to vector<16x128xf32>
      %153 = arith.addf %151, %152 : vector<16x128xf32>
      %c0_70 = arith.constant 0 : index
      %c0_71 = arith.constant 0 : index
      %154 = vector.load %arg31[%c0_70, %c0_71] : memref<16x128xf32, #tpu.memory_space<vmem>>, vector<16x128xf32>
      tpu.vector_store %arg31[%c0_70, %c0_71], %153 {strides = array<i32>} : memref<16x128xf32, #tpu.memory_space<vmem>>, vector<16x128xf32>,
    } else {
    }
    return
  }
  func.func @transform_0(%arg0: i32) -> (i32, i32) {
    %c0_i32 = arith.constant 0 : i32
    %c0_i32_0 = arith.constant 0 : i32
    %c0_i32_1 = arith.constant 0 : i32
    return %c0_i32, %c0_i32_0 : i32, i32
  }
  func.func @transform_1(%arg0: i32) -> (i32, i32) {
    %c0_i32 = arith.constant 0 : i32
    %c0_i32_0 = arith.constant 0 : i32
    %c0_i32_1 = arith.constant 0 : i32
    return %c0_i32, %c0_i32_0 : i32, i32
  }
  func.func @transform_2(%arg0: i32) -> (i32, i32) {
    %c0_i32 = arith.constant 0 : i32
    %c0_i32_0 = arith.constant 0 : i32
    %c0_i32_1 = arith.constant 0 : i32
    return %c0_i32, %c0_i32_0 : i32, i32
  }
  func.func @transform_3(%arg0: i32) -> (i32, i32) {
    %c0_i32 = arith.constant 0 : i32
    %c0_i32_0 = arith.constant 0 : i32
    %c0_i32_1 = arith.constant 0 : i32
    return %c0_i32, %c0_i32_0 : i32, i32
  }
  func.func @transform_4(%arg0: i32) -> (i32, i32) {
    %c0_i32 = arith.constant 0 : i32
    %c0_i32_0 = arith.constant 0 : i32
    %c0_i32_1 = arith.constant 0 : i32
    return %c0_i32, %c0_i32_0 : i32, i32
  }
  func.func @transform_5(%arg0: i32) -> (i32, i32) {
    %c0_i32 = arith.constant 0 : i32
    %c0_i32_0 = arith.constant 0 : i32
    %c0_i32_1 = arith.constant 0 : i32
    return %c0_i32, %c0_i32_0 : i32, i32
  }
  func.func @transform_6(%arg0: i32) -> (i32, i32) {
    %c0_i32 = arith.constant 0 : i32
    %c0_i32_0 = arith.constant 0 : i32
    %c0_i32_1 = arith.constant 0 : i32
    return %c0_i32, %c0_i32_0 : i32, i32
  }
  func.func @transform_7(%arg0: i32) -> (i32, i32) {
    %c0_i32 = arith.constant 0 : i32
    %c0_i32_0 = arith.constant 0 : i32
    %c0_i32_1 = arith.constant 0 : i32
    return %c0_i32, %c0_i32_0 : i32, i32
  }
  func.func @transform_8(%arg0: i32) -> (i32, i32) {
    %c0_i32 = arith.constant 0 : i32
    %c0_i32_0 = arith.constant 0 : i32
    %c0_i32_1 = arith.constant 0 : i32
    return %c0_i32, %c0_i32_0 : i32, i32
  }
  func.func @transform_9(%arg0: i32) -> (i32, i32) {
    %c0_i32 = arith.constant 0 : i32
    %c0_i32_0 = arith.constant 0 : i32
    %c0_i32_1 = arith.constant 0 : i32
    return %c0_i32, %c0_i32_0 : i32, i32
  }
  func.func @transform_10(%arg0: i32) -> (i32, i32) {
    %c0_i32 = arith.constant 0 : i32
    %c0_i32_0 = arith.constant 0 : i32
    %c0_i32_1 = arith.constant 0 : i32
    return %c0_i32, %c0_i32_0 : i32, i32
  }
  func.func @transform_11(%arg0: i32) -> (i32, i32) {
    %c0_i32 = arith.constant 0 : i32
    %c0_i32_0 = arith.constant 0 : i32
    %c0_i32_1 = arith.constant 0 : i32
    return %c0_i32, %c0_i32_0 : i32, i32
  }
  func.func @transform_12(%arg0: i32) -> (i32, i32) {
    %c0_i32 = arith.constant 0 : i32
    %c0_i32_0 = arith.constant 0 : i32
    %c0_i32_1 = arith.constant 0 : i32
    return %c0_i32, %c0_i32_0 : i32, i32
  }
  func.func @transform_13(%arg0: i32) -> (i32, i32) {
    %c0_i32 = arith.constant 0 : i32
    %c0_i32_0 = arith.constant 0 : i32
    %c0_i32_1 = arith.constant 0 : i32
    return %c0_i32, %c0_i32_0 : i32, i32
  }
  func.func @transform_14(%arg0: i32) -> (i32, i32) {
    %c0_i32 = arith.constant 0 : i32
    %c0_i32_0 = arith.constant 0 : i32
    %c0_i32_1 = arith.constant 0 : i32
    return %c0_i32, %c0_i32_0 : i32, i32
  }
  func.func @transform_15(%arg0: i32) -> (i32, i32) {
    %c0_i32 = arith.constant 0 : i32
    %c0_i32_0 = arith.constant 0 : i32
    %c0_i32_1 = arith.constant 0 : i32
    return %c0_i32, %c0_i32_0 : i32, i32
  }
  func.func @transform_16(%arg0: i32) -> (i32, i32) {
    %c0_i32 = arith.constant 0 : i32
    %c0_i32_0 = arith.constant 0 : i32
    %c0_i32_1 = arith.constant 0 : i32
    return %c0_i32, %c0_i32_0 : i32, i32
  }
  func.func @transform_17(%arg0: i32) -> (i32, i32) {
    %c0_i32 = arith.constant 0 : i32
    %c0_i32_0 = arith.constant 0 : i32
    %c0_i32_1 = arith.constant 0 : i32
    return %c0_i32, %c0_i32_0 : i32, i32
  }
  func.func @transform_18(%arg0: i32) -> (i32, i32, i32) {
    %c0_i32 = arith.constant 0 : i32
    %c0_i32_0 = arith.constant 0 : i32
    %c0_i32_1 = arith.constant 0 : i32
    return %arg0, %c0_i32, %c0_i32_0 : i32, i32, i32
  }
  func.func @transform_19(%arg0: i32) -> (i32, i32, i32) {
    %c0_i32 = arith.constant 0 : i32
    %c0_i32_0 = arith.constant 0 : i32
    %c0_i32_1 = arith.constant 0 : i32
    return %arg0, %c0_i32, %c0_i32_0 : i32, i32, i32
  }
  func.func @transform_20(%arg0: i32) -> (i32, i32, i32) {
    %c0_i32 = arith.constant 0 : i32
    %c0_i32_0 = arith.constant 0 : i32
    %c0_i32_1 = arith.constant 0 : i32
    return %arg0, %c0_i32, %c0_i32_0 : i32, i32, i32
  }
  func.func @transform_21(%arg0: i32) -> (i32, i32, i32) {
    %c0_i32 = arith.constant 0 : i32
    %c0_i32_0 = arith.constant 0 : i32
    %c0_i32_1 = arith.constant 0 : i32
    return %arg0, %c0_i32, %c0_i32_0 : i32, i32, i32
  }
  func.func @transform_22(%arg0: i32) -> (i32, i32, i32) {
    %c0_i32 = arith.constant 0 : i32
    %c0_i32_0 = arith.constant 0 : i32
    %c0_i32_1 = arith.constant 0 : i32
    return %arg0, %c0_i32, %c0_i32_0 : i32, i32, i32
  }
  func.func @transform_23(%arg0: i32) -> (i32, i32, i32) {
    %c0_i32 = arith.constant 0 : i32
    %c0_i32_0 = arith.constant 0 : i32
    %c0_i32_1 = arith.constant 0 : i32
    return %arg0, %c0_i32, %c0_i32_0 : i32, i32, i32
  }
  func.func @transform_24(%arg0: i32) -> (i32, i32, i32) {
    %c0_i32 = arith.constant 0 : i32
    %c0_i32_0 = arith.constant 0 : i32
    %c0_i32_1 = arith.constant 0 : i32
    return %arg0, %c0_i32, %c0_i32_0 : i32, i32, i32
  }
  func.func @transform_25(%arg0: i32) -> (i32, i32, i32) {
    %c0_i32 = arith.constant 0 : i32
    %c0_i32_0 = arith.constant 0 : i32
    %c0_i32_1 = arith.constant 0 : i32
    return %arg0, %c0_i32, %c0_i32_0 : i32, i32, i32
  }
  func.func @transform_26(%arg0: i32) -> (i32, i32, i32) {
    %c0_i32 = arith.constant 0 : i32
    %c0_i32_0 = arith.constant 0 : i32
    %c0_i32_1 = arith.constant 0 : i32
    return %arg0, %c0_i32, %c0_i32_0 : i32, i32, i32
  }
  func.func @transform_27(%arg0: i32) -> (i32, i32, i32) {
    %c0_i32 = arith.constant 0 : i32
    %c0_i32_0 = arith.constant 0 : i32
    %c0_i32_1 = arith.constant 0 : i32
    return %arg0, %c0_i32, %c0_i32_0 : i32, i32, i32
  }
  func.func @transform_28(%arg0: i32) -> (i32, i32, i32) {
    %c0_i32 = arith.constant 0 : i32
    %c0_i32_0 = arith.constant 0 : i32
    %c0_i32_1 = arith.constant 0 : i32
    return %arg0, %c0_i32, %c0_i32_0 : i32, i32, i32
  }
  func.func @transform_29(%arg0: i32) -> (i32, i32, i32) {
    %c0_i32 = arith.constant 0 : i32
    %c0_i32_0 = arith.constant 0 : i32
    %c0_i32_1 = arith.constant 0 : i32
    return %arg0, %c0_i32, %c0_i32_0 : i32, i32, i32
  }
  func.func @transform_30(%arg0: i32) -> (i32, i32) {
    %c0_i32 = arith.constant 0 : i32
    %c0_i32_0 = arith.constant 0 : i32
    %c0_i32_1 = arith.constant 0 : i32
    return %c0_i32, %c0_i32_0 : i32, i32
  }
}

</mosaic_0001>

<llo_original>
// kernel: tpu_custom_call.1
$region0: #{tpu_custom_call.1}
  #allocation0 [shape = 'u32[]', space=smem, size = 0x4, offset = 0x4, fixed_abs, tag = 'smem constant byte address 0x4 - core index']
  #allocation1 [shape = 'u32[144,128]{1,0:T(1,128)}', space=vmem, size = 0x12000, scoped, tag = 'internal scratch']
  #allocation2 [shape = 'f32[32,128]{1,0:T(8,128)}', space=vmem, size = 0x4000, scoped, tag = 'scratch operand']
  %s0 = inlined_call_operand.smem [shape: u32[31], index: -1, kind: input, shape index: {}]
  %s1 = sld [smem:[%s0]]
  %s2 = scalar_lea.smem %s0, 1
  %s3 = sld [smem:[%s2]]
  %s4 = scalar_lea.smem %s0, 2
  %s5 = sld [smem:[%s4]]
  %s6 = scalar_lea.smem %s0, 3
  %s7 = sld [smem:[%s6]]
  %s8 = scalar_lea.smem %s0, 4
  %s9 = sld [smem:[%s8]]
  %s10 = scalar_lea.smem %s0, 5
  %s11 = sld [smem:[%s10]]
  %s12 = scalar_lea.smem %s0, 6
  %s13 = sld [smem:[%s12]]
  %s14 = scalar_lea.smem %s0, 7
  %s15 = sld [smem:[%s14]]
  %s16 = scalar_lea.smem %s0, 8
  %s17 = sld [smem:[%s16]]
  %s18 = scalar_lea.smem %s0, 9
  %s19 = sld [smem:[%s18]]
  %s20 = scalar_lea.smem %s0, 10
  %s21 = sld [smem:[%s20]]
  %s22 = scalar_lea.smem %s0, 11
  %s23 = sld [smem:[%s22]]
  %s24 = scalar_lea.smem %s0, 12
  %s25 = sld [smem:[%s24]]
  %s26 = scalar_lea.smem %s0, 13
  %s27 = sld [smem:[%s26]]
  %s28 = scalar_lea.smem %s0, 14
  %s29 = sld [smem:[%s28]]
  %s30 = scalar_lea.smem %s0, 15
  %s31 = sld [smem:[%s30]]
  %s32 = scalar_lea.smem %s0, 16
  %s33 = sld [smem:[%s32]]
  %s34 = scalar_lea.smem %s0, 17
  %s35 = sld [smem:[%s34]]
  %s36 = scalar_lea.smem %s0, 18
  %s37 = sld [smem:[%s36]]
  %s38 = scalar_lea.smem %s0, 19
  %s39 = sld [smem:[%s38]]
  %s40 = scalar_lea.smem %s0, 20
  %s41 = sld [smem:[%s40]]
  %s42 = scalar_lea.smem %s0, 21
  %s43 = sld [smem:[%s42]]
  %s44 = scalar_lea.smem %s0, 22
  %s45 = sld [smem:[%s44]]
  %s46 = scalar_lea.smem %s0, 23
  %s47 = sld [smem:[%s46]]
  %s48 = scalar_lea.smem %s0, 24
  %s49 = sld [smem:[%s48]]
  %s50 = scalar_lea.smem %s0, 25
  %s51 = sld [smem:[%s50]]
  %s52 = scalar_lea.smem %s0, 26
  %s53 = sld [smem:[%s52]]
  %s54 = scalar_lea.smem %s0, 27
  %s55 = sld [smem:[%s54]]
  %s56 = scalar_lea.smem %s0, 28
  %s57 = sld [smem:[%s56]]
  %s58 = scalar_lea.smem %s0, 29
  %s59 = sld [smem:[%s58]]
  %s60 = scalar_lea.smem %s0, 30
  %s61 = sld [smem:[%s60]]
  %s62 = sld [smem:[#allocation0]]
  $region237: #{tpu_custom_call.1} parent=0
    _
  %s64 = ssub.s32 1, %s62
  %s65 = scalar_select 0, %s64, %s62
  $region1: #{tpu_custom_call.1} parent=0
    #allocation3 [shape = 'u8[512]{0}', space=vmem, size = 0x400, scoped, tag = 'input window, operand 1, single buffered']
    #allocation4 [shape = 's32[2]{0}', space=sflag, size = 0x8, scoped, tag = 'scoped memory for tpu_custom_call.1']
    #allocation5 [shape = 's32[2]{0}', space=sflag, size = 0x8, scoped, tag = 'scoped memory for tpu_custom_call.1']
    #allocation6 [shape = 'u8[8192]{0}', space=vmem, size = 0x2000, scoped, tag = 'input window, operand 2, single buffered']
    #allocation7 [shape = 's32[1]{0}', space=sflag, size = 0x4, scoped, tag = 'scoped memory for tpu_custom_call.1']
    #allocation8 [shape = 'u8[1024]{0}', space=vmem, size = 0x400, scoped, tag = 'input window, operand 3, single buffered']
    #allocation9 [shape = 'u8[512]{0}', space=vmem, size = 0x400, scoped, tag = 'input window, operand 5, single buffered']
    #allocation10 [shape = 's32[1]{0}', space=sflag, size = 0x4, scoped, tag = 'scoped memory for tpu_custom_call.1']
    #allocation11 [shape = 'u8[512]{0}', space=vmem, size = 0x400, scoped, tag = 'input window, operand 6, single buffered']
    #allocation12 [shape = 'u8[512]{0}', space=vmem, size = 0x400, scoped, tag = 'input window, operand 7, single buffered']
    #allocation13 [shape = 's32[1]{0}', space=sflag, size = 0x4, scoped, tag = 'scoped memory for tpu_custom_call.1']
    #allocation14 [shape = 'u8[1024]{0}', space=vmem, size = 0x400, scoped, tag = 'input window, operand 9, single buffered']
    #allocation15 [shape = 'u8[512]{0}', space=vmem, size = 0x400, scoped, tag = 'input window, operand 11, single buffered']
    #allocation16 [shape = 's32[1]{0}', space=sflag, size = 0x4, scoped, tag = 'scoped memory for tpu_custom_call.1']
    #allocation17 [shape = 'u8[512]{0}', space=vmem, size = 0x400, scoped, tag = 'input window, operand 12, single buffered']
    #allocation18 [shape = 'u8[512]{0}', space=vmem, size = 0x400, scoped, tag = 'input window, operand 13, single buffered']
    #allocation19 [shape = 's32[1]{0}', space=sflag, size = 0x4, scoped, tag = 'scoped memory for tpu_custom_call.1']
    #allocation20 [shape = 'u8[512]{0}', space=vmem, size = 0x400, scoped, tag = 'input window, operand 14, single buffered']
    #allocation21 [shape = 'u8[1024]{0}', space=vmem, size = 0x400, scoped, tag = 'input window, operand 15, single buffered']
    #allocation22 [shape = 's32[1]{0}', space=sflag, size = 0x4, scoped, tag = 'scoped memory for tpu_custom_call.1']
    #allocation23 [shape = 'u8[512]{0}', space=vmem, size = 0x400, scoped, tag = 'input window, operand 16, single buffered']
    #allocation24 [shape = 'u8[512]{0}', space=vmem, size = 0x400, scoped, tag = 'input window, operand 17, single buffered']
    #allocation25 [shape = 's32[1]{0}', space=sflag, size = 0x4, scoped, tag = 'scoped memory for tpu_custom_call.1']
    #allocation26 [shape = 'u8[196608]{0}', space=vmem, size = 0x30000, scoped, tag = 'input window, operand 18']
    #allocation27 [shape = 'u8[3072]{0}', space=vmem, size = 0xc00, scoped, tag = 'input window, operand 19']
    #allocation28 [shape = 'u8[65536]{0}', space=vmem, size = 0x10000, scoped, tag = 'input window, operand 20']
    #allocation29 [shape = 'u8[262144]{0}', space=vmem, size = 0x40000, scoped, tag = 'input window, operand 26']
    #allocation30 [shape = 'u8[262144]{0}', space=vmem, size = 0x40000, scoped, tag = 'input window, operand 28']
    #allocation31 [shape = 'u8[8192]{0}', space=vmem, size = 0x2000, scoped, tag = 'output window, operand 0, single buffered']
    %66 = vsyncpa [#allocation4], 0
    %67 = vsyncpa [#allocation7], 0
    %68 = vsyncpa [#allocation10], 0
    %69 = vsyncpa [#allocation13], 0
    %70 = vsyncpa [#allocation16], 0
    %71 = vsyncpa [#allocation19], 0
    %72 = vsyncpa [#allocation22], 0
    %73 = vsyncpa [#allocation25], 0
    %74 = vsyncpa [#allocation5], 0
    loop: start=0, step=1, limit=5
    $region2: #{tpu_custom_call.1} parent=1 // loop_pre_header
      _
    $region3: #{tpu_custom_call.1} parent=1 // loop_header
      %s76 = sphi 0, %s80
      %p77 = scmp.ge.s32.totalorder %s76, 5
      %s84 = sphi 0, %s84
      %s86 = sphi 0, %s84
      %s87 = sphi 0, %s86
      %s101 = sphi 0, %s87
      %s105 = sphi 0, %s105
      %s107 = sphi 0, %s105
      %s108 = sphi 0, %s107
      %s122 = sphi 0, %s108
      %s126 = sphi 0, %s126
      %s128 = sphi 0, %s126
      %s129 = sphi 0, %s128
      %s143 = sphi 0, %s129
      %s147 = sphi 0, %s147
      %s149 = sphi 0, %s147
      %s150 = sphi 0, %s149
      %s164 = sphi 0, %s150
      %s168 = sphi 0, %s168
      %s170 = sphi 0, %s168
      %s171 = sphi 0, %s170
      %s185 = sphi 0, %s171
      %s189 = sphi 0, %s189
      %s191 = sphi 0, %s189
      %s192 = sphi 0, %s191
      %s206 = sphi 0, %s192
      %s210 = sphi 0, %s210
      %s212 = sphi 0, %s210
      %s213 = sphi 0, %s212
      %s227 = sphi 0, %s213
      %s231 = sphi 0, %s231
      %s233 = sphi 0, %s231
      %s234 = sphi 0, %s233
      %s248 = sphi 0, %s234
      %s252 = sphi 0, %s252
      %s254 = sphi 0, %s252
      %s255 = sphi 0, %s254
      %s269 = sphi 0, %s255
      %s273 = sphi 0, %s273
      %s275 = sphi 0, %s273
      %s276 = sphi 0, %s275
      %s290 = sphi 0, %s276
      %s294 = sphi 0, %s294
      %s296 = sphi 0, %s294
      %s297 = sphi 0, %s296
      %s311 = sphi 0, %s297
      %s315 = sphi 0, %s315
      %s317 = sphi 0, %s315
      %s318 = sphi 0, %s317
      %s332 = sphi 0, %s318
      %s336 = sphi 0, %s336
      %s338 = sphi 0, %s336
      %s339 = sphi 0, %s338
      %s353 = sphi 0, %s339
      %s357 = sphi 0, %s357
      %s359 = sphi 0, %s357
      %s360 = sphi 0, %s359
      %s374 = sphi 0, %s360
      %s378 = sphi 0, %s378
      %s380 = sphi 0, %s378
      %s381 = sphi 0, %s380
      %s395 = sphi 0, %s381
      %s399 = sphi 0, %s399
      %s401 = sphi 0, %s399
      %s402 = sphi 0, %s401
      %s416 = sphi 0, %s402
      %s420 = sphi 0, %s420
      %s422 = sphi 0, %s420
      %s423 = sphi 0, %s422
      %s437 = sphi 0, %s423
      %s441 = sphi 0, %s441
      %s443 = sphi 0, %s441
      %s444 = sphi 0, %s443
      %s458 = sphi 0, %s444
      %s464 = sphi 0, %s466
      %s467 = sphi 0, %s464
      %s468 = sphi 0, %s467
      %s484 = sphi 0, %s468
      %s490 = sphi 0, %s492
      %s493 = sphi 0, %s490
      %s494 = sphi 0, %s493
      %s510 = sphi 0, %s494
      %s516 = sphi 0, %s518
      %s519 = sphi 0, %s516
      %s520 = sphi 0, %s519
      %s536 = sphi 0, %s520
      %s542 = sphi 0, %s544
      %s545 = sphi 0, %s542
      %s546 = sphi 0, %s545
      %s562 = sphi 0, %s546
      %s568 = sphi 0, %s570
      %s571 = sphi 0, %s568
      %s572 = sphi 0, %s571
      %s588 = sphi 0, %s572
      %s594 = sphi 0, %s596
      %s597 = sphi 0, %s594
      %s598 = sphi 0, %s597
      %s614 = sphi 0, %s598
      %s620 = sphi 0, %s622
      %s623 = sphi 0, %s620
      %s624 = sphi 0, %s623
      %s640 = sphi 0, %s624
      %s646 = sphi 0, %s648
      %s649 = sphi 0, %s646
      %s650 = sphi 0, %s649
      %s666 = sphi 0, %s650
      %s672 = sphi 0, %s674
      %s675 = sphi 0, %s672
      %s676 = sphi 0, %s675
      %s692 = sphi 0, %s676
      %s698 = sphi 0, %s700
      %s701 = sphi 0, %s698
      %s702 = sphi 0, %s701
      %s718 = sphi 0, %s702
      %s724 = sphi 0, %s726
      %s727 = sphi 0, %s724
      %s728 = sphi 0, %s727
      %s744 = sphi 0, %s728
      %s750 = sphi 0, %s752
      %s753 = sphi 0, %s750
      %s754 = sphi 0, %s753
      %s770 = sphi 0, %s754
      %s774 = sphi 0, %s774
      %s776 = sphi 0, %s774
      %s777 = sphi 0, %s776
      %s791 = sphi 0, %s777
    $region4: #{tpu_custom_call.1} parent=1 // loop_header_branch
      %79 = sbr.rel (%p77) target = $region8
    $region5: #{tpu_custom_call.1} parent=1 // loop_body
      %s81 = ssub.s32 %s76, 1
      %s82 = ssub.s32 %s76, 2
      %s83 = sadd.s32 %s76, 1
      %s85 = sadd.s32 %s84, 1
      %p88 = scmp.eq.s32.totalorder %s76, 2
      %p89 = scmp.ne.s32.totalorder %s84, %s86
      %p90 = scmp.eq.s32.totalorder %s76, 0
      %p91 = por %p89, %p90
      %p92 = scmp.ne.s32.totalorder %s84, %s86
      %p93 = scmp.eq.s32.totalorder %s81, 2
      %p94 = por %p92, %p93
      %p95 = scmp.ne.s32.totalorder %s86, %s87
      %p96 = scmp.eq.s32.totalorder %s81, 0
      %p97 = por %p95, %p96
      %p98 = scmp.ne.s32.totalorder %s86, %s87
      %p99 = scmp.eq.s32.totalorder %s82, 2
      %p100 = por %p98, %p99
      %p102 = scmp.ne.s32.totalorder %s87, %s101
      %p103 = scmp.eq.s32.totalorder %s82, 0
      %p104 = por %p102, %p103
      %s106 = sadd.s32 %s105, 1
      %p109 = scmp.eq.s32.totalorder %s76, 2
      %p110 = scmp.ne.s32.totalorder %s105, %s107
      %p111 = scmp.eq.s32.totalorder %s76, 0
      %p112 = por %p110, %p111
      %p113 = scmp.ne.s32.totalorder %s105, %s107
      %p114 = scmp.eq.s32.totalorder %s81, 2
      %p115 = por %p113, %p114
      %p116 = scmp.ne.s32.totalorder %s107, %s108
      %p117 = scmp.eq.s32.totalorder %s81, 0
      %p118 = por %p116, %p117
      %p119 = scmp.ne.s32.totalorder %s107, %s108
      %p120 = scmp.eq.s32.totalorder %s82, 2
      %p121 = por %p119, %p120
      %p123 = scmp.ne.s32.totalorder %s108, %s122
      %p124 = scmp.eq.s32.totalorder %s82, 0
      %p125 = por %p123, %p124
      %s127 = sadd.s32 %s126, 1
      %p130 = scmp.eq.s32.totalorder %s76, 2
      %p131 = scmp.ne.s32.totalorder %s126, %s128
      %p132 = scmp.eq.s32.totalorder %s76, 0
      %p133 = por %p131, %p132
      %p134 = scmp.ne.s32.totalorder %s126, %s128
      %p135 = scmp.eq.s32.totalorder %s81, 2
      %p136 = por %p134, %p135
      %p137 = scmp.ne.s32.totalorder %s128, %s129
      %p138 = scmp.eq.s32.totalorder %s81, 0
      %p139 = por %p137, %p138
      %p140 = scmp.ne.s32.totalorder %s128, %s129
      %p141 = scmp.eq.s32.totalorder %s82, 2
      %p142 = por %p140, %p141
      %p144 = scmp.ne.s32.totalorder %s129, %s143
      %p145 = scmp.eq.s32.totalorder %s82, 0
      %p146 = por %p144, %p145
      %s148 = sadd.s32 %s147, 1
      %p151 = scmp.eq.s32.totalorder %s76, 2
      %p152 = scmp.ne.s32.totalorder %s147, %s149
      %p153 = scmp.eq.s32.totalorder %s76, 0
      %p154 = por %p152, %p153
      %p155 = scmp.ne.s32.totalorder %s147, %s149
      %p156 = scmp.eq.s32.totalorder %s81, 2
      %p157 = por %p155, %p156
      %p158 = scmp.ne.s32.totalorder %s149, %s150
      %p159 = scmp.eq.s32.totalorder %s81, 0
      %p160 = por %p158, %p159
      %p161 = scmp.ne.s32.totalorder %s149, %s150
      %p162 = scmp.eq.s32.totalorder %s82, 2
      %p163 = por %p161, %p162
      %p165 = scmp.ne.s32.totalorder %s150, %s164
      %p166 = scmp.eq.s32.totalorder %s82, 0
      %p167 = por %p165, %p166
      %s169 = sadd.s32 %s168, 1
      %p172 = scmp.eq.s32.totalorder %s76, 2
      %p173 = scmp.ne.s32.totalorder %s168, %s170
      %p174 = scmp.eq.s32.totalorder %s76, 0
      %p175 = por %p173, %p174
      %p176 = scmp.ne.s32.totalorder %s168, %s170
      %p177 = scmp.eq.s32.totalorder %s81, 2
      %p178 = por %p176, %p177
      %p179 = scmp.ne.s32.totalorder %s170, %s171
      %p180 = scmp.eq.s32.totalorder %s81, 0
      %p181 = por %p179, %p180
      %p182 = scmp.ne.s32.totalorder %s170, %s171
      %p183 = scmp.eq.s32.totalorder %s82, 2
      %p184 = por %p182, %p183
      %p186 = scmp.ne.s32.totalorder %s171, %s185
      %p187 = scmp.eq.s32.totalorder %s82, 0
      %p188 = por %p186, %p187
      %s190 = sadd.s32 %s189, 1
      %p193 = scmp.eq.s32.totalorder %s76, 2
      %p194 = scmp.ne.s32.totalorder %s189, %s191
      %p195 = scmp.eq.s32.totalorder %s76, 0
      %p196 = por %p194, %p195
      %p197 = scmp.ne.s32.totalorder %s189, %s191
      %p198 = scmp.eq.s32.totalorder %s81, 2
      %p199 = por %p197, %p198
      %p200 = scmp.ne.s32.totalorder %s191, %s192
      %p201 = scmp.eq.s32.totalorder %s81, 0
      %p202 = por %p200, %p201
      %p203 = scmp.ne.s32.totalorder %s191, %s192
      %p204 = scmp.eq.s32.totalorder %s82, 2
      %p205 = por %p203, %p204
      %p207 = scmp.ne.s32.totalorder %s192, %s206
      %p208 = scmp.eq.s32.totalorder %s82, 0
      %p209 = por %p207, %p208
      %s211 = sadd.s32 %s210, 1
      %p214 = scmp.eq.s32.totalorder %s76, 2
      %p215 = scmp.ne.s32.totalorder %s210, %s212
      %p216 = scmp.eq.s32.totalorder %s76, 0
      %p217 = por %p215, %p216
      %p218 = scmp.ne.s32.totalorder %s210, %s212
      %p219 = scmp.eq.s32.totalorder %s81, 2
      %p220 = por %p218, %p219
      %p221 = scmp.ne.s32.totalorder %s212, %s213
      %p222 = scmp.eq.s32.totalorder %s81, 0
      %p223 = por %p221, %p222
      %p224 = scmp.ne.s32.totalorder %s212, %s213
      %p225 = scmp.eq.s32.totalorder %s82, 2
      %p226 = por %p224, %p225
      %p228 = scmp.ne.s32.totalorder %s213, %s227
      %p229 = scmp.eq.s32.totalorder %s82, 0
      %p230 = por %p228, %p229
      %s232 = sadd.s32 %s231, 1
      %p235 = scmp.eq.s32.totalorder %s76, 2
      %p236 = scmp.ne.s32.totalorder %s231, %s233
      %p237 = scmp.eq.s32.totalorder %s76, 0
      %p238 = por %p236, %p237
      %p239 = scmp.ne.s32.totalorder %s231, %s233
      %p240 = scmp.eq.s32.totalorder %s81, 2
      %p241 = por %p239, %p240
      %p242 = scmp.ne.s32.totalorder %s233, %s234
      %p243 = scmp.eq.s32.totalorder %s81, 0
      %p244 = por %p242, %p243
      %p245 = scmp.ne.s32.totalorder %s233, %s234
      %p246 = scmp.eq.s32.totalorder %s82, 2
      %p247 = por %p245, %p246
      %p249 = scmp.ne.s32.totalorder %s234, %s248
      %p250 = scmp.eq.s32.totalorder %s82, 0
      %p251 = por %p249, %p250
      %s253 = sadd.s32 %s252, 1
      %p256 = scmp.eq.s32.totalorder %s76, 2
      %p257 = scmp.ne.s32.totalorder %s252, %s254
      %p258 = scmp.eq.s32.totalorder %s76, 0
      %p259 = por %p257, %p258
      %p260 = scmp.ne.s32.totalorder %s252, %s254
      %p261 = scmp.eq.s32.totalorder %s81, 2
      %p262 = por %p260, %p261
      %p263 = scmp.ne.s32.totalorder %s254, %s255
      %p264 = scmp.eq.s32.totalorder %s81, 0
      %p265 = por %p263, %p264
      %p266 = scmp.ne.s32.totalorder %s254, %s255
      %p267 = scmp.eq.s32.totalorder %s82, 2
      %p268 = por %p266, %p267
      %p270 = scmp.ne.s32.totalorder %s255, %s269
      %p271 = scmp.eq.s32.totalorder %s82, 0
      %p272 = por %p270, %p271
      %s274 = sadd.s32 %s273, 1
      %p277 = scmp.eq.s32.totalorder %s76, 2
      %p278 = scmp.ne.s32.totalorder %s273, %s275
      %p279 = scmp.eq.s32.totalorder %s76, 0
      %p280 = por %p278, %p279
      %p281 = scmp.ne.s32.totalorder %s273, %s275
      %p282 = scmp.eq.s32.totalorder %s81, 2
      %p283 = por %p281, %p282
      %p284 = scmp.ne.s32.totalorder %s275, %s276
      %p285 = scmp.eq.s32.totalorder %s81, 0
      %p286 = por %p284, %p285
      %p287 = scmp.ne.s32.totalorder %s275, %s276
      %p288 = scmp.eq.s32.totalorder %s82, 2
      %p289 = por %p287, %p288
      %p291 = scmp.ne.s32.totalorder %s276, %s290
      %p292 = scmp.eq.s32.totalorder %s82, 0
      %p293 = por %p291, %p292
      %s295 = sadd.s32 %s294, 1
      %p298 = scmp.eq.s32.totalorder %s76, 2
      %p299 = scmp.ne.s32.totalorder %s294, %s296
      %p300 = scmp.eq.s32.totalorder %s76, 0
      %p301 = por %p299, %p300
      %p302 = scmp.ne.s32.totalorder %s294, %s296
      %p303 = scmp.eq.s32.totalorder %s81, 2
      %p304 = por %p302, %p303
      %p305 = scmp.ne.s32.totalorder %s296, %s297
      %p306 = scmp.eq.s32.totalorder %s81, 0
      %p307 = por %p305, %p306
      %p308 = scmp.ne.s32.totalorder %s296, %s297
      %p309 = scmp.eq.s32.totalorder %s82, 2
      %p310 = por %p308, %p309
      %p312 = scmp.ne.s32.totalorder %s297, %s311
      %p313 = scmp.eq.s32.totalorder %s82, 0
      %p314 = por %p312, %p313
      %s316 = sadd.s32 %s315, 1
      %p319 = scmp.eq.s32.totalorder %s76, 2
      %p320 = scmp.ne.s32.totalorder %s315, %s317
      %p321 = scmp.eq.s32.totalorder %s76, 0
      %p322 = por %p320, %p321
      %p323 = scmp.ne.s32.totalorder %s315, %s317
      %p324 = scmp.eq.s32.totalorder %s81, 2
      %p325 = por %p323, %p324
      %p326 = scmp.ne.s32.totalorder %s317, %s318
      %p327 = scmp.eq.s32.totalorder %s81, 0
      %p328 = por %p326, %p327
      %p329 = scmp.ne.s32.totalorder %s317, %s318
      %p330 = scmp.eq.s32.totalorder %s82, 2
      %p331 = por %p329, %p330
      %p333 = scmp.ne.s32.totalorder %s318, %s332
      %p334 = scmp.eq.s32.totalorder %s82, 0
      %p335 = por %p333, %p334
      %s337 = sadd.s32 %s336, 1
      %p340 = scmp.eq.s32.totalorder %s76, 2
      %p341 = scmp.ne.s32.totalorder %s336, %s338
      %p342 = scmp.eq.s32.totalorder %s76, 0
      %p343 = por %p341, %p342
      %p344 = scmp.ne.s32.totalorder %s336, %s338
      %p345 = scmp.eq.s32.totalorder %s81, 2
      %p346 = por %p344, %p345
      %p347 = scmp.ne.s32.totalorder %s338, %s339
      %p348 = scmp.eq.s32.totalorder %s81, 0
      %p349 = por %p347, %p348
      %p350 = scmp.ne.s32.totalorder %s338, %s339
      %p351 = scmp.eq.s32.totalorder %s82, 2
      %p352 = por %p350, %p351
      %p354 = scmp.ne.s32.totalorder %s339, %s353
      %p355 = scmp.eq.s32.totalorder %s82, 0
      %p356 = por %p354, %p355
      %s358 = sadd.s32 %s357, 1
      %p361 = scmp.eq.s32.totalorder %s76, 2
      %p362 = scmp.ne.s32.totalorder %s357, %s359
      %p363 = scmp.eq.s32.totalorder %s76, 0
      %p364 = por %p362, %p363
      %p365 = scmp.ne.s32.totalorder %s357, %s359
      %p366 = scmp.eq.s32.totalorder %s81, 2
      %p367 = por %p365, %p366
      %p368 = scmp.ne.s32.totalorder %s359, %s360
      %p369 = scmp.eq.s32.totalorder %s81, 0
      %p370 = por %p368, %p369
      %p371 = scmp.ne.s32.totalorder %s359, %s360
      %p372 = scmp.eq.s32.totalorder %s82, 2
      %p373 = por %p371, %p372
      %p375 = scmp.ne.s32.totalorder %s360, %s374
      %p376 = scmp.eq.s32.totalorder %s82, 0
      %p377 = por %p375, %p376
      %s379 = sadd.s32 %s378, 1
      %p382 = scmp.eq.s32.totalorder %s76, 2
      %p383 = scmp.ne.s32.totalorder %s378, %s380
      %p384 = scmp.eq.s32.totalorder %s76, 0
      %p385 = por %p383, %p384
      %p386 = scmp.ne.s32.totalorder %s378, %s380
      %p387 = scmp.eq.s32.totalorder %s81, 2
      %p388 = por %p386, %p387
      %p389 = scmp.ne.s32.totalorder %s380, %s381
      %p390 = scmp.eq.s32.totalorder %s81, 0
      %p391 = por %p389, %p390
      %p392 = scmp.ne.s32.totalorder %s380, %s381
      %p393 = scmp.eq.s32.totalorder %s82, 2
      %p394 = por %p392, %p393
      %p396 = scmp.ne.s32.totalorder %s381, %s395
      %p397 = scmp.eq.s32.totalorder %s82, 0
      %p398 = por %p396, %p397
      %s400 = sadd.s32 %s399, 1
      %p403 = scmp.eq.s32.totalorder %s76, 2
      %p404 = scmp.ne.s32.totalorder %s399, %s401
      %p405 = scmp.eq.s32.totalorder %s76, 0
      %p406 = por %p404, %p405
      %p407 = scmp.ne.s32.totalorder %s399, %s401
      %p408 = scmp.eq.s32.totalorder %s81, 2
      %p409 = por %p407, %p408
      %p410 = scmp.ne.s32.totalorder %s401, %s402
      %p411 = scmp.eq.s32.totalorder %s81, 0
      %p412 = por %p410, %p411
      %p413 = scmp.ne.s32.totalorder %s401, %s402
      %p414 = scmp.eq.s32.totalorder %s82, 2
      %p415 = por %p413, %p414
      %p417 = scmp.ne.s32.totalorder %s402, %s416
      %p418 = scmp.eq.s32.totalorder %s82, 0
      %p419 = por %p417, %p418
      %s421 = sadd.s32 %s420, 1
      %p424 = scmp.eq.s32.totalorder %s76, 2
      %p425 = scmp.ne.s32.totalorder %s420, %s422
      %p426 = scmp.eq.s32.totalorder %s76, 0
      %p427 = por %p425, %p426
      %p428 = scmp.ne.s32.totalorder %s420, %s422
      %p429 = scmp.eq.s32.totalorder %s81, 2
      %p430 = por %p428, %p429
      %p431 = scmp.ne.s32.totalorder %s422, %s423
      %p432 = scmp.eq.s32.totalorder %s81, 0
      %p433 = por %p431, %p432
      %p434 = scmp.ne.s32.totalorder %s422, %s423
      %p435 = scmp.eq.s32.totalorder %s82, 2
      %p436 = por %p434, %p435
      %p438 = scmp.ne.s32.totalorder %s423, %s437
      %p439 = scmp.eq.s32.totalorder %s82, 0
      %p440 = por %p438, %p439
      %s442 = sadd.s32 %s441, 1
      %p445 = scmp.eq.s32.totalorder %s76, 2
      %p446 = scmp.ne.s32.totalorder %s441, %s443
      %p447 = scmp.eq.s32.totalorder %s76, 0
      %p448 = por %p446, %p447
      %p449 = scmp.ne.s32.totalorder %s441, %s443
      %p450 = scmp.eq.s32.totalorder %s81, 2
      %p451 = por %p449, %p450
      %p452 = scmp.ne.s32.totalorder %s443, %s444
      %p453 = scmp.eq.s32.totalorder %s81, 0
      %p454 = por %p452, %p453
      %p455 = scmp.ne.s32.totalorder %s443, %s444
      %p456 = scmp.eq.s32.totalorder %s82, 2
      %p457 = por %p455, %p456
      %p459 = scmp.ne.s32.totalorder %s444, %s458
      %p460 = scmp.eq.s32.totalorder %s82, 0
      %p461 = por %p459, %p460
      %s462 = ssub.s32 %s76, %s83
      %p463 = scmp.eq.s32.totalorder %s462, 0
      %s465 = sadd.s32 %s464, 1
      %s466 = scalar_select %p463, %s464, %s465
      %p469 = pneg %p463
      %p470 = scmp.eq.s32.totalorder %s76, 2
      %p471 = por %p469, %p470
      %p472 = scmp.ne.s32.totalorder %s464, %s467
      %p473 = scmp.eq.s32.totalorder %s76, 0
      %p474 = por %p472, %p473
      %p475 = scmp.ne.s32.totalorder %s464, %s467
      %p476 = scmp.eq.s32.totalorder %s81, 2
      %p477 = por %p475, %p476
      %p478 = scmp.ne.s32.totalorder %s467, %s468
      %p479 = scmp.eq.s32.totalorder %s81, 0
      %p480 = por %p478, %p479
      %p481 = scmp.ne.s32.totalorder %s467, %s468
      %p482 = scmp.eq.s32.totalorder %s82, 2
      %p483 = por %p481, %p482
      %p485 = scmp.ne.s32.totalorder %s468, %s484
      %p486 = scmp.eq.s32.totalorder %s82, 0
      %p487 = por %p485, %p486
      %s488 = ssub.s32 %s76, %s83
      %p489 = scmp.eq.s32.totalorder %s488, 0
      %s491 = sadd.s32 %s490, 1
      %s492 = scalar_select %p489, %s490, %s491
      %p495 = pneg %p489
      %p496 = scmp.eq.s32.totalorder %s76, 2
      %p497 = por %p495, %p496
      %p498 = scmp.ne.s32.totalorder %s490, %s493
      %p499 = scmp.eq.s32.totalorder %s76, 0
      %p500 = por %p498, %p499
      %p501 = scmp.ne.s32.totalorder %s490, %s493
      %p502 = scmp.eq.s32.totalorder %s81, 2
      %p503 = por %p501, %p502
      %p504 = scmp.ne.s32.totalorder %s493, %s494
      %p505 = scmp.eq.s32.totalorder %s81, 0
      %p506 = por %p504, %p505
      %p507 = scmp.ne.s32.totalorder %s493, %s494
      %p508 = scmp.eq.s32.totalorder %s82, 2
      %p509 = por %p507, %p508
      %p511 = scmp.ne.s32.totalorder %s494, %s510
      %p512 = scmp.eq.s32.totalorder %s82, 0
      %p513 = por %p511, %p512
      %s514 = ssub.s32 %s76, %s83
      %p515 = scmp.eq.s32.totalorder %s514, 0
      %s517 = sadd.s32 %s516, 1
      %s518 = scalar_select %p515, %s516, %s517
      %p521 = pneg %p515
      %p522 = scmp.eq.s32.totalorder %s76, 2
      %p523 = por %p521, %p522
      %p524 = scmp.ne.s32.totalorder %s516, %s519
      %p525 = scmp.eq.s32.totalorder %s76, 0
      %p526 = por %p524, %p525
      %p527 = scmp.ne.s32.totalorder %s516, %s519
      %p528 = scmp.eq.s32.totalorder %s81, 2
      %p529 = por %p527, %p528
      %p530 = scmp.ne.s32.totalorder %s519, %s520
      %p531 = scmp.eq.s32.totalorder %s81, 0
      %p532 = por %p530, %p531
      %p533 = scmp.ne.s32.totalorder %s519, %s520
      %p534 = scmp.eq.s32.totalorder %s82, 2
      %p535 = por %p533, %p534
      %p537 = scmp.ne.s32.totalorder %s520, %s536
      %p538 = scmp.eq.s32.totalorder %s82, 0
      %p539 = por %p537, %p538
      %s540 = ssub.s32 %s76, %s83
      %p541 = scmp.eq.s32.totalorder %s540, 0
      %s543 = sadd.s32 %s542, 1
      %s544 = scalar_select %p541, %s542, %s543
      %p547 = pneg %p541
      %p548 = scmp.eq.s32.totalorder %s76, 2
      %p549 = por %p547, %p548
      %p550 = scmp.ne.s32.totalorder %s542, %s545
      %p551 = scmp.eq.s32.totalorder %s76, 0
      %p552 = por %p550, %p551
      %p553 = scmp.ne.s32.totalorder %s542, %s545
      %p554 = scmp.eq.s32.totalorder %s81, 2
      %p555 = por %p553, %p554
      %p556 = scmp.ne.s32.totalorder %s545, %s546
      %p557 = scmp.eq.s32.totalorder %s81, 0
      %p558 = por %p556, %p557
      %p559 = scmp.ne.s32.totalorder %s545, %s546
      %p560 = scmp.eq.s32.totalorder %s82, 2
      %p561 = por %p559, %p560
      %p563 = scmp.ne.s32.totalorder %s546, %s562
      %p564 = scmp.eq.s32.totalorder %s82, 0
      %p565 = por %p563, %p564
      %s566 = ssub.s32 %s76, %s83
      %p567 = scmp.eq.s32.totalorder %s566, 0
      %s569 = sadd.s32 %s568, 1
      %s570 = scalar_select %p567, %s568, %s569
      %p573 = pneg %p567
      %p574 = scmp.eq.s32.totalorder %s76, 2
      %p575 = por %p573, %p574
      %p576 = scmp.ne.s32.totalorder %s568, %s571
      %p577 = scmp.eq.s32.totalorder %s76, 0
      %p578 = por %p576, %p577
      %p579 = scmp.ne.s32.totalorder %s568, %s571
      %p580 = scmp.eq.s32.totalorder %s81, 2
      %p581 = por %p579, %p580
      %p582 = scmp.ne.s32.totalorder %s571, %s572
      %p583 = scmp.eq.s32.totalorder %s81, 0
      %p584 = por %p582, %p583
      %p585 = scmp.ne.s32.totalorder %s571, %s572
      %p586 = scmp.eq.s32.totalorder %s82, 2
      %p587 = por %p585, %p586
      %p589 = scmp.ne.s32.totalorder %s572, %s588
      %p590 = scmp.eq.s32.totalorder %s82, 0
      %p591 = por %p589, %p590
      %s592 = ssub.s32 %s76, %s83
      %p593 = scmp.eq.s32.totalorder %s592, 0
      %s595 = sadd.s32 %s594, 1
      %s596 = scalar_select %p593, %s594, %s595
      %p599 = pneg %p593
      %p600 = scmp.eq.s32.totalorder %s76, 2
      %p601 = por %p599, %p600
      %p602 = scmp.ne.s32.totalorder %s594, %s597
      %p603 = scmp.eq.s32.totalorder %s76, 0
      %p604 = por %p602, %p603
      %p605 = scmp.ne.s32.totalorder %s594, %s597
      %p606 = scmp.eq.s32.totalorder %s81, 2
      %p607 = por %p605, %p606
      %p608 = scmp.ne.s32.totalorder %s597, %s598
      %p609 = scmp.eq.s32.totalorder %s81, 0
      %p610 = por %p608, %p609
      %p611 = scmp.ne.s32.totalorder %s597, %s598
      %p612 = scmp.eq.s32.totalorder %s82, 2
      %p613 = por %p611, %p612
      %p615 = scmp.ne.s32.totalorder %s598, %s614
      %p616 = scmp.eq.s32.totalorder %s82, 0
      %p617 = por %p615, %p616
      %s618 = ssub.s32 %s76, %s83
      %p619 = scmp.eq.s32.totalorder %s618, 0
      %s621 = sadd.s32 %s620, 1
      %s622 = scalar_select %p619, %s620, %s621
      %p625 = pneg %p619
      %p626 = scmp.eq.s32.totalorder %s76, 2
      %p627 = por %p625, %p626
      %p628 = scmp.ne.s32.totalorder %s620, %s623
      %p629 = scmp.eq.s32.totalorder %s76, 0
      %p630 = por %p628, %p629
      %p631 = scmp.ne.s32.totalorder %s620, %s623
      %p632 = scmp.eq.s32.totalorder %s81, 2
      %p633 = por %p631, %p632
      %p634 = scmp.ne.s32.totalorder %s623, %s624
      %p635 = scmp.eq.s32.totalorder %s81, 0
      %p636 = por %p634, %p635
      %p637 = scmp.ne.s32.totalorder %s623, %s624
      %p638 = scmp.eq.s32.totalorder %s82, 2
      %p639 = por %p637, %p638
      %p641 = scmp.ne.s32.totalorder %s624, %s640
      %p642 = scmp.eq.s32.totalorder %s82, 0
      %p643 = por %p641, %p642
      %s644 = ssub.s32 %s76, %s83
      %p645 = scmp.eq.s32.totalorder %s644, 0
      %s647 = sadd.s32 %s646, 1
      %s648 = scalar_select %p645, %s646, %s647
      %p651 = pneg %p645
      %p652 = scmp.eq.s32.totalorder %s76, 2
      %p653 = por %p651, %p652
      %p654 = scmp.ne.s32.totalorder %s646, %s649
      %p655 = scmp.eq.s32.totalorder %s76, 0
      %p656 = por %p654, %p655
      %p657 = scmp.ne.s32.totalorder %s646, %s649
      %p658 = scmp.eq.s32.totalorder %s81, 2
      %p659 = por %p657, %p658
      %p660 = scmp.ne.s32.totalorder %s649, %s650
      %p661 = scmp.eq.s32.totalorder %s81, 0
      %p662 = por %p660, %p661
      %p663 = scmp.ne.s32.totalorder %s649, %s650
      %p664 = scmp.eq.s32.totalorder %s82, 2
      %p665 = por %p663, %p664
      %p667 = scmp.ne.s32.totalorder %s650, %s666
      %p668 = scmp.eq.s32.totalorder %s82, 0
      %p669 = por %p667, %p668
      %s670 = ssub.s32 %s76, %s83
      %p671 = scmp.eq.s32.totalorder %s670, 0
      %s673 = sadd.s32 %s672, 1
      %s674 = scalar_select %p671, %s672, %s673
      %p677 = pneg %p671
      %p678 = scmp.eq.s32.totalorder %s76, 2
      %p679 = por %p677, %p678
      %p680 = scmp.ne.s32.totalorder %s672, %s675
      %p681 = scmp.eq.s32.totalorder %s76, 0
      %p682 = por %p680, %p681
      %p683 = scmp.ne.s32.totalorder %s672, %s675
      %p684 = scmp.eq.s32.totalorder %s81, 2
      %p685 = por %p683, %p684
      %p686 = scmp.ne.s32.totalorder %s675, %s676
      %p687 = scmp.eq.s32.totalorder %s81, 0
      %p688 = por %p686, %p687
      %p689 = scmp.ne.s32.totalorder %s675, %s676
      %p690 = scmp.eq.s32.totalorder %s82, 2
      %p691 = por %p689, %p690
      %p693 = scmp.ne.s32.totalorder %s676, %s692
      %p694 = scmp.eq.s32.totalorder %s82, 0
      %p695 = por %p693, %p694
      %s696 = ssub.s32 %s76, %s83
      %p697 = scmp.eq.s32.totalorder %s696, 0
      %s699 = sadd.s32 %s698, 1
      %s700 = scalar_select %p697, %s698, %s699
      %p703 = pneg %p697
      %p704 = scmp.eq.s32.totalorder %s76, 2
      %p705 = por %p703, %p704
      %p706 = scmp.ne.s32.totalorder %s698, %s701
      %p707 = scmp.eq.s32.totalorder %s76, 0
      %p708 = por %p706, %p707
      %p709 = scmp.ne.s32.totalorder %s698, %s701
      %p710 = scmp.eq.s32.totalorder %s81, 2
      %p711 = por %p709, %p710
      %p712 = scmp.ne.s32.totalorder %s701, %s702
      %p713 = scmp.eq.s32.totalorder %s81, 0
      %p714 = por %p712, %p713
      %p715 = scmp.ne.s32.totalorder %s701, %s702
      %p716 = scmp.eq.s32.totalorder %s82, 2
      %p717 = por %p715, %p716
      %p719 = scmp.ne.s32.totalorder %s702, %s718
      %p720 = scmp.eq.s32.totalorder %s82, 0
      %p721 = por %p719, %p720
      %s722 = ssub.s32 %s76, %s83
      %p723 = scmp.eq.s32.totalorder %s722, 0
      %s725 = sadd.s32 %s724, 1
      %s726 = scalar_select %p723, %s724, %s725
      %p729 = pneg %p723
      %p730 = scmp.eq.s32.totalorder %s76, 2
      %p731 = por %p729, %p730
      %p732 = scmp.ne.s32.totalorder %s724, %s727
      %p733 = scmp.eq.s32.totalorder %s76, 0
      %p734 = por %p732, %p733
      %p735 = scmp.ne.s32.totalorder %s724, %s727
      %p736 = scmp.eq.s32.totalorder %s81, 2
      %p737 = por %p735, %p736
      %p738 = scmp.ne.s32.totalorder %s727, %s728
      %p739 = scmp.eq.s32.totalorder %s81, 0
      %p740 = por %p738, %p739
      %p741 = scmp.ne.s32.totalorder %s727, %s728
      %p742 = scmp.eq.s32.totalorder %s82, 2
      %p743 = por %p741, %p742
      %p745 = scmp.ne.s32.totalorder %s728, %s744
      %p746 = scmp.eq.s32.totalorder %s82, 0
      %p747 = por %p745, %p746
      %s748 = ssub.s32 %s76, %s83
      %p749 = scmp.eq.s32.totalorder %s748, 0
      %s751 = sadd.s32 %s750, 1
      %s752 = scalar_select %p749, %s750, %s751
      %p755 = pneg %p749
      %p756 = scmp.eq.s32.totalorder %s76, 2
      %p757 = por %p755, %p756
      %p758 = scmp.ne.s32.totalorder %s750, %s753
      %p759 = scmp.eq.s32.totalorder %s76, 0
      %p760 = por %p758, %p759
      %p761 = scmp.ne.s32.totalorder %s750, %s753
      %p762 = scmp.eq.s32.totalorder %s81, 2
      %p763 = por %p761, %p762
      %p764 = scmp.ne.s32.totalorder %s753, %s754
      %p765 = scmp.eq.s32.totalorder %s81, 0
      %p766 = por %p764, %p765
      %p767 = scmp.ne.s32.totalorder %s753, %s754
      %p768 = scmp.eq.s32.totalorder %s82, 2
      %p769 = por %p767, %p768
      %p771 = scmp.ne.s32.totalorder %s754, %s770
      %p772 = scmp.eq.s32.totalorder %s82, 0
      %p773 = por %p771, %p772
      %s775 = sadd.s32 %s774, 1
      %p778 = scmp.eq.s32.totalorder %s76, 2
      %p779 = scmp.ne.s32.totalorder %s774, %s776
      %p780 = scmp.eq.s32.totalorder %s76, 0
      %p781 = por %p779, %p780
      %p782 = scmp.ne.s32.totalorder %s774, %s776
      %p783 = scmp.eq.s32.totalorder %s81, 2
      %p784 = por %p782, %p783
      %p785 = scmp.ne.s32.totalorder %s776, %s777
      %p786 = scmp.eq.s32.totalorder %s81, 0
      %p787 = por %p785, %p786
      %p788 = scmp.ne.s32.totalorder %s776, %s777
      %p789 = scmp.eq.s32.totalorder %s82, 2
      %p790 = por %p788, %p789
      %p792 = scmp.ne.s32.totalorder %s777, %s791
      %p793 = scmp.eq.s32.totalorder %s82, 0
      %p794 = por %p792, %p793
      %p795 = scmp.le.s32.totalorder 1, %s76
      %p796 = scmp.lt.s32.totalorder %s76, 4
      %p797 = pnand %p795, %p796
      %p798 = pneg %p797
      // Predicated region
      $region9: #{tpu_custom_call.1} parent=5 // pred_check
        _
      $region10: #{tpu_custom_call.1} parent=5 // pred_check_branch
        %800 = sbr.rel (%p797) target = $region12
      $region11: #{tpu_custom_call.1} parent=5 // pred_region
        %s801 = ssub.s32 %s76, 1
        // Predicated region
        $region13: #{tpu_custom_call.1} parent=11 // pred_check
          %p802 = pneg %p97
        $region14: #{tpu_custom_call.1} parent=11 // pred_check_branch
          %804 = sbr.rel (%p802) target = $region16
        $region15: #{tpu_custom_call.1} parent=11 // pred_region
          _
        $region16: #{tpu_custom_call.1} parent=11 // pred_fallthru
          _
        // Predicated region
        $region17: #{tpu_custom_call.1} parent=11 // pred_check
          %p805 = pneg %p118
        $region18: #{tpu_custom_call.1} parent=11 // pred_check_branch
          %807 = sbr.rel (%p805) target = $region20
        $region19: #{tpu_custom_call.1} parent=11 // pred_region
          %s809 = ssub.s32 16, 16
          %810 = vsyncadd [#allocation4], %s809
          %s812 = sshll.u32 [#allocation3], 4
          %s813 = int_to_ptr.vmem [resolvable:$true] %s812
          %815 = dma.hbm_to_vmem [thread:$0]  %s3, 16, %s813, [#allocation4]
        $region20: #{tpu_custom_call.1} parent=11 // pred_fallthru
          _
        // Predicated region
        $region21: #{tpu_custom_call.1} parent=11 // pred_check
          %p816 = pneg %p139
        $region22: #{tpu_custom_call.1} parent=11 // pred_check_branch
          %818 = sbr.rel (%p816) target = $region24
        $region23: #{tpu_custom_call.1} parent=11 // pred_region
          %s820 = ssub.s32 256, 256
          %821 = vsyncadd [#allocation7], %s820
          %s822 = sshll.u32 [#allocation6], 4
          %s823 = int_to_ptr.vmem [resolvable:$true] %s822
          %828 = dma.hbm_to_vmem [thread:$0]  %s5, 256, %s823, [#allocation7], 128, 128, 8
        $region24: #{tpu_custom_call.1} parent=11 // pred_fallthru
          _
        // Predicated region
        $region25: #{tpu_custom_call.1} parent=11 // pred_check
          %p829 = pneg %p160
        $region26: #{tpu_custom_call.1} parent=11 // pred_check_branch
          %831 = sbr.rel (%p829) target = $region28
        $region27: #{tpu_custom_call.1} parent=11 // pred_region
          %s833 = ssub.s32 32, 32
          %834 = vsyncadd [#allocation7], %s833
          %s836 = sshll.u32 [#allocation8], 4
          %s837 = int_to_ptr.vmem [resolvable:$true] %s836
          %839 = dma.hbm_to_vmem [thread:$0]  %s7, 32, %s837, [#allocation7]
        $region28: #{tpu_custom_call.1} parent=11 // pred_fallthru
          _
        // Predicated region
        $region29: #{tpu_custom_call.1} parent=11 // pred_check
          %p840 = pneg %p181
        $region30: #{tpu_custom_call.1} parent=11 // pred_check_branch
          %842 = sbr.rel (%p840) target = $region32
        $region31: #{tpu_custom_call.1} parent=11 // pred_region
          _
        $region32: #{tpu_custom_call.1} parent=11 // pred_fallthru
          _
        // Predicated region
        $region33: #{tpu_custom_call.1} parent=11 // pred_check
          %p843 = pneg %p202
        $region34: #{tpu_custom_call.1} parent=11 // pred_check_branch
          %845 = sbr.rel (%p843) target = $region36
        $region35: #{tpu_custom_call.1} parent=11 // pred_region
          %s847 = ssub.s32 16, 16
          %848 = vsyncadd [#allocation10], %s847
          %s850 = sshll.u32 [#allocation9], 4
          %s851 = int_to_ptr.vmem [resolvable:$true] %s850
          %853 = dma.hbm_to_vmem [thread:$0]  %s11, 16, %s851, [#allocation10]
        $region36: #{tpu_custom_call.1} parent=11 // pred_fallthru
          _
        // Predicated region
        $region37: #{tpu_custom_call.1} parent=11 // pred_check
          %p854 = pneg %p223
        $region38: #{tpu_custom_call.1} parent=11 // pred_check_branch
          %856 = sbr.rel (%p854) target = $region40
        $region39: #{tpu_custom_call.1} parent=11 // pred_region
          %s858 = ssub.s32 16, 16
          %859 = vsyncadd [#allocation10], %s858
          %s861 = sshll.u32 [#allocation11], 4
          %s862 = int_to_ptr.vmem [resolvable:$true] %s861
          %864 = dma.hbm_to_vmem [thread:$0]  %s13, 16, %s862, [#allocation10]
        $region40: #{tpu_custom_call.1} parent=11 // pred_fallthru
          _
        // Predicated region
        $region41: #{tpu_custom_call.1} parent=11 // pred_check
          %p865 = pneg %p244
        $region42: #{tpu_custom_call.1} parent=11 // pred_check_branch
          %867 = sbr.rel (%p865) target = $region44
        $region43: #{tpu_custom_call.1} parent=11 // pred_region
          %s869 = ssub.s32 16, 16
          %870 = vsyncadd [#allocation13], %s869
          %s872 = sshll.u32 [#allocation12], 4
          %s873 = int_to_ptr.vmem [resolvable:$true] %s872
          %875 = dma.hbm_to_vmem [thread:$0]  %s15, 16, %s873, [#allocation13]
        $region44: #{tpu_custom_call.1} parent=11 // pred_fallthru
          _
        // Predicated region
        $region45: #{tpu_custom_call.1} parent=11 // pred_check
          %p876 = pneg %p265
        $region46: #{tpu_custom_call.1} parent=11 // pred_check_branch
          %878 = sbr.rel (%p876) target = $region48
        $region47: #{tpu_custom_call.1} parent=11 // pred_region
          _
        $region48: #{tpu_custom_call.1} parent=11 // pred_fallthru
          _
        // Predicated region
        $region49: #{tpu_custom_call.1} parent=11 // pred_check
          %p879 = pneg %p286
        $region50: #{tpu_custom_call.1} parent=11 // pred_check_branch
          %881 = sbr.rel (%p879) target = $region52
        $region51: #{tpu_custom_call.1} parent=11 // pred_region
          %s883 = ssub.s32 32, 32
          %884 = vsyncadd [#allocation13], %s883
          %s886 = sshll.u32 [#allocation14], 4
          %s887 = int_to_ptr.vmem [resolvable:$true] %s886
          %889 = dma.hbm_to_vmem [thread:$0]  %s19, 32, %s887, [#allocation13]
        $region52: #{tpu_custom_call.1} parent=11 // pred_fallthru
          _
        // Predicated region
        $region53: #{tpu_custom_call.1} parent=11 // pred_check
          %p890 = pneg %p307
        $region54: #{tpu_custom_call.1} parent=11 // pred_check_branch
          %892 = sbr.rel (%p890) target = $region56
        $region55: #{tpu_custom_call.1} parent=11 // pred_region
          _
        $region56: #{tpu_custom_call.1} parent=11 // pred_fallthru
          _
        // Predicated region
        $region57: #{tpu_custom_call.1} parent=11 // pred_check
          %p893 = pneg %p328
        $region58: #{tpu_custom_call.1} parent=11 // pred_check_branch
          %895 = sbr.rel (%p893) target = $region60
        $region59: #{tpu_custom_call.1} parent=11 // pred_region
          %s897 = ssub.s32 16, 16
          %898 = vsyncadd [#allocation16], %s897
          %s900 = sshll.u32 [#allocation15], 4
          %s901 = int_to_ptr.vmem [resolvable:$true] %s900
          %903 = dma.hbm_to_vmem [thread:$0]  %s23, 16, %s901, [#allocation16]
        $region60: #{tpu_custom_call.1} parent=11 // pred_fallthru
          _
        // Predicated region
        $region61: #{tpu_custom_call.1} parent=11 // pred_check
          %p904 = pneg %p349
        $region62: #{tpu_custom_call.1} parent=11 // pred_check_branch
          %906 = sbr.rel (%p904) target = $region64
        $region63: #{tpu_custom_call.1} parent=11 // pred_region
          %s908 = ssub.s32 16, 16
          %909 = vsyncadd [#allocation16], %s908
          %s911 = sshll.u32 [#allocation17], 4
          %s912 = int_to_ptr.vmem [resolvable:$true] %s911
          %914 = dma.hbm_to_vmem [thread:$0]  %s25, 16, %s912, [#allocation16]
        $region64: #{tpu_custom_call.1} parent=11 // pred_fallthru
          _
        // Predicated region
        $region65: #{tpu_custom_call.1} parent=11 // pred_check
          %p915 = pneg %p370
        $region66: #{tpu_custom_call.1} parent=11 // pred_check_branch
          %917 = sbr.rel (%p915) target = $region68
        $region67: #{tpu_custom_call.1} parent=11 // pred_region
          %s919 = ssub.s32 16, 16
          %920 = vsyncadd [#allocation19], %s919
          %s922 = sshll.u32 [#allocation18], 4
          %s923 = int_to_ptr.vmem [resolvable:$true] %s922
          %925 = dma.hbm_to_vmem [thread:$0]  %s27, 16, %s923, [#allocation19]
        $region68: #{tpu_custom_call.1} parent=11 // pred_fallthru
          _
        // Predicated region
        $region69: #{tpu_custom_call.1} parent=11 // pred_check
          %p926 = pneg %p391
        $region70: #{tpu_custom_call.1} parent=11 // pred_check_branch
          %928 = sbr.rel (%p926) target = $region72
        $region71: #{tpu_custom_call.1} parent=11 // pred_region
          %s930 = ssub.s32 16, 16
          %931 = vsyncadd [#allocation19], %s930
          %s933 = sshll.u32 [#allocation20], 4
          %s934 = int_to_ptr.vmem [resolvable:$true] %s933
          %936 = dma.hbm_to_vmem [thread:$0]  %s29, 16, %s934, [#allocation19]
        $region72: #{tpu_custom_call.1} parent=11 // pred_fallthru
          _
        // Predicated region
        $region73: #{tpu_custom_call.1} parent=11 // pred_check
          %p937 = pneg %p412
        $region74: #{tpu_custom_call.1} parent=11 // pred_check_branch
          %939 = sbr.rel (%p937) target = $region76
        $region75: #{tpu_custom_call.1} parent=11 // pred_region
          %s941 = ssub.s32 32, 32
          %942 = vsyncadd [#allocation22], %s941
          %s944 = sshll.u32 [#allocation21], 4
          %s945 = int_to_ptr.vmem [resolvable:$true] %s944
          %947 = dma.hbm_to_vmem [thread:$0]  %s31, 32, %s945, [#allocation22]
        $region76: #{tpu_custom_call.1} parent=11 // pred_fallthru
          _
        // Predicated region
        $region77: #{tpu_custom_call.1} parent=11 // pred_check
          %p948 = pneg %p433
        $region78: #{tpu_custom_call.1} parent=11 // pred_check_branch
          %950 = sbr.rel (%p948) target = $region80
        $region79: #{tpu_custom_call.1} parent=11 // pred_region
          %s952 = ssub.s32 16, 16
          %953 = vsyncadd [#allocation22], %s952
          %s955 = sshll.u32 [#allocation23], 4
          %s956 = int_to_ptr.vmem [resolvable:$true] %s955
          %958 = dma.hbm_to_vmem [thread:$0]  %s33, 16, %s956, [#allocation22]
        $region80: #{tpu_custom_call.1} parent=11 // pred_fallthru
          _
        // Predicated region
        $region81: #{tpu_custom_call.1} parent=11 // pred_check
          %p959 = pneg %p454
        $region82: #{tpu_custom_call.1} parent=11 // pred_check_branch
          %961 = sbr.rel (%p959) target = $region84
        $region83: #{tpu_custom_call.1} parent=11 // pred_region
          %s963 = ssub.s32 16, 16
          %964 = vsyncadd [#allocation25], %s963
          %s966 = sshll.u32 [#allocation24], 4
          %s967 = int_to_ptr.vmem [resolvable:$true] %s966
          %969 = dma.hbm_to_vmem [thread:$0]  %s35, 16, %s967, [#allocation25]
        $region84: #{tpu_custom_call.1} parent=11 // pred_fallthru
          _
      $region12: #{tpu_custom_call.1} parent=5 // pred_fallthru
        _
      %p970 = scmp.lt.s32.totalorder %s76, 3
      // Predicated region
      $region85: #{tpu_custom_call.1} parent=5 // pred_check
        %p971 = pneg %p970
      $region86: #{tpu_custom_call.1} parent=5 // pred_check_branch
        %973 = sbr.rel (%p971) target = $region88
      $region87: #{tpu_custom_call.1} parent=5 // pred_region
        // Predicated region
        $region89: #{tpu_custom_call.1} parent=87 // pred_check
          %p974 = pneg %p474
        $region90: #{tpu_custom_call.1} parent=87 // pred_check_branch
          %976 = sbr.rel (%p974) target = $region92
        $region91: #{tpu_custom_call.1} parent=87 // pred_region
          %s977 = sand.u32 %s76, 1
          %s978 = scalar_lea.sflag [#allocation4], %s977
          %s979 = sand.u32 %s464, 1
          %s980 = smul.addr %s979, 192
          %s981 = scalar_lea.vmem [#allocation26], %s980
          %s983 = ssub.s32 3072, 3072
          %984 = vsyncadd %s978, %s983
          %s985 = smul.addr %s76, 48
          %s986 = smul.addr %s985, 64
          %s987 = scalar_lea.hbm %s37, %s986
          %s988 = sshll.u32 %s981, 4
          %s989 = int_to_ptr.vmem [resolvable:$true] %s988
          %994 = dma.hbm_to_vmem [thread:$0]  %s987, 3072, %s989, %s978, 192, 192, 12
        $region92: #{tpu_custom_call.1} parent=87 // pred_fallthru
          _
        // Predicated region
        $region93: #{tpu_custom_call.1} parent=87 // pred_check
          %p995 = pneg %p500
        $region94: #{tpu_custom_call.1} parent=87 // pred_check_branch
          %997 = sbr.rel (%p995) target = $region96
        $region95: #{tpu_custom_call.1} parent=87 // pred_region
          %s998 = sand.u32 %s76, 1
          %s999 = scalar_lea.sflag [#allocation4], %s998
          %s1000 = sand.u32 %s490, 1
          %s1001 = smul.addr %s1000, 3
          %s1002 = scalar_lea.vmem [#allocation27], %s1001
          %s1004 = ssub.s32 48, 48
          %1005 = vsyncadd %s999, %s1004
          %s1006 = smul.addr %s76, 3
          %s1007 = smul.addr %s1006, 16
          %s1008 = scalar_lea.hbm %s39, %s1007
          %s1010 = sshll.u32 %s1002, 4
          %s1011 = int_to_ptr.vmem [resolvable:$true] %s1010
          %1013 = dma.hbm_to_vmem [thread:$0]  %s1008, 48, %s1011, %s999
        $region96: #{tpu_custom_call.1} parent=87 // pred_fallthru
          _
        // Predicated region
        $region97: #{tpu_custom_call.1} parent=87 // pred_check
          %p1014 = pneg %p526
        $region98: #{tpu_custom_call.1} parent=87 // pred_check_branch
          %1016 = sbr.rel (%p1014) target = $region100
        $region99: #{tpu_custom_call.1} parent=87 // pred_region
          %s1017 = sand.u32 %s76, 1
          %s1018 = scalar_lea.sflag [#allocation4], %s1017
          %s1019 = sand.u32 %s516, 1
          %s1020 = smul.addr %s1019, 64
          %s1021 = scalar_lea.vmem [#allocation28], %s1020
          %s1023 = ssub.s32 1024, 1024
          %1024 = vsyncadd %s1018, %s1023
          %s1025 = smul.addr %s76, 16
          %s1026 = smul.addr %s1025, 64
          %s1027 = scalar_lea.hbm %s41, %s1026
          %s1028 = sshll.u32 %s1021, 4
          %s1029 = int_to_ptr.vmem [resolvable:$true] %s1028
          %1034 = dma.hbm_to_vmem [thread:$0]  %s1027, 1024, %s1029, %s1018, 64, 64, 4
        $region100: #{tpu_custom_call.1} parent=87 // pred_fallthru
          _
        // Predicated region
        $region101: #{tpu_custom_call.1} parent=87 // pred_check
          %p1035 = pneg %p552
        $region102: #{tpu_custom_call.1} parent=87 // pred_check_branch
          %1037 = sbr.rel (%p1035) target = $region104
        $region103: #{tpu_custom_call.1} parent=87 // pred_region
          %p1038 = scmp.lt.s32.totalorder %s76, 2
          %s1039 = scalar_select %p1038, %s76, 2
          %s1040 = scalar_lea.vmem %s43, %s1039
        $region104: #{tpu_custom_call.1} parent=87 // pred_fallthru
          _
        // Predicated region
        $region105: #{tpu_custom_call.1} parent=87 // pred_check
          %p1041 = pneg %p578
        $region106: #{tpu_custom_call.1} parent=87 // pred_check_branch
          %1043 = sbr.rel (%p1041) target = $region108
        $region107: #{tpu_custom_call.1} parent=87 // pred_region
          %p1044 = scmp.lt.s32.totalorder %s76, 2
          %s1045 = scalar_select %p1044, %s76, 2
          %s1046 = scalar_lea.vmem %s45, %s1045
        $region108: #{tpu_custom_call.1} parent=87 // pred_fallthru
          _
        // Predicated region
        $region109: #{tpu_custom_call.1} parent=87 // pred_check
          %p1047 = pneg %p604
        $region110: #{tpu_custom_call.1} parent=87 // pred_check_branch
          %1049 = sbr.rel (%p1047) target = $region112
        $region111: #{tpu_custom_call.1} parent=87 // pred_region
          %p1050 = scmp.lt.s32.totalorder %s76, 2
          %s1051 = scalar_select %p1050, %s76, 2
          %s1052 = scalar_lea.vmem %s47, %s1051
        $region112: #{tpu_custom_call.1} parent=87 // pred_fallthru
          _
        // Predicated region
        $region113: #{tpu_custom_call.1} parent=87 // pred_check
          %p1053 = pneg %p630
        $region114: #{tpu_custom_call.1} parent=87 // pred_check_branch
          %1055 = sbr.rel (%p1053) target = $region116
        $region115: #{tpu_custom_call.1} parent=87 // pred_region
          %p1056 = scmp.lt.s32.totalorder %s76, 2
          %s1057 = scalar_select %p1056, %s76, 2
          %s1058 = scalar_lea.vmem %s49, %s1057
        $region116: #{tpu_custom_call.1} parent=87 // pred_fallthru
          _
        // Predicated region
        $region117: #{tpu_custom_call.1} parent=87 // pred_check
          %p1059 = pneg %p656
        $region118: #{tpu_custom_call.1} parent=87 // pred_check_branch
          %1061 = sbr.rel (%p1059) target = $region120
        $region119: #{tpu_custom_call.1} parent=87 // pred_region
          %p1062 = scmp.lt.s32.totalorder %s76, 2
          %s1063 = scalar_select %p1062, %s76, 2
          %s1064 = scalar_lea.vmem %s51, %s1063
        $region120: #{tpu_custom_call.1} parent=87 // pred_fallthru
          _
        // Predicated region
        $region121: #{tpu_custom_call.1} parent=87 // pred_check
          %p1065 = pneg %p682
        $region122: #{tpu_custom_call.1} parent=87 // pred_check_branch
          %1067 = sbr.rel (%p1065) target = $region124
        $region123: #{tpu_custom_call.1} parent=87 // pred_region
          %s1068 = sand.u32 %s76, 1
          %s1069 = scalar_lea.sflag [#allocation4], %s1068
          %s1070 = sand.u32 %s672, 1
          %s1071 = smul.addr %s1070, 256
          %s1072 = scalar_lea.vmem [#allocation29], %s1071
          %s1074 = ssub.s32 4096, 4096
          %1075 = vsyncadd %s1069, %s1074
          %s1076 = smul.addr %s76, 64
          %s1077 = smul.addr %s1076, 64
          %s1078 = scalar_lea.hbm %s53, %s1077
          %s1079 = sshll.u32 %s1072, 4
          %s1080 = int_to_ptr.vmem [resolvable:$true] %s1079
          %1085 = dma.hbm_to_vmem [thread:$0]  %s1078, 4096, %s1080, %s1069, 256, 256, 16
        $region124: #{tpu_custom_call.1} parent=87 // pred_fallthru
          _
        // Predicated region
        $region125: #{tpu_custom_call.1} parent=87 // pred_check
          %p1086 = pneg %p708
        $region126: #{tpu_custom_call.1} parent=87 // pred_check_branch
          %1088 = sbr.rel (%p1086) target = $region128
        $region127: #{tpu_custom_call.1} parent=87 // pred_region
          %p1089 = scmp.lt.s32.totalorder %s76, 2
          %s1090 = scalar_select %p1089, %s76, 2
          %s1091 = smul.addr %s1090, 4
          %s1092 = scalar_lea.vmem %s55, %s1091
        $region128: #{tpu_custom_call.1} parent=87 // pred_fallthru
          _
        // Predicated region
        $region129: #{tpu_custom_call.1} parent=87 // pred_check
          %p1093 = pneg %p734
        $region130: #{tpu_custom_call.1} parent=87 // pred_check_branch
          %1095 = sbr.rel (%p1093) target = $region132
        $region131: #{tpu_custom_call.1} parent=87 // pred_region
          %s1096 = sand.u32 %s76, 1
          %s1097 = scalar_lea.sflag [#allocation4], %s1096
          %s1098 = sand.u32 %s724, 1
          %s1099 = smul.addr %s1098, 256
          %s1100 = scalar_lea.vmem [#allocation30], %s1099
          %s1102 = ssub.s32 4096, 4096
          %1103 = vsyncadd %s1097, %s1102
          %s1104 = smul.addr %s76, 64
          %s1105 = smul.addr %s1104, 64
          %s1106 = scalar_lea.hbm %s57, %s1105
          %s1107 = sshll.u32 %s1100, 4
          %s1108 = int_to_ptr.vmem [resolvable:$true] %s1107
          %1113 = dma.hbm_to_vmem [thread:$0]  %s1106, 4096, %s1108, %s1097, 64, 64, 4
        $region132: #{tpu_custom_call.1} parent=87 // pred_fallthru
          _
        // Predicated region
        $region133: #{tpu_custom_call.1} parent=87 // pred_check
          %p1114 = pneg %p760
        $region134: #{tpu_custom_call.1} parent=87 // pred_check_branch
          %1116 = sbr.rel (%p1114) target = $region136
        $region135: #{tpu_custom_call.1} parent=87 // pred_region
          %p1117 = scmp.lt.s32.totalorder %s76, 2
          %s1118 = scalar_select %p1117, %s76, 2
          %s1119 = scalar_lea.vmem %s59, %s1118
        $region136: #{tpu_custom_call.1} parent=87 // pred_fallthru
          _
      $region88: #{tpu_custom_call.1} parent=5 // pred_fallthru
        _
      %p1120 = scmp.le.s32.totalorder 1, %s76
      %p1121 = scmp.lt.s32.totalorder %s76, 4
      %p1122 = pnand %p1120, %p1121
      %p1123 = pneg %p1122
      // Predicated region
      $region137: #{tpu_custom_call.1} parent=5 // pred_check
        _
      $region138: #{tpu_custom_call.1} parent=5 // pred_check_branch
        %1125 = sbr.rel (%p1122) target = $region140
      $region139: #{tpu_custom_call.1} parent=5 // pred_region
        %s1126 = ssub.s32 %s76, 1
        // Predicated region
        $region141: #{tpu_custom_call.1} parent=139 // pred_check
          %p1127 = pneg %p118
        $region142: #{tpu_custom_call.1} parent=139 // pred_check_branch
          %1129 = sbr.rel (%p1127) target = $region144
        $region143: #{tpu_custom_call.1} parent=139 // pred_region
          %1130 = dma.done [#allocation4], 16
        $region144: #{tpu_custom_call.1} parent=139 // pred_fallthru
          _
        // Predicated region
        $region145: #{tpu_custom_call.1} parent=139 // pred_check
          %p1131 = pneg %p139
        $region146: #{tpu_custom_call.1} parent=139 // pred_check_branch
          %1133 = sbr.rel (%p1131) target = $region148
        $region147: #{tpu_custom_call.1} parent=139 // pred_region
          %1134 = dma.done [#allocation7], 256
        $region148: #{tpu_custom_call.1} parent=139 // pred_fallthru
          _
        // Predicated region
        $region149: #{tpu_custom_call.1} parent=139 // pred_check
          %p1135 = pneg %p160
        $region150: #{tpu_custom_call.1} parent=139 // pred_check_branch
          %1137 = sbr.rel (%p1135) target = $region152
        $region151: #{tpu_custom_call.1} parent=139 // pred_region
          %1138 = dma.done [#allocation7], 32
        $region152: #{tpu_custom_call.1} parent=139 // pred_fallthru
          _
        // Predicated region
        $region153: #{tpu_custom_call.1} parent=139 // pred_check
          %p1139 = pneg %p202
        $region154: #{tpu_custom_call.1} parent=139 // pred_check_branch
          %1141 = sbr.rel (%p1139) target = $region156
        $region155: #{tpu_custom_call.1} parent=139 // pred_region
          %1142 = dma.done [#allocation10], 16
        $region156: #{tpu_custom_call.1} parent=139 // pred_fallthru
          _
        // Predicated region
        $region157: #{tpu_custom_call.1} parent=139 // pred_check
          %p1143 = pneg %p223
        $region158: #{tpu_custom_call.1} parent=139 // pred_check_branch
          %1145 = sbr.rel (%p1143) target = $region160
        $region159: #{tpu_custom_call.1} parent=139 // pred_region
          %1146 = dma.done [#allocation10], 16
        $region160: #{tpu_custom_call.1} parent=139 // pred_fallthru
          _
        // Predicated region
        $region161: #{tpu_custom_call.1} parent=139 // pred_check
          %p1147 = pneg %p244
        $region162: #{tpu_custom_call.1} parent=139 // pred_check_branch
          %1149 = sbr.rel (%p1147) target = $region164
        $region163: #{tpu_custom_call.1} parent=139 // pred_region
          %1150 = dma.done [#allocation13], 16
        $region164: #{tpu_custom_call.1} parent=139 // pred_fallthru
          _
        // Predicated region
        $region165: #{tpu_custom_call.1} parent=139 // pred_check
          %p1151 = pneg %p286
        $region166: #{tpu_custom_call.1} parent=139 // pred_check_branch
          %1153 = sbr.rel (%p1151) target = $region168
        $region167: #{tpu_custom_call.1} parent=139 // pred_region
          %1154 = dma.done [#allocation13], 32
        $region168: #{tpu_custom_call.1} parent=139 // pred_fallthru
          _
        // Predicated region
        $region169: #{tpu_custom_call.1} parent=139 // pred_check
          %p1155 = pneg %p328
        $region170: #{tpu_custom_call.1} parent=139 // pred_check_branch
          %1157 = sbr.rel (%p1155) target = $region172
        $region171: #{tpu_custom_call.1} parent=139 // pred_region
          %1158 = dma.done [#allocation16], 16
        $region172: #{tpu_custom_call.1} parent=139 // pred_fallthru
          _
        // Predicated region
        $region173: #{tpu_custom_call.1} parent=139 // pred_check
          %p1159 = pneg %p349
        $region174: #{tpu_custom_call.1} parent=139 // pred_check_branch
          %1161 = sbr.rel (%p1159) target = $region176
        $region175: #{tpu_custom_call.1} parent=139 // pred_region
          %1162 = dma.done [#allocation16], 16
        $region176: #{tpu_custom_call.1} parent=139 // pred_fallthru
          _
        // Predicated region
        $region177: #{tpu_custom_call.1} parent=139 // pred_check
          %p1163 = pneg %p370
        $region178: #{tpu_custom_call.1} parent=139 // pred_check_branch
          %1165 = sbr.rel (%p1163) target = $region180
        $region179: #{tpu_custom_call.1} parent=139 // pred_region
          %1166 = dma.done [#allocation19], 16
        $region180: #{tpu_custom_call.1} parent=139 // pred_fallthru
          _
        // Predicated region
        $region181: #{tpu_custom_call.1} parent=139 // pred_check
          %p1167 = pneg %p391
        $region182: #{tpu_custom_call.1} parent=139 // pred_check_branch
          %1169 = sbr.rel (%p1167) target = $region184
        $region183: #{tpu_custom_call.1} parent=139 // pred_region
          %1170 = dma.done [#allocation19], 16
        $region184: #{tpu_custom_call.1} parent=139 // pred_fallthru
          _
        // Predicated region
        $region185: #{tpu_custom_call.1} parent=139 // pred_check
          %p1171 = pneg %p412
        $region186: #{tpu_custom_call.1} parent=139 // pred_check_branch
          %1173 = sbr.rel (%p1171) target = $region188
        $region187: #{tpu_custom_call.1} parent=139 // pred_region
          %1174 = dma.done [#allocation22], 32
        $region188: #{tpu_custom_call.1} parent=139 // pred_fallthru
          _
        // Predicated region
        $region189: #{tpu_custom_call.1} parent=139 // pred_check
          %p1175 = pneg %p433
        $region190: #{tpu_custom_call.1} parent=139 // pred_check_branch
          %1177 = sbr.rel (%p1175) target = $region192
        $region191: #{tpu_custom_call.1} parent=139 // pred_region
          %1178 = dma.done [#allocation22], 16
        $region192: #{tpu_custom_call.1} parent=139 // pred_fallthru
          _
        // Predicated region
        $region193: #{tpu_custom_call.1} parent=139 // pred_check
          %p1179 = pneg %p454
        $region194: #{tpu_custom_call.1} parent=139 // pred_check_branch
          %1181 = sbr.rel (%p1179) target = $region196
        $region195: #{tpu_custom_call.1} parent=139 // pred_region
          %1182 = dma.done [#allocation25], 16
        $region196: #{tpu_custom_call.1} parent=139 // pred_fallthru
          _
        %s1183 = sand.u32 %s81, 1
        %s1184 = scalar_lea.sflag [#allocation4], %s1183
        %s1185 = sand.u32 %s467, 1
        %s1186 = smul.addr %s1185, 192
        %s1187 = scalar_lea.vmem [#allocation26], %s1186
        // Predicated region
        $region197: #{tpu_custom_call.1} parent=139 // pred_check
          %p1188 = pneg %p480
        $region198: #{tpu_custom_call.1} parent=139 // pred_check_branch
          %1190 = sbr.rel (%p1188) target = $region200
        $region199: #{tpu_custom_call.1} parent=139 // pred_region
          %1191 = dma.done %s1184, 3072
        $region200: #{tpu_custom_call.1} parent=139 // pred_fallthru
          _
        %s1192 = sand.u32 %s81, 1
        %s1193 = scalar_lea.sflag [#allocation4], %s1192
        %s1194 = sand.u32 %s493, 1
        %s1195 = smul.addr %s1194, 3
        %s1196 = scalar_lea.vmem [#allocation27], %s1195
        // Predicated region
        $region201: #{tpu_custom_call.1} parent=139 // pred_check
          %p1197 = pneg %p506
        $region202: #{tpu_custom_call.1} parent=139 // pred_check_branch
          %1199 = sbr.rel (%p1197) target = $region204
        $region203: #{tpu_custom_call.1} parent=139 // pred_region
          %1200 = dma.done %s1193, 48
        $region204: #{tpu_custom_call.1} parent=139 // pred_fallthru
          _
        %s1201 = sand.u32 %s81, 1
        %s1202 = scalar_lea.sflag [#allocation4], %s1201
        %s1203 = sand.u32 %s519, 1
        %s1204 = smul.addr %s1203, 64
        %s1205 = scalar_lea.vmem [#allocation28], %s1204
        // Predicated region
        $region205: #{tpu_custom_call.1} parent=139 // pred_check
          %p1206 = pneg %p532
        $region206: #{tpu_custom_call.1} parent=139 // pred_check_branch
          %1208 = sbr.rel (%p1206) target = $region208
        $region207: #{tpu_custom_call.1} parent=139 // pred_region
          %1209 = dma.done %s1202, 1024
        $region208: #{tpu_custom_call.1} parent=139 // pred_fallthru
          _
        %s1210 = sand.u32 %s81, 1
        %s1211 = scalar_lea.sflag [#allocation4], %s1210
        %s1212 = sand.u32 %s675, 1
        %s1213 = smul.addr %s1212, 256
        %s1214 = scalar_lea.vmem [#allocation29], %s1213
        // Predicated region
        $region209: #{tpu_custom_call.1} parent=139 // pred_check
          %p1215 = pneg %p688
        $region210: #{tpu_custom_call.1} parent=139 // pred_check_branch
          %1217 = sbr.rel (%p1215) target = $region212
        $region211: #{tpu_custom_call.1} parent=139 // pred_region
          %1218 = dma.done %s1211, 4096
        $region212: #{tpu_custom_call.1} parent=139 // pred_fallthru
          _
        %s1219 = sand.u32 %s81, 1
        %s1220 = scalar_lea.sflag [#allocation4], %s1219
        %s1221 = sand.u32 %s727, 1
        %s1222 = smul.addr %s1221, 256
        %s1223 = scalar_lea.vmem [#allocation30], %s1222
        // Predicated region
        $region213: #{tpu_custom_call.1} parent=139 // pred_check
          %p1224 = pneg %p740
        $region214: #{tpu_custom_call.1} parent=139 // pred_check_branch
          %1226 = sbr.rel (%p1224) target = $region216
        $region215: #{tpu_custom_call.1} parent=139 // pred_region
          %1227 = dma.done %s1220, 4096
        $region216: #{tpu_custom_call.1} parent=139 // pred_fallthru
          _
        %p1228 = pneg %p97
        %p1229 = pneg %p94
        %p1230 = pneg %p118
        %p1231 = pneg %p115
        %p1232 = pneg %p139
        %p1233 = pneg %p136
        %p1234 = pneg %p160
        %p1235 = pneg %p157
        %p1236 = pneg %p181
        %p1237 = pneg %p178
        %p1238 = pneg %p202
        %p1239 = pneg %p199
        %p1240 = pneg %p223
        %p1241 = pneg %p220
        %p1242 = pneg %p244
        %p1243 = pneg %p241
        %p1244 = pneg %p265
        %p1245 = pneg %p262
        %p1246 = pneg %p286
        %p1247 = pneg %p283
        %p1248 = pneg %p307
        %p1249 = pneg %p304
        %p1250 = pneg %p328
        %p1251 = pneg %p325
        %p1252 = pneg %p349
        %p1253 = pneg %p346
        %p1254 = pneg %p370
        %p1255 = pneg %p367
        %p1256 = pneg %p391
        %p1257 = pneg %p388
        %p1258 = pneg %p412
        %p1259 = pneg %p409
        %p1260 = pneg %p433
        %p1261 = pneg %p430
        %p1262 = pneg %p454
        %p1263 = pneg %p451
        %s1264 = sand.u32 %s81, 1
        %s1265 = scalar_lea.sflag [#allocation4], %s1264
        %s1266 = sand.u32 %s467, 1
        %s1267 = smul.addr %s1266, 192
        %s1268 = scalar_lea.vmem [#allocation26], %s1267
        %p1269 = pneg %p480
        %p1270 = pneg %p477
        %s1271 = sand.u32 %s81, 1
        %s1272 = scalar_lea.sflag [#allocation4], %s1271
        %s1273 = sand.u32 %s493, 1
        %s1274 = smul.addr %s1273, 3
        %s1275 = scalar_lea.vmem [#allocation27], %s1274
        %p1276 = pneg %p506
        %p1277 = pneg %p503
        %s1278 = sand.u32 %s81, 1
        %s1279 = scalar_lea.sflag [#allocation4], %s1278
        %s1280 = sand.u32 %s519, 1
        %s1281 = smul.addr %s1280, 64
        %s1282 = scalar_lea.vmem [#allocation28], %s1281
        %p1283 = pneg %p532
        %p1284 = pneg %p529
        %p1285 = scmp.lt.s32.totalorder %s81, 2
        %s1286 = scalar_select %p1285, %s81, 2
        %s1287 = scalar_lea.vmem %s43, %s1286
        %p1288 = pneg %p558
        %p1289 = pneg %p555
        %p1290 = scmp.lt.s32.totalorder %s81, 2
        %s1291 = scalar_select %p1290, %s81, 2
        %s1292 = scalar_lea.vmem %s45, %s1291
        %p1293 = pneg %p584
        %p1294 = pneg %p581
        %p1295 = scmp.lt.s32.totalorder %s81, 2
        %s1296 = scalar_select %p1295, %s81, 2
        %s1297 = scalar_lea.vmem %s47, %s1296
        %p1298 = pneg %p610
        %p1299 = pneg %p607
        %p1300 = scmp.lt.s32.totalorder %s81, 2
        %s1301 = scalar_select %p1300, %s81, 2
        %s1302 = scalar_lea.vmem %s49, %s1301
        %p1303 = pneg %p636
        %p1304 = pneg %p633
        %p1305 = scmp.lt.s32.totalorder %s81, 2
        %s1306 = scalar_select %p1305, %s81, 2
        %s1307 = scalar_lea.vmem %s51, %s1306
        %p1308 = pneg %p662
        %p1309 = pneg %p659
        %s1310 = sand.u32 %s81, 1
        %s1311 = scalar_lea.sflag [#allocation4], %s1310
        %s1312 = sand.u32 %s675, 1
        %s1313 = smul.addr %s1312, 256
        %s1314 = scalar_lea.vmem [#allocation29], %s1313
        %p1315 = pneg %p688
        %p1316 = pneg %p685
        %p1317 = scmp.lt.s32.totalorder %s81, 2
        %s1318 = scalar_select %p1317, %s81, 2
        %s1319 = smul.addr %s1318, 4
        %s1320 = scalar_lea.vmem %s55, %s1319
        %p1321 = pneg %p714
        %p1322 = pneg %p711
        %s1323 = sand.u32 %s81, 1
        %s1324 = scalar_lea.sflag [#allocation4], %s1323
        %s1325 = sand.u32 %s727, 1
        %s1326 = smul.addr %s1325, 256
        %s1327 = scalar_lea.vmem [#allocation30], %s1326
        %p1328 = pneg %p740
        %p1329 = pneg %p737
        %p1330 = scmp.lt.s32.totalorder %s81, 2
        %s1331 = scalar_select %p1330, %s81, 2
        %s1332 = scalar_lea.vmem %s59, %s1331
        %p1333 = pneg %p766
        %p1334 = pneg %p763
        %p1335 = pneg %p787
        %p1336 = pneg %p784
        %p1337 = scmp.lt.s32.totalorder %s81, 2
        %s1338 = scalar_select %p1337, %s81, 2
        %s1339 = scalar_lea.vmem %s43, %s1338
        %p1340 = scmp.lt.s32.totalorder %s81, 2
        %s1341 = scalar_select %p1340, %s81, 2
        %s1342 = scalar_lea.vmem %s45, %s1341
        %p1343 = scmp.lt.s32.totalorder %s81, 2
        %s1344 = scalar_select %p1343, %s81, 2
        %s1345 = scalar_lea.vmem %s47, %s1344
        %p1346 = scmp.lt.s32.totalorder %s81, 2
        %s1347 = scalar_select %p1346, %s81, 2
        %s1348 = scalar_lea.vmem %s49, %s1347
        %p1349 = scmp.lt.s32.totalorder %s81, 2
        %s1350 = scalar_select %p1349, %s81, 2
        %s1351 = scalar_lea.vmem %s51, %s1350
        %p1352 = scmp.lt.s32.totalorder %s81, 2
        %s1353 = scalar_select %p1352, %s81, 2
        %s1354 = smul.addr %s1353, 4
        %s1355 = scalar_lea.vmem %s55, %s1354
        %p1356 = scmp.lt.s32.totalorder %s81, 2
        %s1357 = scalar_select %p1356, %s81, 2
        %s1358 = scalar_lea.vmem %s59, %s1357
        %p1360 = scmp.eq.s32.totalorder %s81, 0
        // Predicated region
        $region217: #{tpu_custom_call.1} parent=139 // pred_check
          %p1361 = pneg %p1360
        $region218: #{tpu_custom_call.1} parent=139 // pred_check_branch
          %1363 = sbr.rel (%p1361) target = $region220
        $region219: #{tpu_custom_call.1} parent=139 // pred_region
          %v1364 = vld [vmem:[%s1] sm:$0xff]
          %v1365 = vld [vmem:[%s1 + $0x8] sm:$0xff]
          %v1366 = vld [vmem:[#allocation3] sm:$0x1]
          %v1368 = vlaneseq
          %v1369 = vshrl.u32 %v1368, 7
          %v1370 = vsub.s32 0, %v1369
          %v1371 = vrot.slane %v1366, %v1370
          %v1373 = vmul.f32 %v1364, %v1371
          %v1374 = vmul.f32 %v1365, %v1371
          %v1375 = vld [vmem:[#allocation6] sm:$0xff]
          %v1376 = vld [vmem:[#allocation6 + $0x8] sm:$0xff]
          %v1377 = vld [vmem:[#allocation8] sm:$0x3]
          %v1378 = vpack.c.bf16 %v1374, %v1373
          %v1380 = vlaneseq
          %v1381 = vshrl.u32 %v1380, 7
          %v1382 = vsub.s32 0, %v1381
          %v1383 = vrot.slane %v1377, %v1382
          %v1384 = vlaneseq
          %v1385 = vshrl.u32 %v1384, 7
          %v1386 = vsub.s32 1, %v1385
          %v1387 = vrot.slane %v1377, %v1386
          %v1392 = vunpack.c.l.b16 %v1375
          %v1393 = vunpack.c.h.b16 %v1375
          %v1394 = vunpack.c.l.b16 %v1376
          %v1395 = vunpack.c.h.b16 %v1376
          %v1396 = vpack.c.b16 %v1394, %v1392
          %v1397 = vpack.c.b16 %v1395, %v1393
          %vm1400 = vcmask 130048
          %v1402 = vsel %vm1400, %v1378, 0
          %1404 = vmatprep.subr.bf16.mxu0 0
          %1405 = vmatpush1.bf16.msra.mxu0 0
          %1406 = vmatprep.subr.bf16.mxu0 0
          %1407 = vmatpush1.bf16.msra.mxu0 0
          %1408 = vmatprep.subr.bf16.mxu0 0
          %1409 = vmatpush1.bf16.msra.mxu0 0
          %1410 = vmatprep.subr.bf16.mxu0 0
          %1411 = vmatpush1.bf16.msra.mxu0 0
          %1412 = vmatprep.subr.bf16.mxu0 0
          %1413 = vmatpush1.bf16.msra.mxu0 0
          %1414 = vmatprep.subr.bf16.mxu0 0
          %1415 = vmatpush1.bf16.msra.mxu0 0
          %1416 = vmatprep.subr.bf16.mxu0 0
          %1417 = vmatpush1.bf16.msra.mxu0 0
          %1418 = vmatprep.subr.bf16.mxu0 %v1397
          %1419 = vmatpush1.bf16.msra.mxu0 %v1396
          %1420 = vmatprep.subr.bf16.mxu0 0
          %1421 = vmatpush2.bf16.msra.mxu0 0
          %1422 = vmatprep.subr.bf16.mxu0 0
          %1423 = vmatpush2.bf16.msra.mxu0 0
          %1424 = vmatprep.subr.bf16.mxu0 0
          %1425 = vmatpush2.bf16.msra.mxu0 0
          %1426 = vmatprep.subr.bf16.mxu0 0
          %1427 = vmatpush2.bf16.msra.mxu0 0
          %1428 = vmatprep.subr.bf16.mxu0 0
          %1429 = vmatpush2.bf16.msra.mxu0 0
          %1430 = vmatprep.subr.bf16.mxu0 0
          %1431 = vmatpush2.bf16.msra.mxu0 0
          %1432 = vmatprep.subr.bf16.mxu0 0
          %1433 = vmatpush2.bf16.msra.mxu0 0
          %1434 = vmatprep.subr.bf16.mxu0 0
          %1435 = vmatpush2.bf16.msra.mxu0 0
          %1436 = vmatprep.mubr.bf16.mxu0 0
          %1437 = vmatmul.mubr.bf16.gmra.mxu0 %v1402
          %v1438 = vpop.f32.mrf.mxu0
          %v1439 = vadd.f32 %v1383, %v1438
          %v1440 = vpop.f32.mrf.mxu0
          %v1441 = vadd.f32 %v1387, %v1440
          %v1442 = vpop.f32.mrf.mxu0
          %v1443 = vadd.f32 %v1383, %v1442
          %v1444 = vpop.f32.mrf.mxu0
          %v1445 = vadd.f32 %v1387, %v1444
          %1446 = vdwg.mxu0
          %v1447 = vmax.f32 %v1439, 0.0
          %v1448 = vmax.f32 %v1441, 0.0
          %v1449 = vmax.f32 %v1443, 0.0
          %v1450 = vmax.f32 %v1445, 0.0
          %v1451 = vld [vmem:[%s9] sm:$0xf]
          %v1452 = vld [vmem:[%s9 + $0x4] sm:$0xf]
          %v1453 = vld [vmem:[%s9 + $0x8] sm:$0xf]
          %v1454 = vld [vmem:[%s9 + $0xc] sm:$0xf]
          %v1455 = vld [vmem:[%s9 + $0x10] sm:$0xf]
          %v1456 = vld [vmem:[%s9 + $0x14] sm:$0xf]
          %v1457 = vld [vmem:[%s9 + $0x18] sm:$0xf]
          %v1458 = vld [vmem:[%s9 + $0x1c] sm:$0xf]
          %v1459 = vld [vmem:[%s9 + $0x20] sm:$0xf]
          %v1460 = vld [vmem:[%s9 + $0x24] sm:$0xf]
          %v1461 = vld [vmem:[%s9 + $0x28] sm:$0xf]
          %v1462 = vld [vmem:[%s9 + $0x2c] sm:$0xf]
          %v1463 = vld [vmem:[%s9 + $0x30] sm:$0xf]
          %v1464 = vld [vmem:[%s9 + $0x34] sm:$0xf]
          %v1465 = vld [vmem:[%s9 + $0x38] sm:$0xf]
          %v1466 = vld [vmem:[%s9 + $0x3c] sm:$0xf]
          %v1467 = vld [vmem:[%s9 + $0x40] sm:$0xf]
          %v1468 = vld [vmem:[%s9 + $0x44] sm:$0xf]
          %v1469 = vld [vmem:[%s9 + $0x48] sm:$0xf]
          %v1470 = vld [vmem:[%s9 + $0x4c] sm:$0xf]
          %v1471 = vld [vmem:[%s9 + $0x50] sm:$0xf]
          %v1472 = vld [vmem:[%s9 + $0x54] sm:$0xf]
          %v1473 = vld [vmem:[%s9 + $0x58] sm:$0xf]
          %v1474 = vld [vmem:[%s9 + $0x5c] sm:$0xf]
          %v1475 = vld [vmem:[%s9 + $0x60] sm:$0xf]
          %v1476 = vld [vmem:[%s9 + $0x64] sm:$0xf]
          %v1477 = vld [vmem:[%s9 + $0x68] sm:$0xf]
          %v1478 = vld [vmem:[%s9 + $0x6c] sm:$0xf]
          %v1479 = vld [vmem:[%s9 + $0x70] sm:$0xf]
          %v1480 = vld [vmem:[%s9 + $0x74] sm:$0xf]
          %v1481 = vld [vmem:[%s9 + $0x78] sm:$0xf]
          %v1482 = vld [vmem:[%s9 + $0x7c] sm:$0xf]
          %v1483 = vld [vmem:[#allocation9] sm:$0x1]
          %v1484 = vpack.c.bf16 %v1449, %v1447
          %v1485 = vpack.c.bf16 %v1450, %v1448
          %v1487 = vlaneseq
          %v1488 = vshrl.u32 %v1487, 7
          %v1489 = vsub.s32 0, %v1488
          %v1490 = vrot.slane %v1483, %v1489
          %v1524 = vunpack.c.l.b16 %v1451
          %v1525 = vunpack.c.l.b16 %v1452
          %v1526 = vunpack.c.l.b16 %v1453
          %v1527 = vunpack.c.l.b16 %v1454
          %v1528 = vunpack.c.l.b16 %v1455
          %v1529 = vunpack.c.l.b16 %v1456
          %v1530 = vunpack.c.l.b16 %v1457
          %v1531 = vunpack.c.l.b16 %v1458
          %v1532 = vunpack.c.l.b16 %v1459
          %v1533 = vunpack.c.l.b16 %v1460
          %v1534 = vunpack.c.l.b16 %v1461
          %v1535 = vunpack.c.l.b16 %v1462
          %v1536 = vunpack.c.l.b16 %v1463
          %v1537 = vunpack.c.l.b16 %v1464
          %v1538 = vunpack.c.l.b16 %v1465
          %v1539 = vunpack.c.l.b16 %v1466
          %v1540 = vunpack.c.l.b16 %v1467
          %v1541 = vunpack.c.l.b16 %v1468
          %v1542 = vunpack.c.l.b16 %v1469
          %v1543 = vunpack.c.l.b16 %v1470
          %v1544 = vunpack.c.l.b16 %v1471
          %v1545 = vunpack.c.l.b16 %v1472
          %v1546 = vunpack.c.l.b16 %v1473
          %v1547 = vunpack.c.l.b16 %v1474
          %v1548 = vunpack.c.l.b16 %v1475
          %v1549 = vunpack.c.l.b16 %v1476
          %v1550 = vunpack.c.l.b16 %v1477
          %v1551 = vunpack.c.l.b16 %v1478
          %v1552 = vunpack.c.l.b16 %v1479
          %v1553 = vunpack.c.l.b16 %v1480
          %v1554 = vunpack.c.l.b16 %v1481
          %v1555 = vunpack.c.l.b16 %v1482
          %v1556 = vpack.c.b16 %v1525, %v1524
          %v1557 = vpack.c.b16 %v1527, %v1526
          %v1558 = vpack.c.b16 %v1529, %v1528
          %v1559 = vpack.c.b16 %v1531, %v1530
          %v1560 = vpack.c.b16 %v1533, %v1532
          %v1561 = vpack.c.b16 %v1535, %v1534
          %v1562 = vpack.c.b16 %v1537, %v1536
          %v1563 = vpack.c.b16 %v1539, %v1538
          %v1564 = vpack.c.b16 %v1541, %v1540
          %v1565 = vpack.c.b16 %v1543, %v1542
          %v1566 = vpack.c.b16 %v1545, %v1544
          %v1567 = vpack.c.b16 %v1547, %v1546
          %v1568 = vpack.c.b16 %v1549, %v1548
          %v1569 = vpack.c.b16 %v1551, %v1550
          %v1570 = vpack.c.b16 %v1553, %v1552
          %v1571 = vpack.c.b16 %v1555, %v1554
          %1588 = vmatprep.subr.bf16.mxu0 0
          %1589 = vmatpush1.bf16.msra.mxu0 %v1563
          %1590 = vmatprep.subr.bf16.mxu0 0
          %1591 = vmatpush1.bf16.msra.mxu0 %v1562
          %1592 = vmatprep.subr.bf16.mxu0 0
          %1593 = vmatpush1.bf16.msra.mxu0 %v1561
          %1594 = vmatprep.subr.bf16.mxu0 0
          %1595 = vmatpush1.bf16.msra.mxu0 %v1560
          %1596 = vmatprep.subr.bf16.mxu0 0
          %1597 = vmatpush1.bf16.msra.mxu0 %v1559
          %1598 = vmatprep.subr.bf16.mxu0 0
          %1599 = vmatpush1.bf16.msra.mxu0 %v1558
          %1600 = vmatprep.subr.bf16.mxu0 0
          %1601 = vmatpush1.bf16.msra.mxu0 %v1557
          %1602 = vmatprep.subr.bf16.mxu0 0
          %1603 = vmatpush1.bf16.msra.mxu0 %v1556
          %1604 = vmatprep.subr.bf16.mxu0 0
          %1605 = vmatpush2.bf16.msra.mxu0 %v1571
          %1606 = vmatprep.subr.bf16.mxu0 0
          %1607 = vmatpush2.bf16.msra.mxu0 %v1570
          %1608 = vmatprep.subr.bf16.mxu0 0
          %1609 = vmatpush2.bf16.msra.mxu0 %v1569
          %1610 = vmatprep.subr.bf16.mxu0 0
          %1611 = vmatpush2.bf16.msra.mxu0 %v1568
          %1612 = vmatprep.subr.bf16.mxu0 0
          %1613 = vmatpush2.bf16.msra.mxu0 %v1567
          %1614 = vmatprep.subr.bf16.mxu0 0
          %1615 = vmatpush2.bf16.msra.mxu0 %v1566
          %1616 = vmatprep.subr.bf16.mxu0 0
          %1617 = vmatpush2.bf16.msra.mxu0 %v1565
          %1618 = vmatprep.subr.bf16.mxu0 0
          %1619 = vmatpush2.bf16.msra.mxu0 %v1564
          %1620 = vmatprep.mubr.bf16.mxu0 %v1485
          %1621 = vmatmul.mubr.bf16.gmra.mxu0 %v1484
          %v1622 = vpop.f32.mrf.mxu0
          %v1623 = vadd.f32 %v1490, %v1622
          %v1624 = vpop.f32.mrf.mxu0
          %v1625 = vpop.f32.mrf.mxu0
          %v1626 = vadd.f32 %v1490, %v1625
          %v1627 = vpop.f32.mrf.mxu0
          %1628 = vdwg.mxu0
          %v1629 = vld [vmem:[#allocation11] sm:$0x1]
          %v1630 = vld [vmem:[#allocation12] sm:$0x1]
          %vm1631 = vcmask 195584
          %v1632 = vsel %vm1631, %v1623, 0.0
          %v1633 = vsel %vm1631, %v1626, 0.0
          %v1634 = vadd.f32 %v1632, %v1633
          %v1635 = vrot.slane %v1634, 4
          %v1636 = vadd.f32 %v1634, %v1635
          %v1637 = vrot.slane %v1636, 2
          %v1638 = vadd.f32 %v1636, %v1637
          %v1639 = vrot.slane %v1638, 1
          %v1640 = vadd.f32 %v1638, %v1639
          %v1641 = vrcp.pop 16.0
          %v1642 = vmul.f32 %v1640, %v1641
          %v1643 = vsub.f32 %v1623, %v1642
          %v1644 = vsub.f32 %v1626, %v1642
          %v1645 = vmul.f32 %v1643, %v1643
          %v1646 = vmul.f32 %v1644, %v1644
          %v1647 = vsel %vm1631, %v1645, 0.0
          %v1648 = vsel %vm1631, %v1646, 0.0
          %v1649 = vadd.f32 %v1647, %v1648
          %v1650 = vrot.slane %v1649, 4
          %v1651 = vadd.f32 %v1649, %v1650
          %v1652 = vrot.slane %v1651, 2
          %v1653 = vadd.f32 %v1651, %v1652
          %v1654 = vrot.slane %v1653, 1
          %v1655 = vadd.f32 %v1653, %v1654
          %v1656 = vmul.f32 %v1655, %v1641
          %v1657 = vadd.f32 %v1656, 1e-05
          %v1658 = vrsqrt.pop %v1657
          %v1659 = vmul.f32 %v1643, %v1658
          %v1660 = vmul.f32 %v1644, %v1658
          %v1662 = vlaneseq
          %v1663 = vshrl.u32 %v1662, 7
          %v1664 = vsub.s32 0, %v1663
          %v1665 = vrot.slane %v1629, %v1664
          %v1667 = vmul.f32 %v1659, %v1665
          %v1668 = vmul.f32 %v1660, %v1665
          %v1670 = vlaneseq
          %v1671 = vshrl.u32 %v1670, 7
          %v1672 = vsub.s32 0, %v1671
          %v1673 = vrot.slane %v1630, %v1672
          %v1675 = vadd.f32 %v1667, %v1673
          %v1676 = vadd.f32 %v1668, %v1673
          %v1677 = vld [vmem:[%s17] sm:$0xff]
          %v1678 = vld [vmem:[%s17 + $0x8] sm:$0xff]
          %v1679 = vld [vmem:[%s17 + $0x10] sm:$0xff]
          %v1680 = vld [vmem:[#allocation14] sm:$0x3]
          %v1681 = vpack.c.bf16 %v1676, %v1675
          %v1683 = vlaneseq
          %v1684 = vshrl.u32 %v1683, 7
          %v1685 = vsub.s32 0, %v1684
          %v1686 = vrot.slane %v1680, %v1685
          %v1687 = vlaneseq
          %v1688 = vshrl.u32 %v1687, 7
          %v1689 = vsub.s32 1, %v1688
          %v1690 = vrot.slane %v1680, %v1689
          %v1696 = vunpack.c.l.b16 %v1677
          %v1697 = vunpack.c.h.b16 %v1677
          %v1698 = vunpack.c.l.b16 %v1678
          %v1699 = vunpack.c.h.b16 %v1678
          %v1700 = vunpack.c.l.b16 %v1679
          %v1701 = vunpack.c.h.b16 %v1679
          %v1702 = vpack.c.b16 %v1698, %v1696
          %v1703 = vpack.c.b16 %v1699, %v1697
          %v1704 = vpack.c.b16 %v1700, %v1700
          %v1705 = vpack.c.b16 %v1701, %v1701
          %v1709 = vsel %vm1631, %v1681, 0
          %vm1711 = vcmask 1043456
          %v1713 = vsel %vm1711, %v1704, 0
          %v1716 = vsel %vm1711, %v1705, 0
          %1718 = vmatprep.subr.bf16.mxu0 0
          %1719 = vmatpush1.bf16.msra.mxu0 0
          %1720 = vmatprep.subr.bf16.mxu0 0
          %1721 = vmatpush1.bf16.msra.mxu0 0
          %1722 = vmatprep.subr.bf16.mxu0 0
          %1723 = vmatpush1.bf16.msra.mxu0 0
          %1724 = vmatprep.subr.bf16.mxu0 0
          %1725 = vmatpush1.bf16.msra.mxu0 0
          %1726 = vmatprep.subr.bf16.mxu0 0
          %1727 = vmatpush1.bf16.msra.mxu0 0
          %1728 = vmatprep.subr.bf16.mxu0 0
          %1729 = vmatpush1.bf16.msra.mxu0 0
          %1730 = vmatprep.subr.bf16.mxu0 %v1716
          %1731 = vmatpush1.bf16.msra.mxu0 %v1713
          %1732 = vmatprep.subr.bf16.mxu0 %v1703
          %1733 = vmatpush1.bf16.msra.mxu0 %v1702
          %1734 = vmatprep.subr.bf16.mxu0 0
          %1735 = vmatpush2.bf16.msra.mxu0 0
          %1736 = vmatprep.subr.bf16.mxu0 0
          %1737 = vmatpush2.bf16.msra.mxu0 0
          %1738 = vmatprep.subr.bf16.mxu0 0
          %1739 = vmatpush2.bf16.msra.mxu0 0
          %1740 = vmatprep.subr.bf16.mxu0 0
          %1741 = vmatpush2.bf16.msra.mxu0 0
          %1742 = vmatprep.subr.bf16.mxu0 0
          %1743 = vmatpush2.bf16.msra.mxu0 0
          %1744 = vmatprep.subr.bf16.mxu0 0
          %1745 = vmatpush2.bf16.msra.mxu0 0
          %1746 = vmatprep.subr.bf16.mxu0 0
          %1747 = vmatpush2.bf16.msra.mxu0 0
          %1748 = vmatprep.subr.bf16.mxu0 0
          %1749 = vmatpush2.bf16.msra.mxu0 0
          %1750 = vmatprep.mubr.bf16.mxu0 0
          %1751 = vmatmul.mubr.bf16.gmra.mxu0 %v1709
          %v1752 = vpop.f32.mrf.mxu0
          %v1753 = vadd.f32 %v1686, %v1752
          %v1754 = vpop.f32.mrf.mxu0
          %v1755 = vadd.f32 %v1690, %v1754
          %v1756 = vpop.f32.mrf.mxu0
          %v1757 = vadd.f32 %v1686, %v1756
          %v1758 = vpop.f32.mrf.mxu0
          %v1759 = vadd.f32 %v1690, %v1758
          %1760 = vdwg.mxu0
          %v1761 = vmax.f32 %v1753, 0.0
          %v1762 = vmax.f32 %v1755, 0.0
          %v1763 = vmax.f32 %v1757, 0.0
          %v1764 = vmax.f32 %v1759, 0.0
          %v1765 = vld [vmem:[%s21] sm:$0xf]
          %v1766 = vld [vmem:[%s21 + $0x4] sm:$0xf]
          %v1767 = vld [vmem:[%s21 + $0x8] sm:$0xf]
          %v1768 = vld [vmem:[%s21 + $0xc] sm:$0xf]
          %v1769 = vld [vmem:[%s21 + $0x10] sm:$0xf]
          %v1770 = vld [vmem:[%s21 + $0x14] sm:$0xf]
          %v1771 = vld [vmem:[%s21 + $0x18] sm:$0xf]
          %v1772 = vld [vmem:[%s21 + $0x1c] sm:$0xf]
          %v1773 = vld [vmem:[%s21 + $0x20] sm:$0xf]
          %v1774 = vld [vmem:[%s21 + $0x24] sm:$0xf]
          %v1775 = vld [vmem:[%s21 + $0x28] sm:$0xf]
          %v1776 = vld [vmem:[%s21 + $0x2c] sm:$0xf]
          %v1777 = vld [vmem:[%s21 + $0x30] sm:$0xf]
          %v1778 = vld [vmem:[%s21 + $0x34] sm:$0xf]
          %v1779 = vld [vmem:[%s21 + $0x38] sm:$0xf]
          %v1780 = vld [vmem:[%s21 + $0x3c] sm:$0xf]
          %v1781 = vld [vmem:[%s21 + $0x40] sm:$0xf]
          %v1782 = vld [vmem:[%s21 + $0x44] sm:$0xf]
          %v1783 = vld [vmem:[%s21 + $0x48] sm:$0xf]
          %v1784 = vld [vmem:[%s21 + $0x4c] sm:$0xf]
          %v1785 = vld [vmem:[%s21 + $0x50] sm:$0xf]
          %v1786 = vld [vmem:[%s21 + $0x54] sm:$0xf]
          %v1787 = vld [vmem:[%s21 + $0x58] sm:$0xf]
          %v1788 = vld [vmem:[%s21 + $0x5c] sm:$0xf]
          %v1789 = vld [vmem:[%s21 + $0x60] sm:$0xf]
          %v1790 = vld [vmem:[%s21 + $0x64] sm:$0xf]
          %v1791 = vld [vmem:[%s21 + $0x68] sm:$0xf]
          %v1792 = vld [vmem:[%s21 + $0x6c] sm:$0xf]
          %v1793 = vld [vmem:[%s21 + $0x70] sm:$0xf]
          %v1794 = vld [vmem:[%s21 + $0x74] sm:$0xf]
          %v1795 = vld [vmem:[%s21 + $0x78] sm:$0xf]
          %v1796 = vld [vmem:[%s21 + $0x7c] sm:$0xf]
          %v1797 = vld [vmem:[#allocation15] sm:$0x1]
          %v1798 = vpack.c.bf16 %v1763, %v1761
          %v1799 = vpack.c.bf16 %v1764, %v1762
          %v1801 = vlaneseq
          %v1802 = vshrl.u32 %v1801, 7
          %v1803 = vsub.s32 0, %v1802
          %v1804 = vrot.slane %v1797, %v1803
          %v1838 = vunpack.c.l.b16 %v1765
          %v1839 = vunpack.c.l.b16 %v1766
          %v1840 = vunpack.c.l.b16 %v1767
          %v1841 = vunpack.c.l.b16 %v1768
          %v1842 = vunpack.c.l.b16 %v1769
          %v1843 = vunpack.c.l.b16 %v1770
          %v1844 = vunpack.c.l.b16 %v1771
          %v1845 = vunpack.c.l.b16 %v1772
          %v1846 = vunpack.c.l.b16 %v1773
          %v1847 = vunpack.c.l.b16 %v1774
          %v1848 = vunpack.c.l.b16 %v1775
          %v1849 = vunpack.c.l.b16 %v1776
          %v1850 = vunpack.c.l.b16 %v1777
          %v1851 = vunpack.c.l.b16 %v1778
          %v1852 = vunpack.c.l.b16 %v1779
          %v1853 = vunpack.c.l.b16 %v1780
          %v1854 = vunpack.c.l.b16 %v1781
          %v1855 = vunpack.c.l.b16 %v1782
          %v1856 = vunpack.c.l.b16 %v1783
          %v1857 = vunpack.c.l.b16 %v1784
          %v1858 = vunpack.c.l.b16 %v1785
          %v1859 = vunpack.c.l.b16 %v1786
          %v1860 = vunpack.c.l.b16 %v1787
          %v1861 = vunpack.c.l.b16 %v1788
          %v1862 = vunpack.c.l.b16 %v1789
          %v1863 = vunpack.c.l.b16 %v1790
          %v1864 = vunpack.c.l.b16 %v1791
          %v1865 = vunpack.c.l.b16 %v1792
          %v1866 = vunpack.c.l.b16 %v1793
          %v1867 = vunpack.c.l.b16 %v1794
          %v1868 = vunpack.c.l.b16 %v1795
          %v1869 = vunpack.c.l.b16 %v1796
          %v1870 = vpack.c.b16 %v1839, %v1838
          %v1871 = vpack.c.b16 %v1841, %v1840
          %v1872 = vpack.c.b16 %v1843, %v1842
          %v1873 = vpack.c.b16 %v1845, %v1844
          %v1874 = vpack.c.b16 %v1847, %v1846
          %v1875 = vpack.c.b16 %v1849, %v1848
          %v1876 = vpack.c.b16 %v1851, %v1850
          %v1877 = vpack.c.b16 %v1853, %v1852
          %v1878 = vpack.c.b16 %v1855, %v1854
          %v1879 = vpack.c.b16 %v1857, %v1856
          %v1880 = vpack.c.b16 %v1859, %v1858
          %v1881 = vpack.c.b16 %v1861, %v1860
          %v1882 = vpack.c.b16 %v1863, %v1862
          %v1883 = vpack.c.b16 %v1865, %v1864
          %v1884 = vpack.c.b16 %v1867, %v1866
          %v1885 = vpack.c.b16 %v1869, %v1868
          %1902 = vmatprep.subr.bf16.mxu0 0
          %1903 = vmatpush1.bf16.msra.mxu0 %v1877
          %1904 = vmatprep.subr.bf16.mxu0 0
          %1905 = vmatpush1.bf16.msra.mxu0 %v1876
          %1906 = vmatprep.subr.bf16.mxu0 0
          %1907 = vmatpush1.bf16.msra.mxu0 %v1875
          %1908 = vmatprep.subr.bf16.mxu0 0
          %1909 = vmatpush1.bf16.msra.mxu0 %v1874
          %1910 = vmatprep.subr.bf16.mxu0 0
          %1911 = vmatpush1.bf16.msra.mxu0 %v1873
          %1912 = vmatprep.subr.bf16.mxu0 0
          %1913 = vmatpush1.bf16.msra.mxu0 %v1872
          %1914 = vmatprep.subr.bf16.mxu0 0
          %1915 = vmatpush1.bf16.msra.mxu0 %v1871
          %1916 = vmatprep.subr.bf16.mxu0 0
          %1917 = vmatpush1.bf16.msra.mxu0 %v1870
          %1918 = vmatprep.subr.bf16.mxu0 0
          %1919 = vmatpush2.bf16.msra.mxu0 %v1885
          %1920 = vmatprep.subr.bf16.mxu0 0
          %1921 = vmatpush2.bf16.msra.mxu0 %v1884
          %1922 = vmatprep.subr.bf16.mxu0 0
          %1923 = vmatpush2.bf16.msra.mxu0 %v1883
          %1924 = vmatprep.subr.bf16.mxu0 0
          %1925 = vmatpush2.bf16.msra.mxu0 %v1882
          %1926 = vmatprep.subr.bf16.mxu0 0
          %1927 = vmatpush2.bf16.msra.mxu0 %v1881
          %1928 = vmatprep.subr.bf16.mxu0 0
          %1929 = vmatpush2.bf16.msra.mxu0 %v1880
          %1930 = vmatprep.subr.bf16.mxu0 0
          %1931 = vmatpush2.bf16.msra.mxu0 %v1879
          %1932 = vmatprep.subr.bf16.mxu0 0
          %1933 = vmatpush2.bf16.msra.mxu0 %v1878
          %1934 = vmatprep.mubr.bf16.mxu0 %v1799
          %1935 = vmatmul.mubr.bf16.gmra.mxu0 %v1798
          %v1936 = vpop.f32.mrf.mxu0
          %v1937 = vadd.f32 %v1804, %v1936
          %v1938 = vpop.f32.mrf.mxu0
          %v1939 = vpop.f32.mrf.mxu0
          %v1940 = vadd.f32 %v1804, %v1939
          %v1941 = vpop.f32.mrf.mxu0
          %1942 = vdwg.mxu0
          %v1943 = vld [vmem:[#allocation17] sm:$0x1]
          %v1944 = vld [vmem:[#allocation18] sm:$0x1]
          %1945 = vadd.xlane.f32.xlu0 %v1937
          %v1946 = vpop.xlane.xlu0 %1945
          %1947 = vadd.xlane.f32.xlu0 %v1940
          %v1948 = vpop.xlane.xlu0 %1947
          %v1949 = vrcp.pop 128.0
          %v1950 = vmul.f32 %v1946, %v1949
          %v1951 = vmul.f32 %v1948, %v1949
          %v1952 = vsub.f32 %v1937, %v1950
          %v1953 = vsub.f32 %v1940, %v1951
          %v1954 = vmul.f32 %v1952, %v1952
          %v1955 = vmul.f32 %v1953, %v1953
          %1956 = vadd.xlane.f32.xlu0 %v1954
          %v1957 = vpop.xlane.xlu0 %1956
          %1958 = vadd.xlane.f32.xlu0 %v1955
          %v1959 = vpop.xlane.xlu0 %1958
          %v1960 = vmul.f32 %v1957, %v1949
          %v1961 = vmul.f32 %v1959, %v1949
          %v1962 = vadd.f32 %v1960, 1e-05
          %v1963 = vadd.f32 %v1961, 1e-05
          %v1964 = vrsqrt.pop %v1962
          %v1965 = vrsqrt.pop %v1963
          %v1966 = vmul.f32 %v1952, %v1964
          %v1967 = vmul.f32 %v1953, %v1965
          %v1969 = vlaneseq
          %v1970 = vshrl.u32 %v1969, 7
          %v1971 = vsub.s32 0, %v1970
          %v1972 = vrot.slane %v1943, %v1971
          %v1974 = vmul.f32 %v1966, %v1972
          %v1975 = vmul.f32 %v1967, %v1972
          %v1977 = vlaneseq
          %v1978 = vshrl.u32 %v1977, 7
          %v1979 = vsub.s32 0, %v1978
          %v1980 = vrot.slane %v1944, %v1979
          %v1982 = vadd.f32 %v1974, %v1980
          %v1983 = vadd.f32 %v1975, %v1980
          %v1984 = vld [vmem:[#allocation20] sm:$0x1]
          %v1986 = vlaneseq
          %v1987 = vshrl.u32 %v1986, 7
          %v1988 = vsub.s32 0, %v1987
          %v1989 = vrot.slane %v1984, %v1988
          %v1991 = vld [vmem:[#allocation21] sm:$0x1]
          %v1992 = vlaneseq
          %v1993 = vshrl.u32 %v1992, 7
          %v1994 = vsub.s32 0, %v1993
          %v1995 = vrot.slane %v1991, %v1994
          %v1996 = vadd.f32 %v1989, %v1995
          %1997 = vst [vmem:[#allocation2] sm:$0xff] %v1996
          %1998 = vst [vmem:[#allocation2 + $0x8] sm:$0xff] %v1996
          %v1999 = vld [vmem:[#allocation21 + $0x1] sm:$0x1]
          %v2000 = vlaneseq
          %v2001 = vshrl.u32 %v2000, 7
          %v2002 = vsub.s32 0, %v2001
          %v2003 = vrot.slane %v1999, %v2002
          %v2004 = vadd.f32 %v1982, %v2003
          %v2005 = vadd.f32 %v1983, %v2003
          %2006 = vst [vmem:[#allocation2 + $0x10] sm:$0xff] %v2004
          %2007 = vst [vmem:[#allocation2 + $0x18] sm:$0xff] %v2005
        $region220: #{tpu_custom_call.1} parent=139 // pred_fallthru
          _
        %v2008 = vld [vmem:[#allocation2] sm:$0xff]
        %v2009 = vld [vmem:[#allocation2 + $0x8] sm:$0xff]
        %v2010 = vld [vmem:[#allocation2 + $0x10] sm:$0xff]
        %v2011 = vld [vmem:[#allocation2 + $0x18] sm:$0xff]
        %v2012 = vld [vmem:[%s1187] sm:$0xff]
        %v2013 = vld [vmem:[%s1187 + $0x8] sm:$0xf]
        %v2014 = vld [vmem:[%s1187 + $0xc] sm:$0xff]
        %v2015 = vld [vmem:[%s1187 + $0x14] sm:$0xf]
        %v2016 = vld [vmem:[%s1187 + $0x18] sm:$0xff]
        %v2017 = vld [vmem:[%s1187 + $0x20] sm:$0xf]
        %v2018 = vld [vmem:[%s1187 + $0x24] sm:$0xff]
        %v2019 = vld [vmem:[%s1187 + $0x2c] sm:$0xf]
        %v2020 = vld [vmem:[%s1187 + $0x30] sm:$0xff]
        %v2021 = vld [vmem:[%s1187 + $0x38] sm:$0xf]
        %v2022 = vld [vmem:[%s1187 + $0x3c] sm:$0xff]
        %v2023 = vld [vmem:[%s1187 + $0x44] sm:$0xf]
        %v2024 = vld [vmem:[%s1187 + $0x48] sm:$0xff]
        %v2025 = vld [vmem:[%s1187 + $0x50] sm:$0xf]
        %v2026 = vld [vmem:[%s1187 + $0x54] sm:$0xff]
        %v2027 = vld [vmem:[%s1187 + $0x5c] sm:$0xf]
        %v2028 = vld [vmem:[%s1187 + $0x60] sm:$0xff]
        %v2029 = vld [vmem:[%s1187 + $0x68] sm:$0xf]
        %v2030 = vld [vmem:[%s1187 + $0x6c] sm:$0xff]
        %v2031 = vld [vmem:[%s1187 + $0x74] sm:$0xf]
        %v2032 = vld [vmem:[%s1187 + $0x78] sm:$0xff]
        %v2033 = vld [vmem:[%s1187 + $0x80] sm:$0xf]
        %v2034 = vld [vmem:[%s1187 + $0x84] sm:$0xff]
        %v2035 = vld [vmem:[%s1187 + $0x8c] sm:$0xf]
        %v2036 = vld [vmem:[%s1187 + $0x90] sm:$0xff]
        %v2037 = vld [vmem:[%s1187 + $0x98] sm:$0xf]
        %v2038 = vld [vmem:[%s1187 + $0x9c] sm:$0xff]
        %v2039 = vld [vmem:[%s1187 + $0xa4] sm:$0xf]
        %v2040 = vld [vmem:[%s1187 + $0xa8] sm:$0xff]
        %v2041 = vld [vmem:[%s1187 + $0xb0] sm:$0xf]
        %v2042 = vld [vmem:[%s1187 + $0xb4] sm:$0xff]
        %v2043 = vld [vmem:[%s1187 + $0xbc] sm:$0xf]
        %v2044 = vld [vmem:[%s1196] sm:$0x7]
        %v2045 = vpack.c.bf16 %v2009, %v2008
        %v2046 = vpack.c.bf16 %v2011, %v2010
        %v2048 = vlaneseq
        %v2049 = vshrl.u32 %v2048, 7
        %v2050 = vsub.s32 0, %v2049
        %v2051 = vrot.slane %v2044, %v2050
        %v2052 = vlaneseq
        %v2053 = vshrl.u32 %v2052, 7
        %v2054 = vsub.s32 1, %v2053
        %v2055 = vrot.slane %v2044, %v2054
        %v2056 = vlaneseq
        %v2057 = vshrl.u32 %v2056, 7
        %v2058 = vsub.s32 2, %v2057
        %v2059 = vrot.slane %v2044, %v2058
        %v2095 = vunpack.c.l.b16 %v2012
        %v2096 = vunpack.c.h.b16 %v2012
        %v2097 = vunpack.c.l.b16 %v2013
        %v2098 = vunpack.c.l.b16 %v2014
        %v2099 = vunpack.c.h.b16 %v2014
        %v2100 = vunpack.c.l.b16 %v2015
        %v2101 = vunpack.c.l.b16 %v2016
        %v2102 = vunpack.c.h.b16 %v2016
        %v2103 = vunpack.c.l.b16 %v2017
        %v2104 = vunpack.c.l.b16 %v2018
        %v2105 = vunpack.c.h.b16 %v2018
        %v2106 = vunpack.c.l.b16 %v2019
        %v2107 = vunpack.c.l.b16 %v2020
        %v2108 = vunpack.c.h.b16 %v2020
        %v2109 = vunpack.c.l.b16 %v2021
        %v2110 = vunpack.c.l.b16 %v2022
        %v2111 = vunpack.c.h.b16 %v2022
        %v2112 = vunpack.c.l.b16 %v2023
        %v2113 = vunpack.c.l.b16 %v2024
        %v2114 = vunpack.c.h.b16 %v2024
        %v2115 = vunpack.c.l.b16 %v2025
        %v2116 = vunpack.c.l.b16 %v2026
        %v2117 = vunpack.c.h.b16 %v2026
        %v2118 = vunpack.c.l.b16 %v2027
        %v2119 = vunpack.c.l.b16 %v2028
        %v2120 = vunpack.c.h.b16 %v2028
        %v2121 = vunpack.c.l.b16 %v2029
        %v2122 = vunpack.c.l.b16 %v2030
        %v2123 = vunpack.c.h.b16 %v2030
        %v2124 = vunpack.c.l.b16 %v2031
        %v2125 = vunpack.c.l.b16 %v2032
        %v2126 = vunpack.c.h.b16 %v2032
        %v2127 = vunpack.c.l.b16 %v2033
        %v2128 = vunpack.c.l.b16 %v2034
        %v2129 = vunpack.c.h.b16 %v2034
        %v2130 = vunpack.c.l.b16 %v2035
        %v2131 = vunpack.c.l.b16 %v2036
        %v2132 = vunpack.c.h.b16 %v2036
        %v2133 = vunpack.c.l.b16 %v2037
        %v2134 = vunpack.c.l.b16 %v2038
        %v2135 = vunpack.c.h.b16 %v2038
        %v2136 = vunpack.c.l.b16 %v2039
        %v2137 = vunpack.c.l.b16 %v2040
        %v2138 = vunpack.c.h.b16 %v2040
        %v2139 = vunpack.c.l.b16 %v2041
        %v2140 = vunpack.c.l.b16 %v2042
        %v2141 = vunpack.c.h.b16 %v2042
        %v2142 = vunpack.c.l.b16 %v2043
        %v2143 = vpack.c.b16 %v2098, %v2095
        %v2144 = vpack.c.b16 %v2099, %v2096
        %v2145 = vpack.c.b16 %v2100, %v2097
        %v2146 = vpack.c.b16 %v2104, %v2101
        %v2147 = vpack.c.b16 %v2105, %v2102
        %v2148 = vpack.c.b16 %v2106, %v2103
        %v2149 = vpack.c.b16 %v2110, %v2107
        %v2150 = vpack.c.b16 %v2111, %v2108
        %v2151 = vpack.c.b16 %v2112, %v2109
        %v2152 = vpack.c.b16 %v2116, %v2113
        %v2153 = vpack.c.b16 %v2117, %v2114
        %v2154 = vpack.c.b16 %v2118, %v2115
        %v2155 = vpack.c.b16 %v2122, %v2119
        %v2156 = vpack.c.b16 %v2123, %v2120
        %v2157 = vpack.c.b16 %v2124, %v2121
        %v2158 = vpack.c.b16 %v2128, %v2125
        %v2159 = vpack.c.b16 %v2129, %v2126
        %v2160 = vpack.c.b16 %v2130, %v2127
        %v2161 = vpack.c.b16 %v2134, %v2131
        %v2162 = vpack.c.b16 %v2135, %v2132
        %v2163 = vpack.c.b16 %v2136, %v2133
        %v2164 = vpack.c.b16 %v2140, %v2137
        %v2165 = vpack.c.b16 %v2141, %v2138
        %v2166 = vpack.c.b16 %v2142, %v2139
        %2191 = vmatprep.subr.bf16.mxu0 %v2165
        %2192 = vmatpush1.bf16.msra.mxu0 %v2164
        %2193 = vmatprep.subr.bf16.mxu0 %v2162
        %2194 = vmatpush1.bf16.msra.mxu0 %v2161
        %2195 = vmatprep.subr.bf16.mxu0 %v2159
        %2196 = vmatpush1.bf16.msra.mxu0 %v2158
        %2197 = vmatprep.subr.bf16.mxu0 %v2156
        %2198 = vmatpush1.bf16.msra.mxu0 %v2155
        %2199 = vmatprep.subr.bf16.mxu0 %v2153
        %2200 = vmatpush1.bf16.msra.mxu0 %v2152
        %2201 = vmatprep.subr.bf16.mxu0 %v2150
        %2202 = vmatpush1.bf16.msra.mxu0 %v2149
        %2203 = vmatprep.subr.bf16.mxu0 %v2147
        %2204 = vmatpush1.bf16.msra.mxu0 %v2146
        %2205 = vmatprep.subr.bf16.mxu0 %v2144
        %2206 = vmatpush1.bf16.msra.mxu0 %v2143
        %2207 = vmatprep.subr.bf16.mxu0 0
        %2208 = vmatpush2.bf16.msra.mxu0 0
        %2209 = vmatprep.subr.bf16.mxu0 0
        %2210 = vmatpush2.bf16.msra.mxu0 0
        %2211 = vmatprep.subr.bf16.mxu0 0
        %2212 = vmatpush2.bf16.msra.mxu0 0
        %2213 = vmatprep.subr.bf16.mxu0 0
        %2214 = vmatpush2.bf16.msra.mxu0 0
        %2215 = vmatprep.subr.bf16.mxu0 0
        %2216 = vmatpush2.bf16.msra.mxu0 0
        %2217 = vmatprep.subr.bf16.mxu0 0
        %2218 = vmatpush2.bf16.msra.mxu0 0
        %2219 = vmatprep.subr.bf16.mxu0 0
        %2220 = vmatpush2.bf16.msra.mxu0 0
        %2221 = vmatprep.subr.bf16.mxu0 0
        %2222 = vmatpush2.bf16.msra.mxu0 0
        %2223 = vmatprep.mubr.bf16.mxu0 0
        %2224 = vmatmul.mubr.bf16.gmra.mxu0 %v2045
        %v2225 = vpop.f32.mrf.mxu0
        %v2226 = vadd.f32 %v2051, %v2225
        %v2227 = vpop.f32.mrf.mxu0
        %v2228 = vadd.f32 %v2055, %v2227
        %v2229 = vpop.f32.mrf.mxu0
        %v2230 = vadd.f32 %v2051, %v2229
        %v2231 = vpop.f32.mrf.mxu0
        %v2232 = vadd.f32 %v2055, %v2231
        %2233 = vmatprep.mubr.bf16.mxu0 0
        %2234 = vmatmul.mubr.bf16.gmra.mxu0 %v2046
        %v2235 = vpop.f32.mrf.mxu0
        %v2236 = vadd.f32 %v2051, %v2235
        %v2237 = vpop.f32.mrf.mxu0
        %v2238 = vadd.f32 %v2055, %v2237
        %v2239 = vpop.f32.mrf.mxu0
        %v2240 = vadd.f32 %v2051, %v2239
        %v2241 = vpop.f32.mrf.mxu0
        %v2242 = vadd.f32 %v2055, %v2241
        %2243 = vdwg.mxu0
        %2244 = vmatprep.subr.bf16.mxu0 0
        %2245 = vmatpush1.bf16.msra.mxu0 %v2166
        %2246 = vmatprep.subr.bf16.mxu0 0
        %2247 = vmatpush1.bf16.msra.mxu0 %v2163
        %2248 = vmatprep.subr.bf16.mxu0 0
        %2249 = vmatpush1.bf16.msra.mxu0 %v2160
        %2250 = vmatprep.subr.bf16.mxu0 0
        %2251 = vmatpush1.bf16.msra.mxu0 %v2157
        %2252 = vmatprep.subr.bf16.mxu0 0
        %2253 = vmatpush1.bf16.msra.mxu0 %v2154
        %2254 = vmatprep.subr.bf16.mxu0 0
        %2255 = vmatpush1.bf16.msra.mxu0 %v2151
        %2256 = vmatprep.subr.bf16.mxu0 0
        %2257 = vmatpush1.bf16.msra.mxu0 %v2148
        %2258 = vmatprep.subr.bf16.mxu0 0
        %2259 = vmatpush1.bf16.msra.mxu0 %v2145
        %2260 = vmatprep.subr.bf16.mxu0 0
        %2261 = vmatpush2.bf16.msra.mxu0 0
        %2262 = vmatprep.subr.bf16.mxu0 0
        %2263 = vmatpush2.bf16.msra.mxu0 0
        %2264 = vmatprep.subr.bf16.mxu0 0
        %2265 = vmatpush2.bf16.msra.mxu0 0
        %2266 = vmatprep.subr.bf16.mxu0 0
        %2267 = vmatpush2.bf16.msra.mxu0 0
        %2268 = vmatprep.subr.bf16.mxu0 0
        %2269 = vmatpush2.bf16.msra.mxu0 0
        %2270 = vmatprep.subr.bf16.mxu0 0
        %2271 = vmatpush2.bf16.msra.mxu0 0
        %2272 = vmatprep.subr.bf16.mxu0 0
        %2273 = vmatpush2.bf16.msra.mxu0 0
        %2274 = vmatprep.subr.bf16.mxu0 0
        %2275 = vmatpush2.bf16.msra.mxu0 0
        %2276 = vmatprep.mubr.bf16.mxu0 0
        %2277 = vmatmul.mubr.bf16.gmra.mxu0 %v2045
        %v2278 = vpop.f32.mrf.mxu0
        %v2279 = vadd.f32 %v2059, %v2278
        %v2280 = vpop.f32.mrf.mxu0
        %v2281 = vpop.f32.mrf.mxu0
        %v2282 = vadd.f32 %v2059, %v2281
        %v2283 = vpop.f32.mrf.mxu0
        %2284 = vmatprep.mubr.bf16.mxu0 0
        %2285 = vmatmul.mubr.bf16.gmra.mxu0 %v2046
        %v2286 = vpop.f32.mrf.mxu0
        %v2287 = vadd.f32 %v2059, %v2286
        %v2288 = vpop.f32.mrf.mxu0
        %v2289 = vpop.f32.mrf.mxu0
        %v2290 = vadd.f32 %v2059, %v2289
        %v2291 = vpop.f32.mrf.mxu0
        %2292 = vdwg.mxu0
        %v2293 = vsub.f32 %v2238, %v2228
        %v2294 = vsub.f32 %v2242, %v2232
        %v2295 = vmul.f32 %v2226, %v2293
        %v2296 = vmul.f32 %v2230, %v2294
        %2297 = vadd.xlane.f32.xlu0 %v2295
        %v2298 = vpop.xlane.xlu0 %2297
        %2299 = vadd.xlane.f32.xlu0 %v2296
        %v2300 = vpop.xlane.xlu0 %2299
        %v2301 = vmul.f32 %v2298, 0.088388346
        %v2302 = vmul.f32 %v2300, 0.088388346
        %v2303 = vmul.f32 %v2236, %v2293
        %v2304 = vmul.f32 %v2240, %v2294
        %2305 = vadd.xlane.f32.xlu0 %v2303
        %v2306 = vpop.xlane.xlu0 %2305
        %2307 = vadd.xlane.f32.xlu0 %v2304
        %v2308 = vpop.xlane.xlu0 %2307
        %v2309 = vmul.f32 %v2306, 0.088388346
        %v2310 = vmul.f32 %v2308, 0.088388346
        %v2311 = vmul.f32 %v2301, 1.442695
        %v2312 = vpow.pop %v2311
        %v2313 = vmul.f32 %v2302, 1.442695
        %v2314 = vpow.pop %v2313
        %v2315 = vadd.f32 %v2312, 1.0
        %v2316 = vadd.f32 %v2314, 1.0
        %v2317 = vrcp.pop %v2315
        %v2318 = vrcp.pop %v2316
        %v2319 = vmul.f32 %v2309, 1.442695
        %v2320 = vpow.pop %v2319
        %v2321 = vmul.f32 %v2310, 1.442695
        %v2322 = vpow.pop %v2321
        %v2323 = vadd.f32 %v2320, 1.0
        %v2324 = vadd.f32 %v2322, 1.0
        %v2325 = vrcp.pop %v2323
        %v2326 = vrcp.pop %v2324
        %v2327 = vsub.f32 %v2279, %v2287
        %v2328 = vsub.f32 %v2282, %v2290
        %v2329 = vmul.f32 %v2317, %v2327
        %v2330 = vmul.f32 %v2318, %v2328
        %v2331 = vadd.f32 %v2287, %v2329
        %v2332 = vadd.f32 %v2290, %v2330
        %v2333 = vmul.f32 %v2325, %v2327
        %v2334 = vmul.f32 %v2326, %v2328
        %v2335 = vadd.f32 %v2287, %v2333
        %v2336 = vadd.f32 %v2290, %v2334
        %v2337 = vld [vmem:[%s1205] sm:$0xf]
        %v2338 = vld [vmem:[%s1205 + $0x4] sm:$0xf]
        %v2339 = vld [vmem:[%s1205 + $0x8] sm:$0xf]
        %v2340 = vld [vmem:[%s1205 + $0xc] sm:$0xf]
        %v2341 = vld [vmem:[%s1205 + $0x10] sm:$0xf]
        %v2342 = vld [vmem:[%s1205 + $0x14] sm:$0xf]
        %v2343 = vld [vmem:[%s1205 + $0x18] sm:$0xf]
        %v2344 = vld [vmem:[%s1205 + $0x1c] sm:$0xf]
        %v2345 = vld [vmem:[%s1205 + $0x20] sm:$0xf]
        %v2346 = vld [vmem:[%s1205 + $0x24] sm:$0xf]
        %v2347 = vld [vmem:[%s1205 + $0x28] sm:$0xf]
        %v2348 = vld [vmem:[%s1205 + $0x2c] sm:$0xf]
        %v2349 = vld [vmem:[%s1205 + $0x30] sm:$0xf]
        %v2350 = vld [vmem:[%s1205 + $0x34] sm:$0xf]
        %v2351 = vld [vmem:[%s1205 + $0x38] sm:$0xf]
        %v2352 = vld [vmem:[%s1205 + $0x3c] sm:$0xf]
        %v2353 = vld [vmem:[%s1339] sm:$0x1]
        %v2354 = vpack.c.bf16 %v2332, %v2331
        %v2355 = vpack.c.bf16 %v2336, %v2335
        %v2357 = vlaneseq
        %v2358 = vshrl.u32 %v2357, 7
        %v2359 = vsub.s32 0, %v2358
        %v2360 = vrot.slane %v2353, %v2359
        %v2378 = vunpack.c.l.b16 %v2337
        %v2379 = vunpack.c.l.b16 %v2338
        %v2380 = vunpack.c.l.b16 %v2339
        %v2381 = vunpack.c.l.b16 %v2340
        %v2382 = vunpack.c.l.b16 %v2341
        %v2383 = vunpack.c.l.b16 %v2342
        %v2384 = vunpack.c.l.b16 %v2343
        %v2385 = vunpack.c.l.b16 %v2344
        %v2386 = vunpack.c.l.b16 %v2345
        %v2387 = vunpack.c.l.b16 %v2346
        %v2388 = vunpack.c.l.b16 %v2347
        %v2389 = vunpack.c.l.b16 %v2348
        %v2390 = vunpack.c.l.b16 %v2349
        %v2391 = vunpack.c.l.b16 %v2350
        %v2392 = vunpack.c.l.b16 %v2351
        %v2393 = vunpack.c.l.b16 %v2352
        %v2394 = vpack.c.b16 %v2379, %v2378
        %v2395 = vpack.c.b16 %v2381, %v2380
        %v2396 = vpack.c.b16 %v2383, %v2382
        %v2397 = vpack.c.b16 %v2385, %v2384
        %v2398 = vpack.c.b16 %v2387, %v2386
        %v2399 = vpack.c.b16 %v2389, %v2388
        %v2400 = vpack.c.b16 %v2391, %v2390
        %v2401 = vpack.c.b16 %v2393, %v2392
        %2410 = vmatprep.subr.bf16.mxu0 0
        %2411 = vmatpush1.bf16.msra.mxu0 %v2401
        %2412 = vmatprep.subr.bf16.mxu0 0
        %2413 = vmatpush1.bf16.msra.mxu0 %v2400
        %2414 = vmatprep.subr.bf16.mxu0 0
        %2415 = vmatpush1.bf16.msra.mxu0 %v2399
        %2416 = vmatprep.subr.bf16.mxu0 0
        %2417 = vmatpush1.bf16.msra.mxu0 %v2398
        %2418 = vmatprep.subr.bf16.mxu0 0
        %2419 = vmatpush1.bf16.msra.mxu0 %v2397
        %2420 = vmatprep.subr.bf16.mxu0 0
        %2421 = vmatpush1.bf16.msra.mxu0 %v2396
        %2422 = vmatprep.subr.bf16.mxu0 0
        %2423 = vmatpush1.bf16.msra.mxu0 %v2395
        %2424 = vmatprep.subr.bf16.mxu0 0
        %2425 = vmatpush1.bf16.msra.mxu0 %v2394
        %2426 = vmatprep.subr.bf16.mxu0 0
        %2427 = vmatpush2.bf16.msra.mxu0 0
        %2428 = vmatprep.subr.bf16.mxu0 0
        %2429 = vmatpush2.bf16.msra.mxu0 0
        %2430 = vmatprep.subr.bf16.mxu0 0
        %2431 = vmatpush2.bf16.msra.mxu0 0
        %2432 = vmatprep.subr.bf16.mxu0 0
        %2433 = vmatpush2.bf16.msra.mxu0 0
        %2434 = vmatprep.subr.bf16.mxu0 0
        %2435 = vmatpush2.bf16.msra.mxu0 0
        %2436 = vmatprep.subr.bf16.mxu0 0
        %2437 = vmatpush2.bf16.msra.mxu0 0
        %2438 = vmatprep.subr.bf16.mxu0 0
        %2439 = vmatpush2.bf16.msra.mxu0 0
        %2440 = vmatprep.subr.bf16.mxu0 0
        %2441 = vmatpush2.bf16.msra.mxu0 0
        %2442 = vmatprep.mubr.bf16.mxu0 0
        %2443 = vmatmul.mubr.bf16.gmra.mxu0 %v2354
        %v2444 = vpop.f32.mrf.mxu0
        %v2445 = vadd.f32 %v2360, %v2444
        %v2446 = vpop.f32.mrf.mxu0
        %v2447 = vpop.f32.mrf.mxu0
        %v2448 = vadd.f32 %v2360, %v2447
        %v2449 = vpop.f32.mrf.mxu0
        %2450 = vmatprep.mubr.bf16.mxu0 0
        %2451 = vmatmul.mubr.bf16.gmra.mxu0 %v2355
        %v2452 = vpop.f32.mrf.mxu0
        %v2453 = vadd.f32 %v2360, %v2452
        %v2454 = vpop.f32.mrf.mxu0
        %v2455 = vpop.f32.mrf.mxu0
        %v2456 = vadd.f32 %v2360, %v2455
        %v2457 = vpop.f32.mrf.mxu0
        %2458 = vdwg.mxu0
        %v2459 = vadd.f32 %v2008, %v2445
        %v2460 = vadd.f32 %v2009, %v2448
        %v2461 = vadd.f32 %v2010, %v2453
        %v2462 = vadd.f32 %v2011, %v2456
        %v2463 = vld [vmem:[%s1342] sm:$0x1]
        %v2464 = vld [vmem:[%s1345] sm:$0x1]
        %2465 = vadd.xlane.f32.xlu0 %v2459
        %v2466 = vpop.xlane.xlu0 %2465
        %2467 = vadd.xlane.f32.xlu0 %v2460
        %v2468 = vpop.xlane.xlu0 %2467
        %2469 = vadd.xlane.f32.xlu0 %v2461
        %v2470 = vpop.xlane.xlu0 %2469
        %2471 = vadd.xlane.f32.xlu0 %v2462
        %v2472 = vpop.xlane.xlu0 %2471
        %v2473 = vrcp.pop 128.0
        %v2474 = vmul.f32 %v2466, %v2473
        %v2475 = vmul.f32 %v2468, %v2473
        %v2476 = vmul.f32 %v2470, %v2473
        %v2477 = vmul.f32 %v2472, %v2473
        %v2478 = vsub.f32 %v2459, %v2474
        %v2479 = vsub.f32 %v2460, %v2475
        %v2480 = vsub.f32 %v2461, %v2476
        %v2481 = vsub.f32 %v2462, %v2477
        %v2482 = vmul.f32 %v2478, %v2478
        %v2483 = vmul.f32 %v2479, %v2479
        %v2484 = vmul.f32 %v2480, %v2480
        %v2485 = vmul.f32 %v2481, %v2481
        %2486 = vadd.xlane.f32.xlu0 %v2482
        %v2487 = vpop.xlane.xlu0 %2486
        %2488 = vadd.xlane.f32.xlu0 %v2483
        %v2489 = vpop.xlane.xlu0 %2488
        %2490 = vadd.xlane.f32.xlu0 %v2484
        %v2491 = vpop.xlane.xlu0 %2490
        %2492 = vadd.xlane.f32.xlu0 %v2485
        %v2493 = vpop.xlane.xlu0 %2492
        %v2494 = vmul.f32 %v2487, %v2473
        %v2495 = vmul.f32 %v2489, %v2473
        %v2496 = vmul.f32 %v2491, %v2473
        %v2497 = vmul.f32 %v2493, %v2473
        %v2498 = vadd.f32 %v2494, 1e-05
        %v2499 = vadd.f32 %v2495, 1e-05
        %v2500 = vadd.f32 %v2496, 1e-05
        %v2501 = vadd.f32 %v2497, 1e-05
        %v2502 = vrsqrt.pop %v2498
        %v2503 = vrsqrt.pop %v2499
        %v2504 = vrsqrt.pop %v2500
        %v2505 = vrsqrt.pop %v2501
        %v2506 = vmul.f32 %v2478, %v2502
        %v2507 = vmul.f32 %v2479, %v2503
        %v2508 = vmul.f32 %v2480, %v2504
        %v2509 = vmul.f32 %v2481, %v2505
        %v2511 = vlaneseq
        %v2512 = vshrl.u32 %v2511, 7
        %v2513 = vsub.s32 0, %v2512
        %v2514 = vrot.slane %v2463, %v2513
        %v2516 = vmul.f32 %v2506, %v2514
        %v2517 = vmul.f32 %v2507, %v2514
        %v2518 = vmul.f32 %v2508, %v2514
        %v2519 = vmul.f32 %v2509, %v2514
        %v2521 = vlaneseq
        %v2522 = vshrl.u32 %v2521, 7
        %v2523 = vsub.s32 0, %v2522
        %v2524 = vrot.slane %v2464, %v2523
        %v2526 = vadd.f32 %v2516, %v2524
        %v2527 = vadd.f32 %v2517, %v2524
        %v2528 = vadd.f32 %v2518, %v2524
        %v2529 = vadd.f32 %v2519, %v2524
        %v2530 = vld [vmem:[%s1214] sm:$0xff]
        %v2531 = vld [vmem:[%s1214 + $0x8] sm:$0xff]
        %v2532 = vld [vmem:[%s1214 + $0x10] sm:$0xff]
        %v2533 = vld [vmem:[%s1214 + $0x18] sm:$0xff]
        %v2534 = vld [vmem:[%s1214 + $0x20] sm:$0xff]
        %v2535 = vld [vmem:[%s1214 + $0x28] sm:$0xff]
        %v2536 = vld [vmem:[%s1214 + $0x30] sm:$0xff]
        %v2537 = vld [vmem:[%s1214 + $0x38] sm:$0xff]
        %v2538 = vld [vmem:[%s1214 + $0x40] sm:$0xff]
        %v2539 = vld [vmem:[%s1214 + $0x48] sm:$0xff]
        %v2540 = vld [vmem:[%s1214 + $0x50] sm:$0xff]
        %v2541 = vld [vmem:[%s1214 + $0x58] sm:$0xff]
        %v2542 = vld [vmem:[%s1214 + $0x60] sm:$0xff]
        %v2543 = vld [vmem:[%s1214 + $0x68] sm:$0xff]
        %v2544 = vld [vmem:[%s1214 + $0x70] sm:$0xff]
        %v2545 = vld [vmem:[%s1214 + $0x78] sm:$0xff]
        %v2546 = vld [vmem:[%s1214 + $0x80] sm:$0xff]
        %v2547 = vld [vmem:[%s1214 + $0x88] sm:$0xff]
        %v2548 = vld [vmem:[%s1214 + $0x90] sm:$0xff]
        %v2549 = vld [vmem:[%s1214 + $0x98] sm:$0xff]
        %v2550 = vld [vmem:[%s1214 + $0xa0] sm:$0xff]
        %v2551 = vld [vmem:[%s1214 + $0xa8] sm:$0xff]
        %v2552 = vld [vmem:[%s1214 + $0xb0] sm:$0xff]
        %v2553 = vld [vmem:[%s1214 + $0xb8] sm:$0xff]
        %v2554 = vld [vmem:[%s1214 + $0xc0] sm:$0xff]
        %v2555 = vld [vmem:[%s1214 + $0xc8] sm:$0xff]
        %v2556 = vld [vmem:[%s1214 + $0xd0] sm:$0xff]
        %v2557 = vld [vmem:[%s1214 + $0xd8] sm:$0xff]
        %v2558 = vld [vmem:[%s1214 + $0xe0] sm:$0xff]
        %v2559 = vld [vmem:[%s1214 + $0xe8] sm:$0xff]
        %v2560 = vld [vmem:[%s1214 + $0xf0] sm:$0xff]
        %v2561 = vld [vmem:[%s1214 + $0xf8] sm:$0xff]
        %v2562 = vld [vmem:[%s1355] sm:$0xf]
        %v2563 = vpack.c.bf16 %v2527, %v2526
        %v2564 = vpack.c.bf16 %v2529, %v2528
        %v2566 = vlaneseq
        %v2567 = vshrl.u32 %v2566, 7
        %v2568 = vsub.s32 0, %v2567
        %v2569 = vrot.slane %v2562, %v2568
        %v2570 = vlaneseq
        %v2571 = vshrl.u32 %v2570, 7
        %v2572 = vsub.s32 1, %v2571
        %v2573 = vrot.slane %v2562, %v2572
        %v2574 = vlaneseq
        %v2575 = vshrl.u32 %v2574, 7
        %v2576 = vsub.s32 2, %v2575
        %v2577 = vrot.slane %v2562, %v2576
        %v2578 = vlaneseq
        %v2579 = vshrl.u32 %v2578, 7
        %v2580 = vsub.s32 3, %v2579
        %v2581 = vrot.slane %v2562, %v2580
        %v2618 = vunpack.c.l.b16 %v2530
        %v2619 = vunpack.c.h.b16 %v2530
        %v2620 = vunpack.c.l.b16 %v2531
        %v2621 = vunpack.c.h.b16 %v2531
        %v2622 = vunpack.c.l.b16 %v2532
        %v2623 = vunpack.c.h.b16 %v2532
        %v2624 = vunpack.c.l.b16 %v2533
        %v2625 = vunpack.c.h.b16 %v2533
        %v2626 = vunpack.c.l.b16 %v2534
        %v2627 = vunpack.c.h.b16 %v2534
        %v2628 = vunpack.c.l.b16 %v2535
        %v2629 = vunpack.c.h.b16 %v2535
        %v2630 = vunpack.c.l.b16 %v2536
        %v2631 = vunpack.c.h.b16 %v2536
        %v2632 = vunpack.c.l.b16 %v2537
        %v2633 = vunpack.c.h.b16 %v2537
        %v2634 = vunpack.c.l.b16 %v2538
        %v2635 = vunpack.c.h.b16 %v2538
        %v2636 = vunpack.c.l.b16 %v2539
        %v2637 = vunpack.c.h.b16 %v2539
        %v2638 = vunpack.c.l.b16 %v2540
        %v2639 = vunpack.c.h.b16 %v2540
        %v2640 = vunpack.c.l.b16 %v2541
        %v2641 = vunpack.c.h.b16 %v2541
        %v2642 = vunpack.c.l.b16 %v2542
        %v2643 = vunpack.c.h.b16 %v2542
        %v2644 = vunpack.c.l.b16 %v2543
        %v2645 = vunpack.c.h.b16 %v2543
        %v2646 = vunpack.c.l.b16 %v2544
        %v2647 = vunpack.c.h.b16 %v2544
        %v2648 = vunpack.c.l.b16 %v2545
        %v2649 = vunpack.c.h.b16 %v2545
        %v2650 = vunpack.c.l.b16 %v2546
        %v2651 = vunpack.c.h.b16 %v2546
        %v2652 = vunpack.c.l.b16 %v2547
        %v2653 = vunpack.c.h.b16 %v2547
        %v2654 = vunpack.c.l.b16 %v2548
        %v2655 = vunpack.c.h.b16 %v2548
        %v2656 = vunpack.c.l.b16 %v2549
        %v2657 = vunpack.c.h.b16 %v2549
        %v2658 = vunpack.c.l.b16 %v2550
        %v2659 = vunpack.c.h.b16 %v2550
        %v2660 = vunpack.c.l.b16 %v2551
        %v2661 = vunpack.c.h.b16 %v2551
        %v2662 = vunpack.c.l.b16 %v2552
        %v2663 = vunpack.c.h.b16 %v2552
        %v2664 = vunpack.c.l.b16 %v2553
        %v2665 = vunpack.c.h.b16 %v2553
        %v2666 = vunpack.c.l.b16 %v2554
        %v2667 = vunpack.c.h.b16 %v2554
        %v2668 = vunpack.c.l.b16 %v2555
        %v2669 = vunpack.c.h.b16 %v2555
        %v2670 = vunpack.c.l.b16 %v2556
        %v2671 = vunpack.c.h.b16 %v2556
        %v2672 = vunpack.c.l.b16 %v2557
        %v2673 = vunpack.c.h.b16 %v2557
        %v2674 = vunpack.c.l.b16 %v2558
        %v2675 = vunpack.c.h.b16 %v2558
        %v2676 = vunpack.c.l.b16 %v2559
        %v2677 = vunpack.c.h.b16 %v2559
        %v2678 = vunpack.c.l.b16 %v2560
        %v2679 = vunpack.c.h.b16 %v2560
        %v2680 = vunpack.c.l.b16 %v2561
        %v2681 = vunpack.c.h.b16 %v2561
        %v2682 = vpack.c.b16 %v2622, %v2618
        %v2683 = vpack.c.b16 %v2623, %v2619
        %v2684 = vpack.c.b16 %v2624, %v2620
        %v2685 = vpack.c.b16 %v2625, %v2621
        %v2686 = vpack.c.b16 %v2630, %v2626
        %v2687 = vpack.c.b16 %v2631, %v2627
        %v2688 = vpack.c.b16 %v2632, %v2628
        %v2689 = vpack.c.b16 %v2633, %v2629
        %v2690 = vpack.c.b16 %v2638, %v2634
        %v2691 = vpack.c.b16 %v2639, %v2635
        %v2692 = vpack.c.b16 %v2640, %v2636
        %v2693 = vpack.c.b16 %v2641, %v2637
        %v2694 = vpack.c.b16 %v2646, %v2642
        %v2695 = vpack.c.b16 %v2647, %v2643
        %v2696 = vpack.c.b16 %v2648, %v2644
        %v2697 = vpack.c.b16 %v2649, %v2645
        %v2698 = vpack.c.b16 %v2654, %v2650
        %v2699 = vpack.c.b16 %v2655, %v2651
        %v2700 = vpack.c.b16 %v2656, %v2652
        %v2701 = vpack.c.b16 %v2657, %v2653
        %v2702 = vpack.c.b16 %v2662, %v2658
        %v2703 = vpack.c.b16 %v2663, %v2659
        %v2704 = vpack.c.b16 %v2664, %v2660
        %v2705 = vpack.c.b16 %v2665, %v2661
        %v2706 = vpack.c.b16 %v2670, %v2666
        %v2707 = vpack.c.b16 %v2671, %v2667
        %v2708 = vpack.c.b16 %v2672, %v2668
        %v2709 = vpack.c.b16 %v2673, %v2669
        %v2710 = vpack.c.b16 %v2678, %v2674
        %v2711 = vpack.c.b16 %v2679, %v2675
        %v2712 = vpack.c.b16 %v2680, %v2676
        %v2713 = vpack.c.b16 %v2681, %v2677
        %2746 = vmatprep.subr.bf16.mxu0 %v2711
        %2747 = vmatpush1.bf16.msra.mxu0 %v2710
        %2748 = vmatprep.subr.bf16.mxu0 %v2707
        %2749 = vmatpush1.bf16.msra.mxu0 %v2706
        %2750 = vmatprep.subr.bf16.mxu0 %v2703
        %2751 = vmatpush1.bf16.msra.mxu0 %v2702
        %2752 = vmatprep.subr.bf16.mxu0 %v2699
        %2753 = vmatpush1.bf16.msra.mxu0 %v2698
        %2754 = vmatprep.subr.bf16.mxu0 %v2695
        %2755 = vmatpush1.bf16.msra.mxu0 %v2694
        %2756 = vmatprep.subr.bf16.mxu0 %v2691
        %2757 = vmatpush1.bf16.msra.mxu0 %v2690
        %2758 = vmatprep.subr.bf16.mxu0 %v2687
        %2759 = vmatpush1.bf16.msra.mxu0 %v2686
        %2760 = vmatprep.subr.bf16.mxu0 %v2683
        %2761 = vmatpush1.bf16.msra.mxu0 %v2682
        %2762 = vmatprep.subr.bf16.mxu0 0
        %2763 = vmatpush2.bf16.msra.mxu0 0
        %2764 = vmatprep.subr.bf16.mxu0 0
        %2765 = vmatpush2.bf16.msra.mxu0 0
        %2766 = vmatprep.subr.bf16.mxu0 0
        %2767 = vmatpush2.bf16.msra.mxu0 0
        %2768 = vmatprep.subr.bf16.mxu0 0
        %2769 = vmatpush2.bf16.msra.mxu0 0
        %2770 = vmatprep.subr.bf16.mxu0 0
        %2771 = vmatpush2.bf16.msra.mxu0 0
        %2772 = vmatprep.subr.bf16.mxu0 0
        %2773 = vmatpush2.bf16.msra.mxu0 0
        %2774 = vmatprep.subr.bf16.mxu0 0
        %2775 = vmatpush2.bf16.msra.mxu0 0
        %2776 = vmatprep.subr.bf16.mxu0 0
        %2777 = vmatpush2.bf16.msra.mxu0 0
        %2778 = vmatprep.mubr.bf16.mxu0 0
        %2779 = vmatmul.mubr.bf16.gmra.mxu0 %v2563
        %v2780 = vpop.f32.mrf.mxu0
        %v2781 = vadd.f32 %v2569, %v2780
        %v2782 = vpop.f32.mrf.mxu0
        %v2783 = vadd.f32 %v2573, %v2782
        %v2784 = vpop.f32.mrf.mxu0
        %v2785 = vadd.f32 %v2569, %v2784
        %v2786 = vpop.f32.mrf.mxu0
        %v2787 = vadd.f32 %v2573, %v2786
        %2788 = vmatprep.mubr.bf16.mxu0 0
        %2789 = vmatmul.mubr.bf16.gmra.mxu0 %v2564
        %v2790 = vpop.f32.mrf.mxu0
        %v2791 = vadd.f32 %v2569, %v2790
        %v2792 = vpop.f32.mrf.mxu0
        %v2793 = vadd.f32 %v2573, %v2792
        %v2794 = vpop.f32.mrf.mxu0
        %v2795 = vadd.f32 %v2569, %v2794
        %v2796 = vpop.f32.mrf.mxu0
        %v2797 = vadd.f32 %v2573, %v2796
        %2798 = vdwg.mxu0
        %2799 = vmatprep.subr.bf16.mxu0 %v2713
        %2800 = vmatpush1.bf16.msra.mxu0 %v2712
        %2801 = vmatprep.subr.bf16.mxu0 %v2709
        %2802 = vmatpush1.bf16.msra.mxu0 %v2708
        %2803 = vmatprep.subr.bf16.mxu0 %v2705
        %2804 = vmatpush1.bf16.msra.mxu0 %v2704
        %2805 = vmatprep.subr.bf16.mxu0 %v2701
        %2806 = vmatpush1.bf16.msra.mxu0 %v2700
        %2807 = vmatprep.subr.bf16.mxu0 %v2697
        %2808 = vmatpush1.bf16.msra.mxu0 %v2696
        %2809 = vmatprep.subr.bf16.mxu0 %v2693
        %2810 = vmatpush1.bf16.msra.mxu0 %v2692
        %2811 = vmatprep.subr.bf16.mxu0 %v2689
        %2812 = vmatpush1.bf16.msra.mxu0 %v2688
        %2813 = vmatprep.subr.bf16.mxu0 %v2685
        %2814 = vmatpush1.bf16.msra.mxu0 %v2684
        %2815 = vmatprep.subr.bf16.mxu0 0
        %2816 = vmatpush2.bf16.msra.mxu0 0
        %2817 = vmatprep.subr.bf16.mxu0 0
        %2818 = vmatpush2.bf16.msra.mxu0 0
        %2819 = vmatprep.subr.bf16.mxu0 0
        %2820 = vmatpush2.bf16.msra.mxu0 0
        %2821 = vmatprep.subr.bf16.mxu0 0
        %2822 = vmatpush2.bf16.msra.mxu0 0
        %2823 = vmatprep.subr.bf16.mxu0 0
        %2824 = vmatpush2.bf16.msra.mxu0 0
        %2825 = vmatprep.subr.bf16.mxu0 0
        %2826 = vmatpush2.bf16.msra.mxu0 0
        %2827 = vmatprep.subr.bf16.mxu0 0
        %2828 = vmatpush2.bf16.msra.mxu0 0
        %2829 = vmatprep.subr.bf16.mxu0 0
        %2830 = vmatpush2.bf16.msra.mxu0 0
        %2831 = vmatprep.mubr.bf16.mxu0 0
        %2832 = vmatmul.mubr.bf16.gmra.mxu0 %v2563
        %v2833 = vpop.f32.mrf.mxu0
        %v2834 = vadd.f32 %v2577, %v2833
        %v2835 = vpop.f32.mrf.mxu0
        %v2836 = vadd.f32 %v2581, %v2835
        %v2837 = vpop.f32.mrf.mxu0
        %v2838 = vadd.f32 %v2577, %v2837
        %v2839 = vpop.f32.mrf.mxu0
        %v2840 = vadd.f32 %v2581, %v2839
        %2841 = vmatprep.mubr.bf16.mxu0 0
        %2842 = vmatmul.mubr.bf16.gmra.mxu0 %v2564
        %v2843 = vpop.f32.mrf.mxu0
        %v2844 = vadd.f32 %v2577, %v2843
        %v2845 = vpop.f32.mrf.mxu0
        %v2846 = vadd.f32 %v2581, %v2845
        %v2847 = vpop.f32.mrf.mxu0
        %v2848 = vadd.f32 %v2577, %v2847
        %v2849 = vpop.f32.mrf.mxu0
        %v2850 = vadd.f32 %v2581, %v2849
        %2851 = vdwg.mxu0
        %v2852 = vmax.f32 %v2781, 0.0
        %v2853 = vmax.f32 %v2783, 0.0
        %v2854 = vmax.f32 %v2834, 0.0
        %v2855 = vmax.f32 %v2836, 0.0
        %v2856 = vmax.f32 %v2785, 0.0
        %v2857 = vmax.f32 %v2787, 0.0
        %v2858 = vmax.f32 %v2838, 0.0
        %v2859 = vmax.f32 %v2840, 0.0
        %v2860 = vmax.f32 %v2791, 0.0
        %v2861 = vmax.f32 %v2793, 0.0
        %v2862 = vmax.f32 %v2844, 0.0
        %v2863 = vmax.f32 %v2846, 0.0
        %v2864 = vmax.f32 %v2795, 0.0
        %v2865 = vmax.f32 %v2797, 0.0
        %v2866 = vmax.f32 %v2848, 0.0
        %v2867 = vmax.f32 %v2850, 0.0
        %v2868 = vld [vmem:[%s1223] sm:$0xf]
        %v2869 = vld [vmem:[%s1223 + $0x4] sm:$0xf]
        %v2870 = vld [vmem:[%s1223 + $0x8] sm:$0xf]
        %v2871 = vld [vmem:[%s1223 + $0xc] sm:$0xf]
        %v2872 = vld [vmem:[%s1223 + $0x10] sm:$0xf]
        %v2873 = vld [vmem:[%s1223 + $0x14] sm:$0xf]
        %v2874 = vld [vmem:[%s1223 + $0x18] sm:$0xf]
        %v2875 = vld [vmem:[%s1223 + $0x1c] sm:$0xf]
        %v2876 = vld [vmem:[%s1223 + $0x20] sm:$0xf]
        %v2877 = vld [vmem:[%s1223 + $0x24] sm:$0xf]
        %v2878 = vld [vmem:[%s1223 + $0x28] sm:$0xf]
        %v2879 = vld [vmem:[%s1223 + $0x2c] sm:$0xf]
        %v2880 = vld [vmem:[%s1223 + $0x30] sm:$0xf]
        %v2881 = vld [vmem:[%s1223 + $0x34] sm:$0xf]
        %v2882 = vld [vmem:[%s1223 + $0x38] sm:$0xf]
        %v2883 = vld [vmem:[%s1223 + $0x3c] sm:$0xf]
        %v2884 = vld [vmem:[%s1223 + $0x40] sm:$0xf]
        %v2885 = vld [vmem:[%s1223 + $0x44] sm:$0xf]
        %v2886 = vld [vmem:[%s1223 + $0x48] sm:$0xf]
        %v2887 = vld [vmem:[%s1223 + $0x4c] sm:$0xf]
        %v2888 = vld [vmem:[%s1223 + $0x50] sm:$0xf]
        %v2889 = vld [vmem:[%s1223 + $0x54] sm:$0xf]
        %v2890 = vld [vmem:[%s1223 + $0x58] sm:$0xf]
        %v2891 = vld [vmem:[%s1223 + $0x5c] sm:$0xf]
        %v2892 = vld [vmem:[%s1223 + $0x60] sm:$0xf]
        %v2893 = vld [vmem:[%s1223 + $0x64] sm:$0xf]
        %v2894 = vld [vmem:[%s1223 + $0x68] sm:$0xf]
        %v2895 = vld [vmem:[%s1223 + $0x6c] sm:$0xf]
        %v2896 = vld [vmem:[%s1223 + $0x70] sm:$0xf]
        %v2897 = vld [vmem:[%s1223 + $0x74] sm:$0xf]
        %v2898 = vld [vmem:[%s1223 + $0x78] sm:$0xf]
        %v2899 = vld [vmem:[%s1223 + $0x7c] sm:$0xf]
        %v2900 = vld [vmem:[%s1223 + $0x80] sm:$0xf]
        %v2901 = vld [vmem:[%s1223 + $0x84] sm:$0xf]
        %v2902 = vld [vmem:[%s1223 + $0x88] sm:$0xf]
        %v2903 = vld [vmem:[%s1223 + $0x8c] sm:$0xf]
        %v2904 = vld [vmem:[%s1223 + $0x90] sm:$0xf]
        %v2905 = vld [vmem:[%s1223 + $0x94] sm:$0xf]
        %v2906 = vld [vmem:[%s1223 + $0x98] sm:$0xf]
        %v2907 = vld [vmem:[%s1223 + $0x9c] sm:$0xf]
        %v2908 = vld [vmem:[%s1223 + $0xa0] sm:$0xf]
        %v2909 = vld [vmem:[%s1223 + $0xa4] sm:$0xf]
        %v2910 = vld [vmem:[%s1223 + $0xa8] sm:$0xf]
        %v2911 = vld [vmem:[%s1223 + $0xac] sm:$0xf]
        %v2912 = vld [vmem:[%s1223 + $0xb0] sm:$0xf]
        %v2913 = vld [vmem:[%s1223 + $0xb4] sm:$0xf]
        %v2914 = vld [vmem:[%s1223 + $0xb8] sm:$0xf]
        %v2915 = vld [vmem:[%s1223 + $0xbc] sm:$0xf]
        %v2916 = vld [vmem:[%s1223 + $0xc0] sm:$0xf]
        %v2917 = vld [vmem:[%s1223 + $0xc4] sm:$0xf]
        %v2918 = vld [vmem:[%s1223 + $0xc8] sm:$0xf]
        %v2919 = vld [vmem:[%s1223 + $0xcc] sm:$0xf]
        %v2920 = vld [vmem:[%s1223 + $0xd0] sm:$0xf]
        %v2921 = vld [vmem:[%s1223 + $0xd4] sm:$0xf]
        %v2922 = vld [vmem:[%s1223 + $0xd8] sm:$0xf]
        %v2923 = vld [vmem:[%s1223 + $0xdc] sm:$0xf]
        %v2924 = vld [vmem:[%s1223 + $0xe0] sm:$0xf]
        %v2925 = vld [vmem:[%s1223 + $0xe4] sm:$0xf]
        %v2926 = vld [vmem:[%s1223 + $0xe8] sm:$0xf]
        %v2927 = vld [vmem:[%s1223 + $0xec] sm:$0xf]
        %v2928 = vld [vmem:[%s1223 + $0xf0] sm:$0xf]
        %v2929 = vld [vmem:[%s1223 + $0xf4] sm:$0xf]
        %v2930 = vld [vmem:[%s1223 + $0xf8] sm:$0xf]
        %v2931 = vld [vmem:[%s1223 + $0xfc] sm:$0xf]
        %v2932 = vld [vmem:[%s1358] sm:$0x1]
        %v2933 = vpack.c.bf16 %v2856, %v2852
        %v2934 = vpack.c.bf16 %v2857, %v2853
        %v2935 = vpack.c.bf16 %v2858, %v2854
        %v2936 = vpack.c.bf16 %v2859, %v2855
        %v2937 = vpack.c.bf16 %v2864, %v2860
        %v2938 = vpack.c.bf16 %v2865, %v2861
        %v2939 = vpack.c.bf16 %v2866, %v2862
        %v2940 = vpack.c.bf16 %v2867, %v2863
        %v2942 = vlaneseq
        %v2943 = vshrl.u32 %v2942, 7
        %v2944 = vsub.s32 0, %v2943
        %v2945 = vrot.slane %v2932, %v2944
        %v3011 = vunpack.c.l.b16 %v2868
        %v3012 = vunpack.c.l.b16 %v2869
        %v3013 = vunpack.c.l.b16 %v2870
        %v3014 = vunpack.c.l.b16 %v2871
        %v3015 = vunpack.c.l.b16 %v2872
        %v3016 = vunpack.c.l.b16 %v2873
        %v3017 = vunpack.c.l.b16 %v2874
        %v3018 = vunpack.c.l.b16 %v2875
        %v3019 = vunpack.c.l.b16 %v2876
        %v3020 = vunpack.c.l.b16 %v2877
        %v3021 = vunpack.c.l.b16 %v2878
        %v3022 = vunpack.c.l.b16 %v2879
        %v3023 = vunpack.c.l.b16 %v2880
        %v3024 = vunpack.c.l.b16 %v2881
        %v3025 = vunpack.c.l.b16 %v2882
        %v3026 = vunpack.c.l.b16 %v2883
        %v3027 = vunpack.c.l.b16 %v2884
        %v3028 = vunpack.c.l.b16 %v2885
        %v3029 = vunpack.c.l.b16 %v2886
        %v3030 = vunpack.c.l.b16 %v2887
        %v3031 = vunpack.c.l.b16 %v2888
        %v3032 = vunpack.c.l.b16 %v2889
        %v3033 = vunpack.c.l.b16 %v2890
        %v3034 = vunpack.c.l.b16 %v2891
        %v3035 = vunpack.c.l.b16 %v2892
        %v3036 = vunpack.c.l.b16 %v2893
        %v3037 = vunpack.c.l.b16 %v2894
        %v3038 = vunpack.c.l.b16 %v2895
        %v3039 = vunpack.c.l.b16 %v2896
        %v3040 = vunpack.c.l.b16 %v2897
        %v3041 = vunpack.c.l.b16 %v2898
        %v3042 = vunpack.c.l.b16 %v2899
        %v3043 = vunpack.c.l.b16 %v2900
        %v3044 = vunpack.c.l.b16 %v2901
        %v3045 = vunpack.c.l.b16 %v2902
        %v3046 = vunpack.c.l.b16 %v2903
        %v3047 = vunpack.c.l.b16 %v2904
        %v3048 = vunpack.c.l.b16 %v2905
        %v3049 = vunpack.c.l.b16 %v2906
        %v3050 = vunpack.c.l.b16 %v2907
        %v3051 = vunpack.c.l.b16 %v2908
        %v3052 = vunpack.c.l.b16 %v2909
        %v3053 = vunpack.c.l.b16 %v2910
        %v3054 = vunpack.c.l.b16 %v2911
        %v3055 = vunpack.c.l.b16 %v2912
        %v3056 = vunpack.c.l.b16 %v2913
        %v3057 = vunpack.c.l.b16 %v2914
        %v3058 = vunpack.c.l.b16 %v2915
        %v3059 = vunpack.c.l.b16 %v2916
        %v3060 = vunpack.c.l.b16 %v2917
        %v3061 = vunpack.c.l.b16 %v2918
        %v3062 = vunpack.c.l.b16 %v2919
        %v3063 = vunpack.c.l.b16 %v2920
        %v3064 = vunpack.c.l.b16 %v2921
        %v3065 = vunpack.c.l.b16 %v2922
        %v3066 = vunpack.c.l.b16 %v2923
        %v3067 = vunpack.c.l.b16 %v2924
        %v3068 = vunpack.c.l.b16 %v2925
        %v3069 = vunpack.c.l.b16 %v2926
        %v3070 = vunpack.c.l.b16 %v2927
        %v3071 = vunpack.c.l.b16 %v2928
        %v3072 = vunpack.c.l.b16 %v2929
        %v3073 = vunpack.c.l.b16 %v2930
        %v3074 = vunpack.c.l.b16 %v2931
        %v3075 = vpack.c.b16 %v3012, %v3011
        %v3076 = vpack.c.b16 %v3014, %v3013
        %v3077 = vpack.c.b16 %v3016, %v3015
        %v3078 = vpack.c.b16 %v3018, %v3017
        %v3079 = vpack.c.b16 %v3020, %v3019
        %v3080 = vpack.c.b16 %v3022, %v3021
        %v3081 = vpack.c.b16 %v3024, %v3023
        %v3082 = vpack.c.b16 %v3026, %v3025
        %v3083 = vpack.c.b16 %v3028, %v3027
        %v3084 = vpack.c.b16 %v3030, %v3029
        %v3085 = vpack.c.b16 %v3032, %v3031
        %v3086 = vpack.c.b16 %v3034, %v3033
        %v3087 = vpack.c.b16 %v3036, %v3035
        %v3088 = vpack.c.b16 %v3038, %v3037
        %v3089 = vpack.c.b16 %v3040, %v3039
        %v3090 = vpack.c.b16 %v3042, %v3041
        %v3091 = vpack.c.b16 %v3044, %v3043
        %v3092 = vpack.c.b16 %v3046, %v3045
        %v3093 = vpack.c.b16 %v3048, %v3047
        %v3094 = vpack.c.b16 %v3050, %v3049
        %v3095 = vpack.c.b16 %v3052, %v3051
        %v3096 = vpack.c.b16 %v3054, %v3053
        %v3097 = vpack.c.b16 %v3056, %v3055
        %v3098 = vpack.c.b16 %v3058, %v3057
        %v3099 = vpack.c.b16 %v3060, %v3059
        %v3100 = vpack.c.b16 %v3062, %v3061
        %v3101 = vpack.c.b16 %v3064, %v3063
        %v3102 = vpack.c.b16 %v3066, %v3065
        %v3103 = vpack.c.b16 %v3068, %v3067
        %v3104 = vpack.c.b16 %v3070, %v3069
        %v3105 = vpack.c.b16 %v3072, %v3071
        %v3106 = vpack.c.b16 %v3074, %v3073
        %3139 = vmatprep.subr.bf16.mxu0 0
        %3140 = vmatpush1.bf16.msra.mxu0 %v3082
        %3141 = vmatprep.subr.bf16.mxu0 0
        %3142 = vmatpush1.bf16.msra.mxu0 %v3081
        %3143 = vmatprep.subr.bf16.mxu0 0
        %3144 = vmatpush1.bf16.msra.mxu0 %v3080
        %3145 = vmatprep.subr.bf16.mxu0 0
        %3146 = vmatpush1.bf16.msra.mxu0 %v3079
        %3147 = vmatprep.subr.bf16.mxu0 0
        %3148 = vmatpush1.bf16.msra.mxu0 %v3078
        %3149 = vmatprep.subr.bf16.mxu0 0
        %3150 = vmatpush1.bf16.msra.mxu0 %v3077
        %3151 = vmatprep.subr.bf16.mxu0 0
        %3152 = vmatpush1.bf16.msra.mxu0 %v3076
        %3153 = vmatprep.subr.bf16.mxu0 0
        %3154 = vmatpush1.bf16.msra.mxu0 %v3075
        %3155 = vmatprep.subr.bf16.mxu0 0
        %3156 = vmatpush2.bf16.msra.mxu0 %v3090
        %3157 = vmatprep.subr.bf16.mxu0 0
        %3158 = vmatpush2.bf16.msra.mxu0 %v3089
        %3159 = vmatprep.subr.bf16.mxu0 0
        %3160 = vmatpush2.bf16.msra.mxu0 %v3088
        %3161 = vmatprep.subr.bf16.mxu0 0
        %3162 = vmatpush2.bf16.msra.mxu0 %v3087
        %3163 = vmatprep.subr.bf16.mxu0 0
        %3164 = vmatpush2.bf16.msra.mxu0 %v3086
        %3165 = vmatprep.subr.bf16.mxu0 0
        %3166 = vmatpush2.bf16.msra.mxu0 %v3085
        %3167 = vmatprep.subr.bf16.mxu0 0
        %3168 = vmatpush2.bf16.msra.mxu0 %v3084
        %3169 = vmatprep.subr.bf16.mxu0 0
        %3170 = vmatpush2.bf16.msra.mxu0 %v3083
        %3171 = vmatprep.mubr.bf16.mxu0 %v2934
        %3172 = vmatmul.mubr.bf16.gmra.mxu0 %v2933
        %v3173 = vpop.f32.mrf.mxu0
        %v3174 = vadd.f32 %v2945, %v3173
        %v3175 = vpop.f32.mrf.mxu0
        %v3176 = vpop.f32.mrf.mxu0
        %v3177 = vadd.f32 %v2945, %v3176
        %v3178 = vpop.f32.mrf.mxu0
        %3179 = vmatprep.mubr.bf16.mxu0 %v2938
        %3180 = vmatmul.mubr.bf16.gmra.mxu0 %v2937
        %v3181 = vpop.f32.mrf.mxu0
        %v3182 = vadd.f32 %v2945, %v3181
        %v3183 = vpop.f32.mrf.mxu0
        %v3184 = vpop.f32.mrf.mxu0
        %v3185 = vadd.f32 %v2945, %v3184
        %v3186 = vpop.f32.mrf.mxu0
        %3187 = vdwg.mxu0
        %3188 = vmatprep.subr.bf16.mxu0 0
        %3189 = vmatpush1.bf16.msra.mxu0 %v3098
        %3190 = vmatprep.subr.bf16.mxu0 0
        %3191 = vmatpush1.bf16.msra.mxu0 %v3097
        %3192 = vmatprep.subr.bf16.mxu0 0
        %3193 = vmatpush1.bf16.msra.mxu0 %v3096
        %3194 = vmatprep.subr.bf16.mxu0 0
        %3195 = vmatpush1.bf16.msra.mxu0 %v3095
        %3196 = vmatprep.subr.bf16.mxu0 0
        %3197 = vmatpush1.bf16.msra.mxu0 %v3094
        %3198 = vmatprep.subr.bf16.mxu0 0
        %3199 = vmatpush1.bf16.msra.mxu0 %v3093
        %3200 = vmatprep.subr.bf16.mxu0 0
        %3201 = vmatpush1.bf16.msra.mxu0 %v3092
        %3202 = vmatprep.subr.bf16.mxu0 0
        %3203 = vmatpush1.bf16.msra.mxu0 %v3091
        %3204 = vmatprep.subr.bf16.mxu0 0
        %3205 = vmatpush2.bf16.msra.mxu0 %v3106
        %3206 = vmatprep.subr.bf16.mxu0 0
        %3207 = vmatpush2.bf16.msra.mxu0 %v3105
        %3208 = vmatprep.subr.bf16.mxu0 0
        %3209 = vmatpush2.bf16.msra.mxu0 %v3104
        %3210 = vmatprep.subr.bf16.mxu0 0
        %3211 = vmatpush2.bf16.msra.mxu0 %v3103
        %3212 = vmatprep.subr.bf16.mxu0 0
        %3213 = vmatpush2.bf16.msra.mxu0 %v3102
        %3214 = vmatprep.subr.bf16.mxu0 0
        %3215 = vmatpush2.bf16.msra.mxu0 %v3101
        %3216 = vmatprep.subr.bf16.mxu0 0
        %3217 = vmatpush2.bf16.msra.mxu0 %v3100
        %3218 = vmatprep.subr.bf16.mxu0 0
        %3219 = vmatpush2.bf16.msra.mxu0 %v3099
        %3220 = vmatprep.mubr.bf16.mxu0 %v2936
        %3221 = vmatmul.mubr.bf16.gmra.mxu0 %v2935
        %v3222 = vpop.f32.mrf.mxu0
        %v3223 = vadd.f32 %v3174, %v3222
        %v3224 = vpop.f32.mrf.mxu0
        %v3225 = vpop.f32.mrf.mxu0
        %v3226 = vadd.f32 %v3177, %v3225
        %v3227 = vpop.f32.mrf.mxu0
        %3228 = vmatprep.mubr.bf16.mxu0 %v2940
        %3229 = vmatmul.mubr.bf16.gmra.mxu0 %v2939
        %v3230 = vpop.f32.mrf.mxu0
        %v3231 = vadd.f32 %v3182, %v3230
        %v3232 = vpop.f32.mrf.mxu0
        %v3233 = vpop.f32.mrf.mxu0
        %v3234 = vadd.f32 %v3185, %v3233
        %v3235 = vpop.f32.mrf.mxu0
        %3236 = vdwg.mxu0
        %v3237 = vadd.f32 %v2526, %v3223
        %v3238 = vadd.f32 %v2527, %v3226
        %v3239 = vadd.f32 %v2528, %v3231
        %v3240 = vadd.f32 %v2529, %v3234
        %v3241 = vld [vmem:[%s1348] sm:$0x1]
        %v3242 = vld [vmem:[%s1351] sm:$0x1]
        %3243 = vadd.xlane.f32.xlu0 %v3237
        %v3244 = vpop.xlane.xlu0 %3243
        %3245 = vadd.xlane.f32.xlu0 %v3238
        %v3246 = vpop.xlane.xlu0 %3245
        %3247 = vadd.xlane.f32.xlu0 %v3239
        %v3248 = vpop.xlane.xlu0 %3247
        %3249 = vadd.xlane.f32.xlu0 %v3240
        %v3250 = vpop.xlane.xlu0 %3249
        %v3251 = vmul.f32 %v3244, %v2473
        %v3252 = vmul.f32 %v3246, %v2473
        %v3253 = vmul.f32 %v3248, %v2473
        %v3254 = vmul.f32 %v3250, %v2473
        %v3255 = vsub.f32 %v3237, %v3251
        %v3256 = vsub.f32 %v3238, %v3252
        %v3257 = vsub.f32 %v3239, %v3253
        %v3258 = vsub.f32 %v3240, %v3254
        %v3259 = vmul.f32 %v3255, %v3255
        %v3260 = vmul.f32 %v3256, %v3256
        %v3261 = vmul.f32 %v3257, %v3257
        %v3262 = vmul.f32 %v3258, %v3258
        %3263 = vadd.xlane.f32.xlu0 %v3259
        %v3264 = vpop.xlane.xlu0 %3263
        %3265 = vadd.xlane.f32.xlu0 %v3260
        %v3266 = vpop.xlane.xlu0 %3265
        %3267 = vadd.xlane.f32.xlu0 %v3261
        %v3268 = vpop.xlane.xlu0 %3267
        %3269 = vadd.xlane.f32.xlu0 %v3262
        %v3270 = vpop.xlane.xlu0 %3269
        %v3271 = vmul.f32 %v3264, %v2473
        %v3272 = vmul.f32 %v3266, %v2473
        %v3273 = vmul.f32 %v3268, %v2473
        %v3274 = vmul.f32 %v3270, %v2473
        %v3275 = vadd.f32 %v3271, 1e-05
        %v3276 = vadd.f32 %v3272, 1e-05
        %v3277 = vadd.f32 %v3273, 1e-05
        %v3278 = vadd.f32 %v3274, 1e-05
        %v3279 = vrsqrt.pop %v3275
        %v3280 = vrsqrt.pop %v3276
        %v3281 = vrsqrt.pop %v3277
        %v3282 = vrsqrt.pop %v3278
        %v3283 = vmul.f32 %v3255, %v3279
        %v3284 = vmul.f32 %v3256, %v3280
        %v3285 = vmul.f32 %v3257, %v3281
        %v3286 = vmul.f32 %v3258, %v3282
        %v3288 = vlaneseq
        %v3289 = vshrl.u32 %v3288, 7
        %v3290 = vsub.s32 0, %v3289
        %v3291 = vrot.slane %v3241, %v3290
        %v3293 = vmul.f32 %v3283, %v3291
        %v3294 = vmul.f32 %v3284, %v3291
        %v3295 = vmul.f32 %v3285, %v3291
        %v3296 = vmul.f32 %v3286, %v3291
        %v3298 = vlaneseq
        %v3299 = vshrl.u32 %v3298, 7
        %v3300 = vsub.s32 0, %v3299
        %v3301 = vrot.slane %v3242, %v3300
        %v3303 = vadd.f32 %v3293, %v3301
        %v3304 = vadd.f32 %v3294, %v3301
        %v3305 = vadd.f32 %v3295, %v3301
        %v3306 = vadd.f32 %v3296, %v3301
        %3307 = vst [vmem:[#allocation2] sm:$0xff] %v3303
        %3308 = vst [vmem:[#allocation2 + $0x8] sm:$0xff] %v3304
        %3309 = vst [vmem:[#allocation2 + $0x10] sm:$0xff] %v3305
        %3310 = vst [vmem:[#allocation2 + $0x18] sm:$0xff] %v3306
        %p3311 = scmp.eq.s32.totalorder %s81, 2
        // Predicated region
        $region221: #{tpu_custom_call.1} parent=139 // pred_check
          %p3312 = pneg %p3311
        $region222: #{tpu_custom_call.1} parent=139 // pred_check_branch
          %3314 = sbr.rel (%p3312) target = $region224
        $region223: #{tpu_custom_call.1} parent=139 // pred_region
          %v3315 = vld [vmem:[#allocation23] sm:$0x1]
          %v3316 = vld [vmem:[#allocation24] sm:$0x1]
          %v3317 = vadd.f32 %v3303, %v3304
          %v3318 = vrot.slane %v3317, 4
          %v3319 = vadd.f32 %v3317, %v3318
          %v3320 = vrot.slane %v3319, 2
          %v3321 = vadd.f32 %v3319, %v3320
          %v3322 = vrot.slane %v3321, 1
          %v3323 = vadd.f32 %v3321, %v3322
          %v3324 = vrcp.pop 16.0
          %v3325 = vmul.f32 %v3323, %v3324
          %v3326 = vsub.f32 %v3303, %v3325
          %v3327 = vsub.f32 %v3304, %v3325
          %v3328 = vmul.f32 %v3326, %v3326
          %v3329 = vmul.f32 %v3327, %v3327
          %v3330 = vadd.f32 %v3328, %v3329
          %v3331 = vrot.slane %v3330, 4
          %v3332 = vadd.f32 %v3330, %v3331
          %v3333 = vrot.slane %v3332, 2
          %v3334 = vadd.f32 %v3332, %v3333
          %v3335 = vrot.slane %v3334, 1
          %v3336 = vadd.f32 %v3334, %v3335
          %v3337 = vmul.f32 %v3336, %v3324
          %v3338 = vadd.f32 %v3337, 1e-05
          %v3339 = vrsqrt.pop %v3338
          %v3340 = vmul.f32 %v3326, %v3339
          %v3341 = vmul.f32 %v3327, %v3339
          %v3343 = vlaneseq
          %v3344 = vshrl.u32 %v3343, 7
          %v3345 = vsub.s32 0, %v3344
          %v3346 = vrot.slane %v3315, %v3345
          %v3348 = vmul.f32 %v3340, %v3346
          %v3349 = vmul.f32 %v3341, %v3346
          %v3351 = vlaneseq
          %v3352 = vshrl.u32 %v3351, 7
          %v3353 = vsub.s32 0, %v3352
          %v3354 = vrot.slane %v3316, %v3353
          %v3356 = vadd.f32 %v3348, %v3354
          %v3357 = vadd.f32 %v3349, %v3354
          %3358 = vst [vmem:[#allocation31] sm:$0xff] %v3356
          %3359 = vst [vmem:[#allocation31 + $0x8] sm:$0xff] %v3357
        $region224: #{tpu_custom_call.1} parent=139 // pred_fallthru
          _
        // Predicated region
        $region225: #{tpu_custom_call.1} parent=139 // pred_check
          %p3360 = pneg %p784
        $region226: #{tpu_custom_call.1} parent=139 // pred_check_branch
          %3362 = sbr.rel (%p3360) target = $region228
        $region227: #{tpu_custom_call.1} parent=139 // pred_region
          %s3364 = ssub.s32 256, 256
          %3365 = vsyncadd [#allocation5], %s3364
          %s3366 = sshll.u32 [#allocation31], 4
          %s3367 = int_to_ptr.vmem [resolvable:$true] %s3366
          %3372 = dma.vmem_to_hbm [thread:$0]  %s3367, 256, %s61, [#allocation5], 128, 128, 8
        $region228: #{tpu_custom_call.1} parent=139 // pred_fallthru
          _
        // Predicated region
        $region229: #{tpu_custom_call.1} parent=139 // pred_check
          %p3373 = pneg %p784
        $region230: #{tpu_custom_call.1} parent=139 // pred_check_branch
          %3375 = sbr.rel (%p3373) target = $region232
        $region231: #{tpu_custom_call.1} parent=139 // pred_region
          %3376 = dma.done [#allocation5], 256
        $region232: #{tpu_custom_call.1} parent=139 // pred_fallthru
          _
      $region140: #{tpu_custom_call.1} parent=5 // pred_fallthru
        _
      %p3377 = scmp.le.s32.totalorder 2, %s76
      // Predicated region
      $region233: #{tpu_custom_call.1} parent=5 // pred_check
        %p3378 = pneg %p3377
      $region234: #{tpu_custom_call.1} parent=5 // pred_check_branch
        %3380 = sbr.rel (%p3378) target = $region236
      $region235: #{tpu_custom_call.1} parent=5 // pred_region
        %s3381 = ssub.s32 %s76, 2
      $region236: #{tpu_custom_call.1} parent=5 // pred_fallthru
        _
    $region6: #{tpu_custom_call.1} parent=1 // loop_footer
      %s80 = sadd.s32 1, %s76
    $region7: #{tpu_custom_call.1} parent=1 // loop_footer_branch
      %75 = sbr.rel target = $region3
    $region8: #{tpu_custom_call.1} parent=1 // loop_exit
      _
    %3382 = vsyncpa [#allocation4], 1
    %s3383 = scalar_lea.sflag [#allocation4], 1
    %3384 = vsyncpa %s3383, 1
    %3385 = vsyncpa [#allocation7], 1
    %3386 = vsyncpa [#allocation10], 1
    %3387 = vsyncpa [#allocation13], 1
    %3388 = vsyncpa [#allocation16], 1
    %3389 = vsyncpa [#allocation19], 1
    %3390 = vsyncpa [#allocation22], 1
    %3391 = vsyncpa [#allocation25], 1
    %3392 = vsyncpa [#allocation5], 1
    %s3393 = scalar_lea.sflag [#allocation5], 1
    %3394 = vsyncpa %s3393, 1

</llo_original>
